<compile_context>
chip_gen: v6e
topology: v6e:2x2x1
jax: 0.10.0
libtpu: 0.0.40
codegen_flags: <defaults>
</compile_context>

<pallas_src>
import jax
import jax.numpy as jnp
from jax.experimental import pallas as pl

# ----------------------- small DistilBERT-like config -----------------------
VOCAB = 128      # vocab_size (lane-aligned for the one-hot embedding matmul)
MAX_POS = 64     # max_position_embeddings
D = 32           # hidden dim
H = 4            # attention heads
DH = D // H      # head dim
F = 64           # FFN (intermediate) dim
NLAYERS = 2      # transformer blocks
LN_EPS = 1e-12   # DistilBERT layer-norm eps
MASK_BIAS = -1e30  # additive bias for masked keys (exp -> 0 after row-max sub)


def _layernorm(x, gamma, beta):
    # x: (R, D) or (B, S, D); gamma/beta: (1, D).  Kept fully in f32.
    mu = jnp.mean(x, axis=-1, keepdims=True)
    var = jnp.mean((x - mu) ** 2, axis=-1, keepdims=True)
    return (x - mu) * jax.lax.rsqrt(var + LN_EPS) * gamma + beta


# --------------------------- fused encoder kernel ----------------------------
def encoder_kernel(ids_ref, mask_ref, wemb_ref, pemb_ref, g0_ref, b0_ref,
                   wqkv_ref, bqkv_ref, wo_ref, bo_ref, g1_ref, be1_ref,
                   w1_ref, b1_ref, w2_ref, b2_ref, g2_ref, be2_ref,
                   o_ref):
    B, S = mask_ref.shape                    # static at trace time
    BS = B * S

    # ---- embedding lookup fused into the kernel (one-hot MXU gather) --------
    onehot = (jax.lax.broadcasted_iota(jnp.int32, (BS, VOCAB), 1)
              == ids_ref[...]).astype(jnp.float32)                  # (BS, VOCAB)
    word = jnp.dot(onehot, wemb_ref[...],
                   preferred_element_type=jnp.float32)              # (BS, D)
    x = (word.reshape(B, S, D) + pemb_ref[0:S, :][None]).reshape(BS, D)

    # Embedding LayerNorm.
    h = _layernorm(x, g0_ref[...], b0_ref[...])                     # (BS, D) f32

    # Attention mask -> additive bias, computed ONCE, tiled head-major to match
    # the (H*B, S, S) score layout (row n = head*B + batch).
    bias_b = jnp.broadcast_to(
        ((1.0 - mask_ref[...]) * jnp.float32(MASK_BIAS))[:, None, :],
        (B, S, S))                                                   # (B, S, S)
    bias = jnp.concatenate([bias_b] * H, axis=0)                     # (H*B, S, S)

    def layer(l, h):
        # Fused QKV projection: bf16 operands, f32 accumulate, fused f32 bias.
        # (1/sqrt(DH) is already folded into the Q columns of wqkv.)
        qkv = jnp.dot(h.astype(jnp.bfloat16), wqkv_ref[l],
                      preferred_element_type=jnp.float32) + bqkv_ref[l]
        q3 = qkv[:, 0 * D:1 * D].reshape(B, S, D)
        k3 = qkv[:, 1 * D:2 * D].reshape(B, S, D)
        v3 = qkv[:, 2 * D:3 * D].reshape(B, S, D)

        # Fold heads into the leading batch axis: (H*B, S, DH).
        qh = jnp.concatenate([q3[:, :, i * DH:(i + 1) * DH] for i in range(H)], axis=0)
        kh = jnp.concatenate([k3[:, :, i * DH:(i + 1) * DH] for i in range(H)], axis=0)
        vh = jnp.concatenate([v3[:, :, i * DH:(i + 1) * DH] for i in range(H)], axis=0)

        # ONE batched score einsum + ONE softmax for all (head, batch) pairs.
        s = jnp.einsum('nqd,nkd->nqk',
                       qh.astype(jnp.bfloat16), kh.astype(jnp.bfloat16),
                       preferred_element_type=jnp.float32) + bias    # f32 logits
        s = s - jnp.max(s, axis=-1, keepdims=True)
        p = jnp.exp(s)
        p = p * pl.reciprocal(jnp.sum(p, axis=-1, keepdims=True), approx=True)
        ctx_h = jnp.einsum('nqk,nkd->nqd',
                           p.astype(jnp.bfloat16), vh.astype(jnp.bfloat16),
                           preferred_element_type=jnp.float32)       # (H*B, S, DH)

        # Reassemble heads back onto the lane (feature) axis.
        ctx = jnp.concatenate([ctx_h[i * B:(i + 1) * B] for i in range(H)],
                              axis=-1).reshape(BS, D)

        sa = jnp.dot(ctx.astype(jnp.bfloat16), wo_ref[l],
                     preferred_element_type=jnp.float32) + bo_ref[l]
        h1 = _layernorm(sa + h, g1_ref[l], be1_ref[l])

        ff = jnp.dot(h1.astype(jnp.bfloat16), w1_ref[l],
                     preferred_element_type=jnp.float32) + b1_ref[l]
        # TODO(synk): HF DistilBERT uses exact erf-based GELU; tanh approximation
        # kept (in f32) for robust Mosaic lowering.
        ff = jax.nn.gelu(ff, approximate=True)
        ff = jnp.dot(ff.astype(jnp.bfloat16), w2_ref[l],
                     preferred_element_type=jnp.float32) + b2_ref[l]
        return _layernorm(ff + h1, g2_ref[l], be2_ref[l])

    h = jax.lax.fori_loop(0, NLAYERS, layer, h, unroll=True)

    # CLS token (row 0 of every sequence) is the only HBM writeback.
    o_ref[...] = h.reshape(B, S, D)[:, 0, :]


# ------------------------------- parameters ----------------------------------
def init_params(key):
    keys = jax.random.split(key, 2 + NLAYERS)
    std = 0.02
    scale = 1.0 / (DH ** 0.5)

    def dense(k, shape):
        return jax.random.normal(k, shape, jnp.float32) * std

    params = {
        "word_emb": dense(keys[0], (VOCAB, D)),
        "pos_emb": dense(keys[1], (MAX_POS, D)),
        "emb_ln_g": jnp.ones((1, D), jnp.float32),
        "emb_ln_b": jnp.zeros((1, D), jnp.float32),
    }

    wqkv, bqkv, wo, bo, g1, be1, w1, b1, w2, b2, g2, be2 = ([] for _ in range(12))
    for l in range(NLAYERS):
        lk = jax.random.split(keys[2 + l], 6)
        wq, wk, wv = dense(lk[0], (D, D)), dense(lk[1], (D, D)), dense(lk[2], (D, D))
        # Fold the 1/sqrt(DH) attention scale into the Q projection (and its
        # bias, which is zero here) -- constant weight fold, forward math identical.
        wqkv.append(jnp.concatenate([wq * scale, wk, wv], axis=1))   # (D, 3D) fused QKV
        bqkv.append(jnp.zeros((1, 3 * D), jnp.float32))
        wo.append(dense(lk[3], (D, D)));  bo.append(jnp.zeros((1, D), jnp.float32))
        g1.append(jnp.ones((1, D), jnp.float32)); be1.append(jnp.zeros((1, D), jnp.float32))
        w1.append(dense(lk[4], (D, F)));  b1.append(jnp.zeros((1, F), jnp.float32))
        w2.append(dense(lk[5], (F, D)));  b2.append(jnp.zeros((1, D), jnp.float32))
        g2.append(jnp.ones((1, D), jnp.float32)); be2.append(jnp.zeros((1, D), jnp.float32))

    # Stack per-layer weights on a leading layer axis; matmul weights stored in
    # bf16 (single-pass MXU operands), biases / LayerNorm params stay f32.
    # TODO(synk): at real CLIP sizes (D=512, 12 layers) switch to a layer grid
    # axis with per-layer BlockSpec streaming instead of all-layers-in-VMEM.
    def stk(lst, bf16=False):
        a = jnp.stack(lst, axis=0)
        return a.astype(jnp.bfloat16) if bf16 else a

    params["stacked"] = (stk(wqkv, True), stk(bqkv), stk(wo, True), stk(bo),
                         stk(g1), stk(be1), stk(w1, True), stk(b1),
                         stk(w2, True), stk(b2), stk(g2), stk(be2))
    return params


# --------------------------------- forward -----------------------------------
def text_encoder_forward(params, input_ids, attention_mask):
    """Mirrors TextEncoder.forward: DistilBERT(input_ids, attention_mask) -> CLS."""
    B, S = input_ids.shape
    ids = input_ids.reshape(B * S, 1).astype(jnp.int32)   # token ids, gathered in-kernel
    mask = attention_mask.astype(jnp.float32)             # (B, S)

    return pl.pallas_call(
        encoder_kernel,
        out_shape=jax.ShapeDtypeStruct((B, D), jnp.float32),
    )(ids, mask, params["word_emb"], params["pos_emb"],
      params["emb_ln_g"], params["emb_ln_b"], *params["stacked"])


# ------------------------- pure-JAX reference (check) -------------------------
def text_encoder_reference(params, input_ids, attention_mask):
    B, S = input_ids.shape
    x = jnp.take(params["word_emb"], input_ids, axis=0) + params["pos_emb"][:S][None]
    h = _layernorm(x, params["emb_ln_g"], params["emb_ln_b"])
    wqkv, bqkv, wo, bo, g1, be1, w1, b1, w2, b2, g2, be2 = params["stacked"]
    mask = attention_mask.astype(jnp.float32)
    bias = ((1.0 - mask) * MASK_BIAS)[:, None, None, :]              # (B,1,1,S)
    for l in range(NLAYERS):
        qkv = h @ wqkv[l].astype(jnp.float32) + bqkv[l]
        q, k, v = jnp.split(qkv, 3, axis=-1)
        # NOTE: 1/sqrt(DH) already folded into the Q weights -- no explicit scale.
        q = q.reshape(B, S, H, DH).transpose(0, 2, 1, 3)
        k = k.reshape(B, S, H, DH).transpose(0, 2, 1, 3)
        v = v.reshape(B, S, H, DH).transpose(0, 2, 1, 3)
        s = jnp.einsum('bhqd,bhkd->bhqk', q, k) + bias
        p = jax.nn.softmax(s, axis=-1)
        ctx = jnp.einsum('bhqk,bhkd->bhqd', p, v).transpose(0, 2, 1, 3).reshape(B, S, D)
        h1 = _layernorm(ctx @ wo[l].astype(jnp.float32) + bo[l] + h, g1[l], be1[l])
        ff = jax.nn.gelu(h1 @ w1[l].astype(jnp.float32) + b1[l], approximate=True)
        h = _layernorm(ff @ w2[l].astype(jnp.float32) + b2[l] + h1, g2[l], be2[l])
    return h[:, 0, :]


# ----------------------------------- main -------------------------------------
if __name__ == "__main__":
    key = jax.random.PRNGKey(0)
    pkey, ikey = jax.random.split(key)
    params = init_params(pkey)

    B, S = 2, 8
    input_ids = jax.random.randint(ikey, (B, S), 0, VOCAB, dtype=jnp.int32)
    attention_mask = jnp.array([[1, 1, 1, 1, 1, 1, 1, 1],
                                [1, 1, 1, 1, 1, 0, 0, 0]], dtype=jnp.int32)

    cls_out = text_encoder_forward(params, input_ids, attention_mask)
    jax.block_until_ready(cls_out)

    assert cls_out.shape == (B, D) and cls_out.dtype == jnp.float32
    assert bool(jnp.all(jnp.isfinite(cls_out)))

    ref = text_encoder_reference(params, input_ids, attention_mask)
    assert bool(jnp.allclose(cls_out, ref, atol=5e-2, rtol=5e-2)), \
        float(jnp.max(jnp.abs(cls_out - ref)))
    print("KERNEL_OK")
</pallas_src>

<mosaic_0001>
module attributes {stable_mosaic.version = 11 : i64} {
  func.func @encoder_kernel(%arg0: memref<16x1xi32, #tpu.memory_space<vmem>>, %arg1: memref<2x8xf32, #tpu.memory_space<vmem>>, %arg2: memref<128x32xf32, #tpu.memory_space<vmem>>, %arg3: memref<64x32xf32, #tpu.memory_space<vmem>>, %arg4: memref<1x32xf32, #tpu.memory_space<vmem>>, %arg5: memref<1x32xf32, #tpu.memory_space<vmem>>, %arg6: memref<2x32x96xbf16, #tpu.memory_space<vmem>>, %arg7: memref<2x1x96xf32, #tpu.memory_space<vmem>>, %arg8: memref<2x32x32xbf16, #tpu.memory_space<vmem>>, %arg9: memref<2x1x32xf32, #tpu.memory_space<vmem>>, %arg10: memref<2x1x32xf32, #tpu.memory_space<vmem>>, %arg11: memref<2x1x32xf32, #tpu.memory_space<vmem>>, %arg12: memref<2x32x64xbf16, #tpu.memory_space<vmem>>, %arg13: memref<2x1x64xf32, #tpu.memory_space<vmem>>, %arg14: memref<2x64x32xbf16, #tpu.memory_space<vmem>>, %arg15: memref<2x1x32xf32, #tpu.memory_space<vmem>>, %arg16: memref<2x1x32xf32, #tpu.memory_space<vmem>>, %arg17: memref<2x1x32xf32, #tpu.memory_space<vmem>>, %arg18: memref<2x32xf32, #tpu.memory_space<vmem>>) attributes {dimension_semantics = [], scalar_prefetch = 0 : i64, scratch_operands = 0 : i64, tpu.core_type = #tpu.core_type<tc>} {
    %0 = tpu.iota {dimensions = array<i32: 1>} : vector<16x128xi32>
    %c0 = arith.constant 0 : index
    %c0_0 = arith.constant 0 : index
    %1 = vector.load %arg0[%c0, %c0_0] : memref<16x1xi32, #tpu.memory_space<vmem>>, vector<16x1xi32>
    %2 = vector.broadcast %1 : vector<16x1xi32> to vector<16x128xi32>
    %3 = arith.cmpi eq, %0, %2 : vector<16x128xi32>
    %4 = arith.extui %3 : vector<16x128xi1> to vector<16x128xi32>
    %5 = arith.sitofp %4 : vector<16x128xi32> to vector<16x128xf32>
    %c0_1 = arith.constant 0 : index
    %c0_2 = arith.constant 0 : index
    %6 = vector.load %arg2[%c0_1, %c0_2] : memref<128x32xf32, #tpu.memory_space<vmem>>, vector<128x32xf32>
    %cst = arith.constant dense<0.000000e+00> : vector<16x32xf32>
    %7 = tpu.matmul %5, %6, %cst {dimension_numbers = #tpu.dot_dimension_numbers<[1], [0], [0], [1], [0, 0, 1, 1], [], []>} : vector<16x128xf32>, vector<128x32xf32>, vector<16x32xf32> -> vector<16x32xf32>
    %8 = vector.shape_cast %7 : vector<16x32xf32> to vector<2x8x32xf32>
    %c0_3 = arith.constant 0 : index
    %c0_4 = arith.constant 0 : index
    %9 = vector.load %arg3[%c0_3, %c0_4] : memref<64x32xf32, #tpu.memory_space<vmem>>, vector<8x32xf32>
    %10 = vector.shape_cast %9 : vector<8x32xf32> to vector<1x8x32xf32>
    %11 = vector.broadcast %10 : vector<1x8x32xf32> to vector<2x8x32xf32>
    %12 = arith.addf %8, %11 : vector<2x8x32xf32>
    %13 = vector.shape_cast %12 : vector<2x8x32xf32> to vector<16x32xf32>
    %c0_5 = arith.constant 0 : index
    %c0_6 = arith.constant 0 : index
    %14 = vector.load %arg4[%c0_5, %c0_6] : memref<1x32xf32, #tpu.memory_space<vmem>>, vector<1x32xf32>
    %c0_7 = arith.constant 0 : index
    %c0_8 = arith.constant 0 : index
    %15 = vector.load %arg5[%c0_7, %c0_8] : memref<1x32xf32, #tpu.memory_space<vmem>>, vector<1x32xf32>
    %cst_9 = arith.constant dense<0.000000e+00> : vector<16xf32>
    %16 = vector.multi_reduction <add>, %13, %cst_9 [1] : vector<16x32xf32> to vector<16xf32>
    %17 = vector.shape_cast %16 : vector<16xf32> to vector<16x1xf32>
    %cst_10 = arith.constant 3.200000e+01 : f32
    %18 = vector.broadcast %cst_10 : f32 to vector<16x1xf32>
    %19 = arith.divf %17, %18 : vector<16x1xf32>
    %20 = vector.broadcast %19 : vector<16x1xf32> to vector<16x32xf32>
    %21 = arith.subf %13, %20 : vector<16x32xf32>
    %22 = arith.mulf %21, %21 : vector<16x32xf32>
    %cst_11 = arith.constant dense<0.000000e+00> : vector<16xf32>
    %23 = vector.multi_reduction <add>, %22, %cst_11 [1] : vector<16x32xf32> to vector<16xf32>
    %24 = vector.shape_cast %23 : vector<16xf32> to vector<16x1xf32>
    %cst_12 = arith.constant 3.200000e+01 : f32
    %25 = vector.broadcast %cst_12 : f32 to vector<16x1xf32>
    %26 = arith.divf %24, %25 : vector<16x1xf32>
    %27 = vector.broadcast %19 : vector<16x1xf32> to vector<16x32xf32>
    %28 = arith.subf %13, %27 : vector<16x32xf32>
    %cst_13 = arith.constant 9.99999996E-13 : f32
    %29 = vector.broadcast %cst_13 : f32 to vector<16x1xf32>
    %30 = arith.addf %26, %29 : vector<16x1xf32>
    %31 = math.rsqrt %30 : vector<16x1xf32>
    %32 = vector.broadcast %31 : vector<16x1xf32> to vector<16x32xf32>
    %33 = arith.mulf %28, %32 : vector<16x32xf32>
    %34 = vector.broadcast %14 : vector<1x32xf32> to vector<16x32xf32>
    %35 = arith.mulf %33, %34 : vector<16x32xf32>
    %36 = vector.broadcast %15 : vector<1x32xf32> to vector<16x32xf32>
    %37 = arith.addf %35, %36 : vector<16x32xf32>
    %c0_14 = arith.constant 0 : index
    %c0_15 = arith.constant 0 : index
    %38 = vector.load %arg1[%c0_14, %c0_15] : memref<2x8xf32, #tpu.memory_space<vmem>>, vector<2x8xf32>
    %cst_16 = arith.constant 1.000000e+00 : f32
    %39 = vector.broadcast %cst_16 : f32 to vector<2x8xf32>
    %40 = arith.subf %39, %38 : vector<2x8xf32>
    %cst_17 = arith.constant -1.000000e+30 : f32
    %41 = vector.broadcast %cst_17 : f32 to vector<2x8xf32>
    %42 = arith.mulf %40, %41 : vector<2x8xf32>
    %43 = vector.shape_cast %42 : vector<2x8xf32> to vector<2x1x8xf32>
    %44 = vector.shape_cast %43 : vector<2x1x8xf32> to vector<2x1x8xf32>
    %45 = vector.broadcast %44 : vector<2x1x8xf32> to vector<2x8x8xf32>
    %46 = tpu.concatenate %45, %45, %45, %45 in 0 : vector<2x8x8xf32>, vector<2x8x8xf32>, vector<2x8x8xf32>, vector<2x8x8xf32> -> vector<8x8x8xf32>
    %c0_i32 = arith.constant 0 : i32
    %47 = arith.truncf %37 : vector<16x32xf32> to vector<16x32xbf16>
    %48 = arith.index_cast %c0_i32 : i32 to index
    %c0_18 = arith.constant 0 : index
    %c0_19 = arith.constant 0 : index
    %49 = vector.load %arg6[%48, %c0_18, %c0_19] : memref<2x32x96xbf16, #tpu.memory_space<vmem>>, vector<1x32x96xbf16>
    %50 = vector.shape_cast %49 : vector<1x32x96xbf16> to vector<32x96xbf16>
    %cst_20 = arith.constant dense<0.000000e+00> : vector<16x96xf32>
    %51 = tpu.matmul %47, %50, %cst_20 {dimension_numbers = #tpu.dot_dimension_numbers<[1], [0], [0], [1], [0, 0, 1, 1], [], []>} : vector<16x32xbf16>, vector<32x96xbf16>, vector<16x96xf32> -> vector<16x96xf32>
    %52 = arith.index_cast %c0_i32 : i32 to index
    %c0_21 = arith.constant 0 : index
    %c0_22 = arith.constant 0 : index
    %53 = vector.load %arg7[%52, %c0_21, %c0_22] : memref<2x1x96xf32, #tpu.memory_space<vmem>>, vector<1x1x96xf32>
    %54 = vector.shape_cast %53 : vector<1x1x96xf32> to vector<1x96xf32>
    %55 = vector.broadcast %54 : vector<1x96xf32> to vector<16x96xf32>
    %56 = arith.addf %51, %55 : vector<16x96xf32>
    %57 = vector.extract_strided_slice %56 {offsets = [0, 0], sizes = [16, 32], strides = [1, 1]} : vector<16x96xf32> to vector<16x32xf32>
    %58 = vector.shape_cast %57 : vector<16x32xf32> to vector<2x8x32xf32>
    %59 = vector.extract_strided_slice %56 {offsets = [0, 32], sizes = [16, 32], strides = [1, 1]} : vector<16x96xf32> to vector<16x32xf32>
    %60 = vector.shape_cast %59 : vector<16x32xf32> to vector<2x8x32xf32>
    %61 = vector.extract_strided_slice %56 {offsets = [0, 64], sizes = [16, 32], strides = [1, 1]} : vector<16x96xf32> to vector<16x32xf32>
    %62 = vector.shape_cast %61 : vector<16x32xf32> to vector<2x8x32xf32>
    %63 = vector.extract_strided_slice %58 {offsets = [0, 0, 0], sizes = [2, 8, 8], strides = [1, 1, 1]} : vector<2x8x32xf32> to vector<2x8x8xf32>
    %64 = vector.extract_strided_slice %58 {offsets = [0, 0, 8], sizes = [2, 8, 8], strides = [1, 1, 1]} : vector<2x8x32xf32> to vector<2x8x8xf32>
    %65 = vector.extract_strided_slice %58 {offsets = [0, 0, 16], sizes = [2, 8, 8], strides = [1, 1, 1]} : vector<2x8x32xf32> to vector<2x8x8xf32>
    %66 = vector.extract_strided_slice %58 {offsets = [0, 0, 24], sizes = [2, 8, 8], strides = [1, 1, 1]} : vector<2x8x32xf32> to vector<2x8x8xf32>
    %67 = tpu.concatenate %63, %64, %65, %66 in 0 : vector<2x8x8xf32>, vector<2x8x8xf32>, vector<2x8x8xf32>, vector<2x8x8xf32> -> vector<8x8x8xf32>
    %68 = vector.extract_strided_slice %60 {offsets = [0, 0, 0], sizes = [2, 8, 8], strides = [1, 1, 1]} : vector<2x8x32xf32> to vector<2x8x8xf32>
    %69 = vector.extract_strided_slice %60 {offsets = [0, 0, 8], sizes = [2, 8, 8], strides = [1, 1, 1]} : vector<2x8x32xf32> to vector<2x8x8xf32>
    %70 = vector.extract_strided_slice %60 {offsets = [0, 0, 16], sizes = [2, 8, 8], strides = [1, 1, 1]} : vector<2x8x32xf32> to vector<2x8x8xf32>
    %71 = vector.extract_strided_slice %60 {offsets = [0, 0, 24], sizes = [2, 8, 8], strides = [1, 1, 1]} : vector<2x8x32xf32> to vector<2x8x8xf32>
    %72 = tpu.concatenate %68, %69, %70, %71 in 0 : vector<2x8x8xf32>, vector<2x8x8xf32>, vector<2x8x8xf32>, vector<2x8x8xf32> -> vector<8x8x8xf32>
    %73 = vector.extract_strided_slice %62 {offsets = [0, 0, 0], sizes = [2, 8, 8], strides = [1, 1, 1]} : vector<2x8x32xf32> to vector<2x8x8xf32>
    %74 = vector.extract_strided_slice %62 {offsets = [0, 0, 8], sizes = [2, 8, 8], strides = [1, 1, 1]} : vector<2x8x32xf32> to vector<2x8x8xf32>
    %75 = vector.extract_strided_slice %62 {offsets = [0, 0, 16], sizes = [2, 8, 8], strides = [1, 1, 1]} : vector<2x8x32xf32> to vector<2x8x8xf32>
    %76 = vector.extract_strided_slice %62 {offsets = [0, 0, 24], sizes = [2, 8, 8], strides = [1, 1, 1]} : vector<2x8x32xf32> to vector<2x8x8xf32>
    %77 = tpu.concatenate %73, %74, %75, %76 in 0 : vector<2x8x8xf32>, vector<2x8x8xf32>, vector<2x8x8xf32>, vector<2x8x8xf32> -> vector<8x8x8xf32>
    %78 = arith.truncf %67 : vector<8x8x8xf32> to vector<8x8x8xbf16>
    %79 = arith.truncf %72 : vector<8x8x8xf32> to vector<8x8x8xbf16>
    "tpu.trace_start"() <{level = 10 : i32, message = "nqd,nkd->nqk"}> : () -> ()
    %cst_23 = arith.constant dense<0.000000e+00> : vector<8x8x8xf32>
    %80 = tpu.matmul %78, %79, %cst_23 {dimension_numbers = #tpu.dot_dimension_numbers<[2], [2], [1], [1], [0, 0, 0, 1, 1, 1], [0], [0]>} : vector<8x8x8xbf16>, vector<8x8x8xbf16>, vector<8x8x8xf32> -> vector<8x8x8xf32>
    "tpu.trace_stop"() : () -> ()
    %81 = arith.addf %80, %46 : vector<8x8x8xf32>
    %cst_24 = arith.constant dense<0xFF800000> : vector<8x8xf32>
    %82 = vector.multi_reduction <maximumf>, %81, %cst_24 [2] : vector<8x8x8xf32> to vector<8x8xf32>
    %83 = vector.shape_cast %82 : vector<8x8xf32> to vector<8x8x1xf32>
    %84 = vector.broadcast %83 : vector<8x8x1xf32> to vector<8x8x8xf32>
    %85 = arith.subf %81, %84 : vector<8x8x8xf32>
    %86 = math.exp %85 : vector<8x8x8xf32>
    %cst_25 = arith.constant dense<0.000000e+00> : vector<8x8xf32>
    %87 = vector.multi_reduction <add>, %86, %cst_25 [2] : vector<8x8x8xf32> to vector<8x8xf32>
    %88 = vector.shape_cast %87 : vector<8x8xf32> to vector<8x8x1xf32>
    %89 = tpu.reciprocal %88 {approx = true} : vector<8x8x1xf32> -> vector<8x8x1xf32>
    %90 = vector.broadcast %89 : vector<8x8x1xf32> to vector<8x8x8xf32>
    %91 = arith.mulf %86, %90 : vector<8x8x8xf32>
    %92 = arith.truncf %91 : vector<8x8x8xf32> to vector<8x8x8xbf16>
    %93 = arith.truncf %77 : vector<8x8x8xf32> to vector<8x8x8xbf16>
    "tpu.trace_start"() <{level = 10 : i32, message = "nqk,nkd->nqd"}> : () -> ()
    %cst_26 = arith.constant dense<0.000000e+00> : vector<8x8x8xf32>
    %94 = tpu.matmul %92, %93, %cst_26 {dimension_numbers = #tpu.dot_dimension_numbers<[2], [1], [1], [2], [0, 0, 0, 1, 1, 2], [0], [0]>} : vector<8x8x8xbf16>, vector<8x8x8xbf16>, vector<8x8x8xf32> -> vector<8x8x8xf32>
    "tpu.trace_stop"() : () -> ()
    %95 = vector.extract_strided_slice %94 {offsets = [0, 0, 0], sizes = [2, 8, 8], strides = [1, 1, 1]} : vector<8x8x8xf32> to vector<2x8x8xf32>
    %96 = vector.extract_strided_slice %94 {offsets = [2, 0, 0], sizes = [2, 8, 8], strides = [1, 1, 1]} : vector<8x8x8xf32> to vector<2x8x8xf32>
    %97 = vector.extract_strided_slice %94 {offsets = [4, 0, 0], sizes = [2, 8, 8], strides = [1, 1, 1]} : vector<8x8x8xf32> to vector<2x8x8xf32>
    %98 = vector.extract_strided_slice %94 {offsets = [6, 0, 0], sizes = [2, 8, 8], strides = [1, 1, 1]} : vector<8x8x8xf32> to vector<2x8x8xf32>
    %99 = tpu.concatenate %95, %96, %97, %98 in 2 : vector<2x8x8xf32>, vector<2x8x8xf32>, vector<2x8x8xf32>, vector<2x8x8xf32> -> vector<2x8x32xf32>
    %100 = vector.shape_cast %99 : vector<2x8x32xf32> to vector<16x32xf32>
    %101 = arith.truncf %100 : vector<16x32xf32> to vector<16x32xbf16>
    %102 = arith.index_cast %c0_i32 : i32 to index
    %c0_27 = arith.constant 0 : index
    %c0_28 = arith.constant 0 : index
    %103 = vector.load %arg8[%102, %c0_27, %c0_28] : memref<2x32x32xbf16, #tpu.memory_space<vmem>>, vector<1x32x32xbf16>
    %104 = vector.shape_cast %103 : vector<1x32x32xbf16> to vector<32x32xbf16>
    %cst_29 = arith.constant dense<0.000000e+00> : vector<16x32xf32>
    %105 = tpu.matmul %101, %104, %cst_29 {dimension_numbers = #tpu.dot_dimension_numbers<[1], [0], [0], [1], [0, 0, 1, 1], [], []>} : vector<16x32xbf16>, vector<32x32xbf16>, vector<16x32xf32> -> vector<16x32xf32>
    %106 = arith.index_cast %c0_i32 : i32 to index
    %c0_30 = arith.constant 0 : index
    %c0_31 = arith.constant 0 : index
    %107 = vector.load %arg9[%106, %c0_30, %c0_31] : memref<2x1x32xf32, #tpu.memory_space<vmem>>, vector<1x1x32xf32>
    %108 = vector.shape_cast %107 : vector<1x1x32xf32> to vector<1x32xf32>
    %109 = vector.broadcast %108 : vector<1x32xf32> to vector<16x32xf32>
    %110 = arith.addf %105, %109 : vector<16x32xf32>
    %111 = arith.addf %110, %37 : vector<16x32xf32>
    %112 = arith.index_cast %c0_i32 : i32 to index
    %c0_32 = arith.constant 0 : index
    %c0_33 = arith.constant 0 : index
    %113 = vector.load %arg10[%112, %c0_32, %c0_33] : memref<2x1x32xf32, #tpu.memory_space<vmem>>, vector<1x1x32xf32>
    %114 = vector.shape_cast %113 : vector<1x1x32xf32> to vector<1x32xf32>
    %115 = arith.index_cast %c0_i32 : i32 to index
    %c0_34 = arith.constant 0 : index
    %c0_35 = arith.constant 0 : index
    %116 = vector.load %arg11[%115, %c0_34, %c0_35] : memref<2x1x32xf32, #tpu.memory_space<vmem>>, vector<1x1x32xf32>
    %117 = vector.shape_cast %116 : vector<1x1x32xf32> to vector<1x32xf32>
    %cst_36 = arith.constant dense<0.000000e+00> : vector<16xf32>
    %118 = vector.multi_reduction <add>, %111, %cst_36 [1] : vector<16x32xf32> to vector<16xf32>
    %119 = vector.shape_cast %118 : vector<16xf32> to vector<16x1xf32>
    %cst_37 = arith.constant 3.200000e+01 : f32
    %120 = vector.broadcast %cst_37 : f32 to vector<16x1xf32>
    %121 = arith.divf %119, %120 : vector<16x1xf32>
    %122 = vector.broadcast %121 : vector<16x1xf32> to vector<16x32xf32>
    %123 = arith.subf %111, %122 : vector<16x32xf32>
    %124 = arith.mulf %123, %123 : vector<16x32xf32>
    %cst_38 = arith.constant dense<0.000000e+00> : vector<16xf32>
    %125 = vector.multi_reduction <add>, %124, %cst_38 [1] : vector<16x32xf32> to vector<16xf32>
    %126 = vector.shape_cast %125 : vector<16xf32> to vector<16x1xf32>
    %cst_39 = arith.constant 3.200000e+01 : f32
    %127 = vector.broadcast %cst_39 : f32 to vector<16x1xf32>
    %128 = arith.divf %126, %127 : vector<16x1xf32>
    %129 = vector.broadcast %121 : vector<16x1xf32> to vector<16x32xf32>
    %130 = arith.subf %111, %129 : vector<16x32xf32>
    %cst_40 = arith.constant 9.99999996E-13 : f32
    %131 = vector.broadcast %cst_40 : f32 to vector<16x1xf32>
    %132 = arith.addf %128, %131 : vector<16x1xf32>
    %133 = math.rsqrt %132 : vector<16x1xf32>
    %134 = vector.broadcast %133 : vector<16x1xf32> to vector<16x32xf32>
    %135 = arith.mulf %130, %134 : vector<16x32xf32>
    %136 = vector.broadcast %114 : vector<1x32xf32> to vector<16x32xf32>
    %137 = arith.mulf %135, %136 : vector<16x32xf32>
    %138 = vector.broadcast %117 : vector<1x32xf32> to vector<16x32xf32>
    %139 = arith.addf %137, %138 : vector<16x32xf32>
    %140 = arith.truncf %139 : vector<16x32xf32> to vector<16x32xbf16>
    %141 = arith.index_cast %c0_i32 : i32 to index
    %c0_41 = arith.constant 0 : index
    %c0_42 = arith.constant 0 : index
    %142 = vector.load %arg12[%141, %c0_41, %c0_42] : memref<2x32x64xbf16, #tpu.memory_space<vmem>>, vector<1x32x64xbf16>
    %143 = vector.shape_cast %142 : vector<1x32x64xbf16> to vector<32x64xbf16>
    %cst_43 = arith.constant dense<0.000000e+00> : vector<16x64xf32>
    %144 = tpu.matmul %140, %143, %cst_43 {dimension_numbers = #tpu.dot_dimension_numbers<[1], [0], [0], [1], [0, 0, 1, 1], [], []>} : vector<16x32xbf16>, vector<32x64xbf16>, vector<16x64xf32> -> vector<16x64xf32>
    %145 = arith.index_cast %c0_i32 : i32 to index
    %c0_44 = arith.constant 0 : index
    %c0_45 = arith.constant 0 : index
    %146 = vector.load %arg13[%145, %c0_44, %c0_45] : memref<2x1x64xf32, #tpu.memory_space<vmem>>, vector<1x1x64xf32>
    %147 = vector.shape_cast %146 : vector<1x1x64xf32> to vector<1x64xf32>
    %148 = vector.broadcast %147 : vector<1x64xf32> to vector<16x64xf32>
    %149 = arith.addf %144, %148 : vector<16x64xf32>
    %150 = arith.mulf %149, %149 : vector<16x64xf32>
    %151 = arith.mulf %149, %150 : vector<16x64xf32>
    %cst_46 = arith.constant 4.471500e-02 : f32
    %152 = vector.broadcast %cst_46 : f32 to vector<16x64xf32>
    %153 = arith.mulf %152, %151 : vector<16x64xf32>
    %154 = arith.addf %149, %153 : vector<16x64xf32>
    %cst_47 = arith.constant 0.797884583 : f32
    %155 = vector.broadcast %cst_47 : f32 to vector<16x64xf32>
    %156 = arith.mulf %155, %154 : vector<16x64xf32>
    %157 = math.tanh %156 : vector<16x64xf32>
    %cst_48 = arith.constant 1.000000e+00 : f32
    %158 = vector.broadcast %cst_48 : f32 to vector<16x64xf32>
    %159 = arith.addf %158, %157 : vector<16x64xf32>
    %cst_49 = arith.constant 5.000000e-01 : f32
    %160 = vector.broadcast %cst_49 : f32 to vector<16x64xf32>
    %161 = arith.mulf %160, %159 : vector<16x64xf32>
    %162 = arith.mulf %149, %161 : vector<16x64xf32>
    %163 = arith.truncf %162 : vector<16x64xf32> to vector<16x64xbf16>
    %164 = arith.index_cast %c0_i32 : i32 to index
    %c0_50 = arith.constant 0 : index
    %c0_51 = arith.constant 0 : index
    %165 = vector.load %arg14[%164, %c0_50, %c0_51] : memref<2x64x32xbf16, #tpu.memory_space<vmem>>, vector<1x64x32xbf16>
    %166 = vector.shape_cast %165 : vector<1x64x32xbf16> to vector<64x32xbf16>
    %cst_52 = arith.constant dense<0.000000e+00> : vector<16x32xf32>
    %167 = tpu.matmul %163, %166, %cst_52 {dimension_numbers = #tpu.dot_dimension_numbers<[1], [0], [0], [1], [0, 0, 1, 1], [], []>} : vector<16x64xbf16>, vector<64x32xbf16>, vector<16x32xf32> -> vector<16x32xf32>
    %168 = arith.index_cast %c0_i32 : i32 to index
    %c0_53 = arith.constant 0 : index
    %c0_54 = arith.constant 0 : index
    %169 = vector.load %arg15[%168, %c0_53, %c0_54] : memref<2x1x32xf32, #tpu.memory_space<vmem>>, vector<1x1x32xf32>
    %170 = vector.shape_cast %169 : vector<1x1x32xf32> to vector<1x32xf32>
    %171 = vector.broadcast %170 : vector<1x32xf32> to vector<16x32xf32>
    %172 = arith.addf %167, %171 : vector<16x32xf32>
    %173 = arith.addf %172, %139 : vector<16x32xf32>
    %174 = arith.index_cast %c0_i32 : i32 to index
    %c0_55 = arith.constant 0 : index
    %c0_56 = arith.constant 0 : index
    %175 = vector.load %arg16[%174, %c0_55, %c0_56] : memref<2x1x32xf32, #tpu.memory_space<vmem>>, vector<1x1x32xf32>
    %176 = vector.shape_cast %175 : vector<1x1x32xf32> to vector<1x32xf32>
    %177 = arith.index_cast %c0_i32 : i32 to index
    %c0_57 = arith.constant 0 : index
    %c0_58 = arith.constant 0 : index
    %178 = vector.load %arg17[%177, %c0_57, %c0_58] : memref<2x1x32xf32, #tpu.memory_space<vmem>>, vector<1x1x32xf32>
    %179 = vector.shape_cast %178 : vector<1x1x32xf32> to vector<1x32xf32>
    %cst_59 = arith.constant dense<0.000000e+00> : vector<16xf32>
    %180 = vector.multi_reduction <add>, %173, %cst_59 [1] : vector<16x32xf32> to vector<16xf32>
    %181 = vector.shape_cast %180 : vector<16xf32> to vector<16x1xf32>
    %cst_60 = arith.constant 3.200000e+01 : f32
    %182 = vector.broadcast %cst_60 : f32 to vector<16x1xf32>
    %183 = arith.divf %181, %182 : vector<16x1xf32>
    %184 = vector.broadcast %183 : vector<16x1xf32> to vector<16x32xf32>
    %185 = arith.subf %173, %184 : vector<16x32xf32>
    %186 = arith.mulf %185, %185 : vector<16x32xf32>
    %cst_61 = arith.constant dense<0.000000e+00> : vector<16xf32>
    %187 = vector.multi_reduction <add>, %186, %cst_61 [1] : vector<16x32xf32> to vector<16xf32>
    %188 = vector.shape_cast %187 : vector<16xf32> to vector<16x1xf32>
    %cst_62 = arith.constant 3.200000e+01 : f32
    %189 = vector.broadcast %cst_62 : f32 to vector<16x1xf32>
    %190 = arith.divf %188, %189 : vector<16x1xf32>
    %191 = vector.broadcast %183 : vector<16x1xf32> to vector<16x32xf32>
    %192 = arith.subf %173, %191 : vector<16x32xf32>
    %cst_63 = arith.constant 9.99999996E-13 : f32
    %193 = vector.broadcast %cst_63 : f32 to vector<16x1xf32>
    %194 = arith.addf %190, %193 : vector<16x1xf32>
    %195 = math.rsqrt %194 : vector<16x1xf32>
    %196 = vector.broadcast %195 : vector<16x1xf32> to vector<16x32xf32>
    %197 = arith.mulf %192, %196 : vector<16x32xf32>
    %198 = vector.broadcast %176 : vector<1x32xf32> to vector<16x32xf32>
    %199 = arith.mulf %197, %198 : vector<16x32xf32>
    %200 = vector.broadcast %179 : vector<1x32xf32> to vector<16x32xf32>
    %201 = arith.addf %199, %200 : vector<16x32xf32>
    %c1_i32 = arith.constant 1 : i32
    %202 = arith.truncf %201 : vector<16x32xf32> to vector<16x32xbf16>
    %203 = arith.index_cast %c1_i32 : i32 to index
    %c0_64 = arith.constant 0 : index
    %c0_65 = arith.constant 0 : index
    %204 = vector.load %arg6[%203, %c0_64, %c0_65] : memref<2x32x96xbf16, #tpu.memory_space<vmem>>, vector<1x32x96xbf16>
    %205 = vector.shape_cast %204 : vector<1x32x96xbf16> to vector<32x96xbf16>
    %cst_66 = arith.constant dense<0.000000e+00> : vector<16x96xf32>
    %206 = tpu.matmul %202, %205, %cst_66 {dimension_numbers = #tpu.dot_dimension_numbers<[1], [0], [0], [1], [0, 0, 1, 1], [], []>} : vector<16x32xbf16>, vector<32x96xbf16>, vector<16x96xf32> -> vector<16x96xf32>
    %207 = arith.index_cast %c1_i32 : i32 to index
    %c0_67 = arith.constant 0 : index
    %c0_68 = arith.constant 0 : index
    %208 = vector.load %arg7[%207, %c0_67, %c0_68] : memref<2x1x96xf32, #tpu.memory_space<vmem>>, vector<1x1x96xf32>
    %209 = vector.shape_cast %208 : vector<1x1x96xf32> to vector<1x96xf32>
    %210 = vector.broadcast %209 : vector<1x96xf32> to vector<16x96xf32>
    %211 = arith.addf %206, %210 : vector<16x96xf32>
    %212 = vector.extract_strided_slice %211 {offsets = [0, 0], sizes = [16, 32], strides = [1, 1]} : vector<16x96xf32> to vector<16x32xf32>
    %213 = vector.shape_cast %212 : vector<16x32xf32> to vector<2x8x32xf32>
    %214 = vector.extract_strided_slice %211 {offsets = [0, 32], sizes = [16, 32], strides = [1, 1]} : vector<16x96xf32> to vector<16x32xf32>
    %215 = vector.shape_cast %214 : vector<16x32xf32> to vector<2x8x32xf32>
    %216 = vector.extract_strided_slice %211 {offsets = [0, 64], sizes = [16, 32], strides = [1, 1]} : vector<16x96xf32> to vector<16x32xf32>
    %217 = vector.shape_cast %216 : vector<16x32xf32> to vector<2x8x32xf32>
    %218 = vector.extract_strided_slice %213 {offsets = [0, 0, 0], sizes = [2, 8, 8], strides = [1, 1, 1]} : vector<2x8x32xf32> to vector<2x8x8xf32>
    %219 = vector.extract_strided_slice %213 {offsets = [0, 0, 8], sizes = [2, 8, 8], strides = [1, 1, 1]} : vector<2x8x32xf32> to vector<2x8x8xf32>
    %220 = vector.extract_strided_slice %213 {offsets = [0, 0, 16], sizes = [2, 8, 8], strides = [1, 1, 1]} : vector<2x8x32xf32> to vector<2x8x8xf32>
    %221 = vector.extract_strided_slice %213 {offsets = [0, 0, 24], sizes = [2, 8, 8], strides = [1, 1, 1]} : vector<2x8x32xf32> to vector<2x8x8xf32>
    %222 = tpu.concatenate %218, %219, %220, %221 in 0 : vector<2x8x8xf32>, vector<2x8x8xf32>, vector<2x8x8xf32>, vector<2x8x8xf32> -> vector<8x8x8xf32>
    %223 = vector.extract_strided_slice %215 {offsets = [0, 0, 0], sizes = [2, 8, 8], strides = [1, 1, 1]} : vector<2x8x32xf32> to vector<2x8x8xf32>
    %224 = vector.extract_strided_slice %215 {offsets = [0, 0, 8], sizes = [2, 8, 8], strides = [1, 1, 1]} : vector<2x8x32xf32> to vector<2x8x8xf32>
    %225 = vector.extract_strided_slice %215 {offsets = [0, 0, 16], sizes = [2, 8, 8], strides = [1, 1, 1]} : vector<2x8x32xf32> to vector<2x8x8xf32>
    %226 = vector.extract_strided_slice %215 {offsets = [0, 0, 24], sizes = [2, 8, 8], strides = [1, 1, 1]} : vector<2x8x32xf32> to vector<2x8x8xf32>
    %227 = tpu.concatenate %223, %224, %225, %226 in 0 : vector<2x8x8xf32>, vector<2x8x8xf32>, vector<2x8x8xf32>, vector<2x8x8xf32> -> vector<8x8x8xf32>
    %228 = vector.extract_strided_slice %217 {offsets = [0, 0, 0], sizes = [2, 8, 8], strides = [1, 1, 1]} : vector<2x8x32xf32> to vector<2x8x8xf32>
    %229 = vector.extract_strided_slice %217 {offsets = [0, 0, 8], sizes = [2, 8, 8], strides = [1, 1, 1]} : vector<2x8x32xf32> to vector<2x8x8xf32>
    %230 = vector.extract_strided_slice %217 {offsets = [0, 0, 16], sizes = [2, 8, 8], strides = [1, 1, 1]} : vector<2x8x32xf32> to vector<2x8x8xf32>
    %231 = vector.extract_strided_slice %217 {offsets = [0, 0, 24], sizes = [2, 8, 8], strides = [1, 1, 1]} : vector<2x8x32xf32> to vector<2x8x8xf32>
    %232 = tpu.concatenate %228, %229, %230, %231 in 0 : vector<2x8x8xf32>, vector<2x8x8xf32>, vector<2x8x8xf32>, vector<2x8x8xf32> -> vector<8x8x8xf32>
    %233 = arith.truncf %222 : vector<8x8x8xf32> to vector<8x8x8xbf16>
    %234 = arith.truncf %227 : vector<8x8x8xf32> to vector<8x8x8xbf16>
    "tpu.trace_start"() <{level = 10 : i32, message = "nqd,nkd->nqk"}> : () -> ()
    %cst_69 = arith.constant dense<0.000000e+00> : vector<8x8x8xf32>
    %235 = tpu.matmul %233, %234, %cst_69 {dimension_numbers = #tpu.dot_dimension_numbers<[2], [2], [1], [1], [0, 0, 0, 1, 1, 1], [0], [0]>} : vector<8x8x8xbf16>, vector<8x8x8xbf16>, vector<8x8x8xf32> -> vector<8x8x8xf32>
    "tpu.trace_stop"() : () -> ()
    %236 = arith.addf %235, %46 : vector<8x8x8xf32>
    %cst_70 = arith.constant dense<0xFF800000> : vector<8x8xf32>
    %237 = vector.multi_reduction <maximumf>, %236, %cst_70 [2] : vector<8x8x8xf32> to vector<8x8xf32>
    %238 = vector.shape_cast %237 : vector<8x8xf32> to vector<8x8x1xf32>
    %239 = vector.broadcast %238 : vector<8x8x1xf32> to vector<8x8x8xf32>
    %240 = arith.subf %236, %239 : vector<8x8x8xf32>
    %241 = math.exp %240 : vector<8x8x8xf32>
    %cst_71 = arith.constant dense<0.000000e+00> : vector<8x8xf32>
    %242 = vector.multi_reduction <add>, %241, %cst_71 [2] : vector<8x8x8xf32> to vector<8x8xf32>
    %243 = vector.shape_cast %242 : vector<8x8xf32> to vector<8x8x1xf32>
    %244 = tpu.reciprocal %243 {approx = true} : vector<8x8x1xf32> -> vector<8x8x1xf32>
    %245 = vector.broadcast %244 : vector<8x8x1xf32> to vector<8x8x8xf32>
    %246 = arith.mulf %241, %245 : vector<8x8x8xf32>
    %247 = arith.truncf %246 : vector<8x8x8xf32> to vector<8x8x8xbf16>
    %248 = arith.truncf %232 : vector<8x8x8xf32> to vector<8x8x8xbf16>
    "tpu.trace_start"() <{level = 10 : i32, message = "nqk,nkd->nqd"}> : () -> ()
    %cst_72 = arith.constant dense<0.000000e+00> : vector<8x8x8xf32>
    %249 = tpu.matmul %247, %248, %cst_72 {dimension_numbers = #tpu.dot_dimension_numbers<[2], [1], [1], [2], [0, 0, 0, 1, 1, 2], [0], [0]>} : vector<8x8x8xbf16>, vector<8x8x8xbf16>, vector<8x8x8xf32> -> vector<8x8x8xf32>
    "tpu.trace_stop"() : () -> ()
    %250 = vector.extract_strided_slice %249 {offsets = [0, 0, 0], sizes = [2, 8, 8], strides = [1, 1, 1]} : vector<8x8x8xf32> to vector<2x8x8xf32>
    %251 = vector.extract_strided_slice %249 {offsets = [2, 0, 0], sizes = [2, 8, 8], strides = [1, 1, 1]} : vector<8x8x8xf32> to vector<2x8x8xf32>
    %252 = vector.extract_strided_slice %249 {offsets = [4, 0, 0], sizes = [2, 8, 8], strides = [1, 1, 1]} : vector<8x8x8xf32> to vector<2x8x8xf32>
    %253 = vector.extract_strided_slice %249 {offsets = [6, 0, 0], sizes = [2, 8, 8], strides = [1, 1, 1]} : vector<8x8x8xf32> to vector<2x8x8xf32>
    %254 = tpu.concatenate %250, %251, %252, %253 in 2 : vector<2x8x8xf32>, vector<2x8x8xf32>, vector<2x8x8xf32>, vector<2x8x8xf32> -> vector<2x8x32xf32>
    %255 = vector.shape_cast %254 : vector<2x8x32xf32> to vector<16x32xf32>
    %256 = arith.truncf %255 : vector<16x32xf32> to vector<16x32xbf16>
    %257 = arith.index_cast %c1_i32 : i32 to index
    %c0_73 = arith.constant 0 : index
    %c0_74 = arith.constant 0 : index
    %258 = vector.load %arg8[%257, %c0_73, %c0_74] : memref<2x32x32xbf16, #tpu.memory_space<vmem>>, vector<1x32x32xbf16>
    %259 = vector.shape_cast %258 : vector<1x32x32xbf16> to vector<32x32xbf16>
    %cst_75 = arith.constant dense<0.000000e+00> : vector<16x32xf32>
    %260 = tpu.matmul %256, %259, %cst_75 {dimension_numbers = #tpu.dot_dimension_numbers<[1], [0], [0], [1], [0, 0, 1, 1], [], []>} : vector<16x32xbf16>, vector<32x32xbf16>, vector<16x32xf32> -> vector<16x32xf32>
    %261 = arith.index_cast %c1_i32 : i32 to index
    %c0_76 = arith.constant 0 : index
    %c0_77 = arith.constant 0 : index
    %262 = vector.load %arg9[%261, %c0_76, %c0_77] : memref<2x1x32xf32, #tpu.memory_space<vmem>>, vector<1x1x32xf32>
    %263 = vector.shape_cast %262 : vector<1x1x32xf32> to vector<1x32xf32>
    %264 = vector.broadcast %263 : vector<1x32xf32> to vector<16x32xf32>
    %265 = arith.addf %260, %264 : vector<16x32xf32>
    %266 = arith.addf %265, %201 : vector<16x32xf32>
    %267 = arith.index_cast %c1_i32 : i32 to index
    %c0_78 = arith.constant 0 : index
    %c0_79 = arith.constant 0 : index
    %268 = vector.load %arg10[%267, %c0_78, %c0_79] : memref<2x1x32xf32, #tpu.memory_space<vmem>>, vector<1x1x32xf32>
    %269 = vector.shape_cast %268 : vector<1x1x32xf32> to vector<1x32xf32>
    %270 = arith.index_cast %c1_i32 : i32 to index
    %c0_80 = arith.constant 0 : index
    %c0_81 = arith.constant 0 : index
    %271 = vector.load %arg11[%270, %c0_80, %c0_81] : memref<2x1x32xf32, #tpu.memory_space<vmem>>, vector<1x1x32xf32>
    %272 = vector.shape_cast %271 : vector<1x1x32xf32> to vector<1x32xf32>
    %cst_82 = arith.constant dense<0.000000e+00> : vector<16xf32>
    %273 = vector.multi_reduction <add>, %266, %cst_82 [1] : vector<16x32xf32> to vector<16xf32>
    %274 = vector.shape_cast %273 : vector<16xf32> to vector<16x1xf32>
    %cst_83 = arith.constant 3.200000e+01 : f32
    %275 = vector.broadcast %cst_83 : f32 to vector<16x1xf32>
    %276 = arith.divf %274, %275 : vector<16x1xf32>
    %277 = vector.broadcast %276 : vector<16x1xf32> to vector<16x32xf32>
    %278 = arith.subf %266, %277 : vector<16x32xf32>
    %279 = arith.mulf %278, %278 : vector<16x32xf32>
    %cst_84 = arith.constant dense<0.000000e+00> : vector<16xf32>
    %280 = vector.multi_reduction <add>, %279, %cst_84 [1] : vector<16x32xf32> to vector<16xf32>
    %281 = vector.shape_cast %280 : vector<16xf32> to vector<16x1xf32>
    %cst_85 = arith.constant 3.200000e+01 : f32
    %282 = vector.broadcast %cst_85 : f32 to vector<16x1xf32>
    %283 = arith.divf %281, %282 : vector<16x1xf32>
    %284 = vector.broadcast %276 : vector<16x1xf32> to vector<16x32xf32>
    %285 = arith.subf %266, %284 : vector<16x32xf32>
    %cst_86 = arith.constant 9.99999996E-13 : f32
    %286 = vector.broadcast %cst_86 : f32 to vector<16x1xf32>
    %287 = arith.addf %283, %286 : vector<16x1xf32>
    %288 = math.rsqrt %287 : vector<16x1xf32>
    %289 = vector.broadcast %288 : vector<16x1xf32> to vector<16x32xf32>
    %290 = arith.mulf %285, %289 : vector<16x32xf32>
    %291 = vector.broadcast %269 : vector<1x32xf32> to vector<16x32xf32>
    %292 = arith.mulf %290, %291 : vector<16x32xf32>
    %293 = vector.broadcast %272 : vector<1x32xf32> to vector<16x32xf32>
    %294 = arith.addf %292, %293 : vector<16x32xf32>
    %295 = arith.truncf %294 : vector<16x32xf32> to vector<16x32xbf16>
    %296 = arith.index_cast %c1_i32 : i32 to index
    %c0_87 = arith.constant 0 : index
    %c0_88 = arith.constant 0 : index
    %297 = vector.load %arg12[%296, %c0_87, %c0_88] : memref<2x32x64xbf16, #tpu.memory_space<vmem>>, vector<1x32x64xbf16>
    %298 = vector.shape_cast %297 : vector<1x32x64xbf16> to vector<32x64xbf16>
    %cst_89 = arith.constant dense<0.000000e+00> : vector<16x64xf32>
    %299 = tpu.matmul %295, %298, %cst_89 {dimension_numbers = #tpu.dot_dimension_numbers<[1], [0], [0], [1], [0, 0, 1, 1], [], []>} : vector<16x32xbf16>, vector<32x64xbf16>, vector<16x64xf32> -> vector<16x64xf32>
    %300 = arith.index_cast %c1_i32 : i32 to index
    %c0_90 = arith.constant 0 : index
    %c0_91 = arith.constant 0 : index
    %301 = vector.load %arg13[%300, %c0_90, %c0_91] : memref<2x1x64xf32, #tpu.memory_space<vmem>>, vector<1x1x64xf32>
    %302 = vector.shape_cast %301 : vector<1x1x64xf32> to vector<1x64xf32>
    %303 = vector.broadcast %302 : vector<1x64xf32> to vector<16x64xf32>
    %304 = arith.addf %299, %303 : vector<16x64xf32>
    %305 = arith.mulf %304, %304 : vector<16x64xf32>
    %306 = arith.mulf %304, %305 : vector<16x64xf32>
    %cst_92 = arith.constant 4.471500e-02 : f32
    %307 = vector.broadcast %cst_92 : f32 to vector<16x64xf32>
    %308 = arith.mulf %307, %306 : vector<16x64xf32>
    %309 = arith.addf %304, %308 : vector<16x64xf32>
    %cst_93 = arith.constant 0.797884583 : f32
    %310 = vector.broadcast %cst_93 : f32 to vector<16x64xf32>
    %311 = arith.mulf %310, %309 : vector<16x64xf32>
    %312 = math.tanh %311 : vector<16x64xf32>
    %cst_94 = arith.constant 1.000000e+00 : f32
    %313 = vector.broadcast %cst_94 : f32 to vector<16x64xf32>
    %314 = arith.addf %313, %312 : vector<16x64xf32>
    %cst_95 = arith.constant 5.000000e-01 : f32
    %315 = vector.broadcast %cst_95 : f32 to vector<16x64xf32>
    %316 = arith.mulf %315, %314 : vector<16x64xf32>
    %317 = arith.mulf %304, %316 : vector<16x64xf32>
    %318 = arith.truncf %317 : vector<16x64xf32> to vector<16x64xbf16>
    %319 = arith.index_cast %c1_i32 : i32 to index
    %c0_96 = arith.constant 0 : index
    %c0_97 = arith.constant 0 : index
    %320 = vector.load %arg14[%319, %c0_96, %c0_97] : memref<2x64x32xbf16, #tpu.memory_space<vmem>>, vector<1x64x32xbf16>
    %321 = vector.shape_cast %320 : vector<1x64x32xbf16> to vector<64x32xbf16>
    %cst_98 = arith.constant dense<0.000000e+00> : vector<16x32xf32>
    %322 = tpu.matmul %318, %321, %cst_98 {dimension_numbers = #tpu.dot_dimension_numbers<[1], [0], [0], [1], [0, 0, 1, 1], [], []>} : vector<16x64xbf16>, vector<64x32xbf16>, vector<16x32xf32> -> vector<16x32xf32>
    %323 = arith.index_cast %c1_i32 : i32 to index
    %c0_99 = arith.constant 0 : index
    %c0_100 = arith.constant 0 : index
    %324 = vector.load %arg15[%323, %c0_99, %c0_100] : memref<2x1x32xf32, #tpu.memory_space<vmem>>, vector<1x1x32xf32>
    %325 = vector.shape_cast %324 : vector<1x1x32xf32> to vector<1x32xf32>
    %326 = vector.broadcast %325 : vector<1x32xf32> to vector<16x32xf32>
    %327 = arith.addf %322, %326 : vector<16x32xf32>
    %328 = arith.addf %327, %294 : vector<16x32xf32>
    %329 = arith.index_cast %c1_i32 : i32 to index
    %c0_101 = arith.constant 0 : index
    %c0_102 = arith.constant 0 : index
    %330 = vector.load %arg16[%329, %c0_101, %c0_102] : memref<2x1x32xf32, #tpu.memory_space<vmem>>, vector<1x1x32xf32>
    %331 = vector.shape_cast %330 : vector<1x1x32xf32> to vector<1x32xf32>
    %332 = arith.index_cast %c1_i32 : i32 to index
    %c0_103 = arith.constant 0 : index
    %c0_104 = arith.constant 0 : index
    %333 = vector.load %arg17[%332, %c0_103, %c0_104] : memref<2x1x32xf32, #tpu.memory_space<vmem>>, vector<1x1x32xf32>
    %334 = vector.shape_cast %333 : vector<1x1x32xf32> to vector<1x32xf32>
    %cst_105 = arith.constant dense<0.000000e+00> : vector<16xf32>
    %335 = vector.multi_reduction <add>, %328, %cst_105 [1] : vector<16x32xf32> to vector<16xf32>
    %336 = vector.shape_cast %335 : vector<16xf32> to vector<16x1xf32>
    %cst_106 = arith.constant 3.200000e+01 : f32
    %337 = vector.broadcast %cst_106 : f32 to vector<16x1xf32>
    %338 = arith.divf %336, %337 : vector<16x1xf32>
    %339 = vector.broadcast %338 : vector<16x1xf32> to vector<16x32xf32>
    %340 = arith.subf %328, %339 : vector<16x32xf32>
    %341 = arith.mulf %340, %340 : vector<16x32xf32>
    %cst_107 = arith.constant dense<0.000000e+00> : vector<16xf32>
    %342 = vector.multi_reduction <add>, %341, %cst_107 [1] : vector<16x32xf32> to vector<16xf32>
    %343 = vector.shape_cast %342 : vector<16xf32> to vector<16x1xf32>
    %cst_108 = arith.constant 3.200000e+01 : f32
    %344 = vector.broadcast %cst_108 : f32 to vector<16x1xf32>
    %345 = arith.divf %343, %344 : vector<16x1xf32>
    %346 = vector.broadcast %338 : vector<16x1xf32> to vector<16x32xf32>
    %347 = arith.subf %328, %346 : vector<16x32xf32>
    %cst_109 = arith.constant 9.99999996E-13 : f32
    %348 = vector.broadcast %cst_109 : f32 to vector<16x1xf32>
    %349 = arith.addf %345, %348 : vector<16x1xf32>
    %350 = math.rsqrt %349 : vector<16x1xf32>
    %351 = vector.broadcast %350 : vector<16x1xf32> to vector<16x32xf32>
    %352 = arith.mulf %347, %351 : vector<16x32xf32>
    %353 = vector.broadcast %331 : vector<1x32xf32> to vector<16x32xf32>
    %354 = arith.mulf %352, %353 : vector<16x32xf32>
    %355 = vector.broadcast %334 : vector<1x32xf32> to vector<16x32xf32>
    %356 = arith.addf %354, %355 : vector<16x32xf32>
    %c2_i32 = arith.constant 2 : i32
    %357 = vector.shape_cast %356 : vector<16x32xf32> to vector<2x8x32xf32>
    %358 = vector.extract_strided_slice %357 {offsets = [0, 0, 0], sizes = [2, 1, 32], strides = [1, 1, 1]} : vector<2x8x32xf32> to vector<2x1x32xf32>
    %359 = vector.shape_cast %358 : vector<2x1x32xf32> to vector<2x32xf32>
    %c0_110 = arith.constant 0 : index
    %c0_111 = arith.constant 0 : index
    %360 = vector.load %arg18[%c0_110, %c0_111] : memref<2x32xf32, #tpu.memory_space<vmem>>, vector<2x32xf32>
    tpu.vector_store %arg18[%c0_110, %c0_111], %359 {strides = array<i32>} : memref<2x32xf32, #tpu.memory_space<vmem>>, vector<2x32xf32>,
    return
  }
}

</mosaic_0001>

<llo_original>
// kernel: tpu_custom_call.1
$region0: #{tpu_custom_call.1}
  #allocation0 [shape = 'u32[]', space=smem, size = 0x4, offset = 0x4, fixed_abs, tag = 'smem constant byte address 0x4 - core index']
  #allocation1 [shape = 'u32[144,128]{1,0:T(1,128)}', space=vmem, size = 0x12000, scoped, tag = 'internal scratch']
  %s0 = inlined_call_operand.vmem [shape: s32[16,1], index: 0, kind: input, shape index: {}]
  %s1 = inlined_call_operand.vmem [shape: f32[2,8], index: 1, kind: input, shape index: {}]
  %s2 = inlined_call_operand.vmem [shape: f32[128,32], index: 2, kind: input, shape index: {}]
  %s3 = inlined_call_operand.vmem [shape: f32[64,32], index: 3, kind: input, shape index: {}]
  %s4 = inlined_call_operand.vmem [shape: f32[1,32], index: 4, kind: input, shape index: {}]
  %s5 = inlined_call_operand.vmem [shape: f32[1,32], index: 5, kind: input, shape index: {}]
  %s6 = inlined_call_operand.vmem [shape: bf16[2,32,96], index: 6, kind: input, shape index: {}]
  %s7 = inlined_call_operand.vmem [shape: f32[2,1,96], index: 7, kind: input, shape index: {}]
  %s8 = inlined_call_operand.vmem [shape: bf16[2,32,32], index: 8, kind: input, shape index: {}]
  %s9 = inlined_call_operand.vmem [shape: f32[2,1,32], index: 9, kind: input, shape index: {}]
  %s10 = inlined_call_operand.vmem [shape: f32[2,1,32], index: 10, kind: input, shape index: {}]
  %s11 = inlined_call_operand.vmem [shape: f32[2,1,32], index: 11, kind: input, shape index: {}]
  %s12 = inlined_call_operand.vmem [shape: bf16[2,32,64], index: 12, kind: input, shape index: {}]
  %s13 = inlined_call_operand.vmem [shape: f32[2,1,64], index: 13, kind: input, shape index: {}]
  %s14 = inlined_call_operand.vmem [shape: bf16[2,64,32], index: 14, kind: input, shape index: {}]
  %s15 = inlined_call_operand.vmem [shape: f32[2,1,32], index: 15, kind: input, shape index: {}]
  %s16 = inlined_call_operand.vmem [shape: f32[2,1,32], index: 16, kind: input, shape index: {}]
  %s17 = inlined_call_operand.vmem [shape: f32[2,1,32], index: 17, kind: input, shape index: {}]
  %s18 = inlined_call_operand.hbm [shape: f32[2,32], index: 18, kind: output, shape index: {}]
  %s19 = sld [smem:[#allocation0]]
  $region82: #{tpu_custom_call.1} parent=0
    _
  %s21 = ssub.s32 1, %s19
  %s22 = scalar_select 0, %s21, %s19
  $region1: #{tpu_custom_call.1} parent=0
    #allocation2 [shape = 'u8[1024]{0}', space=vmem, size = 0x400, scoped, tag = 'output window, operand 0, single buffered']
    #allocation3 [shape = 's32[1]{0}', space=sflag, size = 0x4, scoped, tag = 'scoped memory for tpu_custom_call.1']
    %23 = vsyncpa [#allocation3], 0
    // Predicated region
    $region2: #{tpu_custom_call.1} parent=1 // pred_check
      _
    $region3: #{tpu_custom_call.1} parent=1 // pred_check_branch
      %25 = sbr.rel (0) target = $region5
    $region4: #{tpu_custom_call.1} parent=1 // pred_region
      _
    $region5: #{tpu_custom_call.1} parent=1 // pred_fallthru
      _
    // Predicated region
    $region6: #{tpu_custom_call.1} parent=1 // pred_check
      _
    $region7: #{tpu_custom_call.1} parent=1 // pred_check_branch
      %27 = sbr.rel (0) target = $region9
    $region8: #{tpu_custom_call.1} parent=1 // pred_region
      _
    $region9: #{tpu_custom_call.1} parent=1 // pred_fallthru
      _
    // Predicated region
    $region10: #{tpu_custom_call.1} parent=1 // pred_check
      _
    $region11: #{tpu_custom_call.1} parent=1 // pred_check_branch
      %29 = sbr.rel (0) target = $region13
    $region12: #{tpu_custom_call.1} parent=1 // pred_region
      _
    $region13: #{tpu_custom_call.1} parent=1 // pred_fallthru
      _
    // Predicated region
    $region14: #{tpu_custom_call.1} parent=1 // pred_check
      _
    $region15: #{tpu_custom_call.1} parent=1 // pred_check_branch
      %31 = sbr.rel (0) target = $region17
    $region16: #{tpu_custom_call.1} parent=1 // pred_region
      _
    $region17: #{tpu_custom_call.1} parent=1 // pred_fallthru
      _
    // Predicated region
    $region18: #{tpu_custom_call.1} parent=1 // pred_check
      _
    $region19: #{tpu_custom_call.1} parent=1 // pred_check_branch
      %33 = sbr.rel (0) target = $region21
    $region20: #{tpu_custom_call.1} parent=1 // pred_region
      _
    $region21: #{tpu_custom_call.1} parent=1 // pred_fallthru
      _
    // Predicated region
    $region22: #{tpu_custom_call.1} parent=1 // pred_check
      _
    $region23: #{tpu_custom_call.1} parent=1 // pred_check_branch
      %35 = sbr.rel (0) target = $region25
    $region24: #{tpu_custom_call.1} parent=1 // pred_region
      _
    $region25: #{tpu_custom_call.1} parent=1 // pred_fallthru
      _
    // Predicated region
    $region26: #{tpu_custom_call.1} parent=1 // pred_check
      _
    $region27: #{tpu_custom_call.1} parent=1 // pred_check_branch
      %37 = sbr.rel (0) target = $region29
    $region28: #{tpu_custom_call.1} parent=1 // pred_region
      _
    $region29: #{tpu_custom_call.1} parent=1 // pred_fallthru
      _
    // Predicated region
    $region30: #{tpu_custom_call.1} parent=1 // pred_check
      _
    $region31: #{tpu_custom_call.1} parent=1 // pred_check_branch
      %39 = sbr.rel (0) target = $region33
    $region32: #{tpu_custom_call.1} parent=1 // pred_region
      _
    $region33: #{tpu_custom_call.1} parent=1 // pred_fallthru
      _
    // Predicated region
    $region34: #{tpu_custom_call.1} parent=1 // pred_check
      _
    $region35: #{tpu_custom_call.1} parent=1 // pred_check_branch
      %41 = sbr.rel (0) target = $region37
    $region36: #{tpu_custom_call.1} parent=1 // pred_region
      _
    $region37: #{tpu_custom_call.1} parent=1 // pred_fallthru
      _
    // Predicated region
    $region38: #{tpu_custom_call.1} parent=1 // pred_check
      _
    $region39: #{tpu_custom_call.1} parent=1 // pred_check_branch
      %43 = sbr.rel (0) target = $region41
    $region40: #{tpu_custom_call.1} parent=1 // pred_region
      _
    $region41: #{tpu_custom_call.1} parent=1 // pred_fallthru
      _
    // Predicated region
    $region42: #{tpu_custom_call.1} parent=1 // pred_check
      _
    $region43: #{tpu_custom_call.1} parent=1 // pred_check_branch
      %45 = sbr.rel (0) target = $region45
    $region44: #{tpu_custom_call.1} parent=1 // pred_region
      _
    $region45: #{tpu_custom_call.1} parent=1 // pred_fallthru
      _
    // Predicated region
    $region46: #{tpu_custom_call.1} parent=1 // pred_check
      _
    $region47: #{tpu_custom_call.1} parent=1 // pred_check_branch
      %47 = sbr.rel (0) target = $region49
    $region48: #{tpu_custom_call.1} parent=1 // pred_region
      _
    $region49: #{tpu_custom_call.1} parent=1 // pred_fallthru
      _
    // Predicated region
    $region50: #{tpu_custom_call.1} parent=1 // pred_check
      _
    $region51: #{tpu_custom_call.1} parent=1 // pred_check_branch
      %49 = sbr.rel (0) target = $region53
    $region52: #{tpu_custom_call.1} parent=1 // pred_region
      _
    $region53: #{tpu_custom_call.1} parent=1 // pred_fallthru
      _
    // Predicated region
    $region54: #{tpu_custom_call.1} parent=1 // pred_check
      _
    $region55: #{tpu_custom_call.1} parent=1 // pred_check_branch
      %51 = sbr.rel (0) target = $region57
    $region56: #{tpu_custom_call.1} parent=1 // pred_region
      _
    $region57: #{tpu_custom_call.1} parent=1 // pred_fallthru
      _
    // Predicated region
    $region58: #{tpu_custom_call.1} parent=1 // pred_check
      _
    $region59: #{tpu_custom_call.1} parent=1 // pred_check_branch
      %53 = sbr.rel (0) target = $region61
    $region60: #{tpu_custom_call.1} parent=1 // pred_region
      _
    $region61: #{tpu_custom_call.1} parent=1 // pred_fallthru
      _
    // Predicated region
    $region62: #{tpu_custom_call.1} parent=1 // pred_check
      _
    $region63: #{tpu_custom_call.1} parent=1 // pred_check_branch
      %55 = sbr.rel (0) target = $region65
    $region64: #{tpu_custom_call.1} parent=1 // pred_region
      _
    $region65: #{tpu_custom_call.1} parent=1 // pred_fallthru
      _
    // Predicated region
    $region66: #{tpu_custom_call.1} parent=1 // pred_check
      _
    $region67: #{tpu_custom_call.1} parent=1 // pred_check_branch
      %57 = sbr.rel (0) target = $region69
    $region68: #{tpu_custom_call.1} parent=1 // pred_region
      _
    $region69: #{tpu_custom_call.1} parent=1 // pred_fallthru
      _
    // Predicated region
    $region70: #{tpu_custom_call.1} parent=1 // pred_check
      _
    $region71: #{tpu_custom_call.1} parent=1 // pred_check_branch
      %59 = sbr.rel (0) target = $region73
    $region72: #{tpu_custom_call.1} parent=1 // pred_region
      _
    $region73: #{tpu_custom_call.1} parent=1 // pred_fallthru
      _
    %v61 = vlaneseq
    %v62 = vand.u32 %v61, 127
    %v63 = vld [vmem:[%s0] sm:$0xff]
    %v64 = vld [vmem:[%s0 + $0x8] sm:$0xff]
    %65 = vset.pattern.permute.xlu0 0
    %66 = vperm.xlu0 %65, %v63
    %v67 = vpop.permute.xlu0 %66
    %68 = vset.pattern.permute.xlu0 0
    %69 = vperm.xlu0 %68, %v64
    %v70 = vpop.permute.xlu0 %69
    %vm71 = vcmp.eq.s32.totalorder %v62, %v67
    %vm72 = vcmp.eq.s32.totalorder %v62, %v70
    %v73 = vsel %vm71, 1, 0
    %v74 = vsel %vm72, 1, 0
    %v75 = vcvt.s32.f32 %v73
    %v76 = vcvt.s32.f32 %v74
    %v77 = vld [vmem:[%s2] sm:$0xff]
    %v78 = vld [vmem:[%s2 + $0x8] sm:$0xff]
    %v79 = vld [vmem:[%s2 + $0x10] sm:$0xff]
    %v80 = vld [vmem:[%s2 + $0x18] sm:$0xff]
    %v81 = vld [vmem:[%s2 + $0x20] sm:$0xff]
    %v82 = vld [vmem:[%s2 + $0x28] sm:$0xff]
    %v83 = vld [vmem:[%s2 + $0x30] sm:$0xff]
    %v84 = vld [vmem:[%s2 + $0x38] sm:$0xff]
    %v85 = vld [vmem:[%s2 + $0x40] sm:$0xff]
    %v86 = vld [vmem:[%s2 + $0x48] sm:$0xff]
    %v87 = vld [vmem:[%s2 + $0x50] sm:$0xff]
    %v88 = vld [vmem:[%s2 + $0x58] sm:$0xff]
    %v89 = vld [vmem:[%s2 + $0x60] sm:$0xff]
    %v90 = vld [vmem:[%s2 + $0x68] sm:$0xff]
    %v91 = vld [vmem:[%s2 + $0x70] sm:$0xff]
    %v92 = vld [vmem:[%s2 + $0x78] sm:$0xff]
    %93 = vmatprep.subr.mxu0 0.0
    %94 = vmatpush1.msra.mxu0 %v92
    %95 = vmatprep.subr.mxu0 0.0
    %96 = vmatpush1.msra.mxu0 %v91
    %97 = vmatprep.subr.mxu0 0.0
    %98 = vmatpush1.msra.mxu0 %v90
    %99 = vmatprep.subr.mxu0 0.0
    %100 = vmatpush1.msra.mxu0 %v89
    %101 = vmatprep.subr.mxu0 0.0
    %102 = vmatpush1.msra.mxu0 %v88
    %103 = vmatprep.subr.mxu0 0.0
    %104 = vmatpush1.msra.mxu0 %v87
    %105 = vmatprep.subr.mxu0 0.0
    %106 = vmatpush1.msra.mxu0 %v86
    %107 = vmatprep.subr.mxu0 0.0
    %108 = vmatpush1.msra.mxu0 %v85
    %109 = vmatprep.subr.mxu0 0.0
    %110 = vmatpush1.msra.mxu0 %v84
    %111 = vmatprep.subr.mxu0 0.0
    %112 = vmatpush1.msra.mxu0 %v83
    %113 = vmatprep.subr.mxu0 0.0
    %114 = vmatpush1.msra.mxu0 %v82
    %115 = vmatprep.subr.mxu0 0.0
    %116 = vmatpush1.msra.mxu0 %v81
    %117 = vmatprep.subr.mxu0 0.0
    %118 = vmatpush1.msra.mxu0 %v80
    %119 = vmatprep.subr.mxu0 0.0
    %120 = vmatpush1.msra.mxu0 %v79
    %121 = vmatprep.subr.mxu0 0.0
    %122 = vmatpush1.msra.mxu0 %v78
    %123 = vmatprep.subr.mxu0 0.0
    %124 = vmatpush1.msra.mxu0 %v77
    %125 = vmatprep.subr.mxu0 0.0
    %126 = vmatpush2.msra.mxu0 0.0
    %127 = vmatprep.subr.mxu0 0.0
    %128 = vmatpush2.msra.mxu0 0.0
    %129 = vmatprep.subr.mxu0 0.0
    %130 = vmatpush2.msra.mxu0 0.0
    %131 = vmatprep.subr.mxu0 0.0
    %132 = vmatpush2.msra.mxu0 0.0
    %133 = vmatprep.subr.mxu0 0.0
    %134 = vmatpush2.msra.mxu0 0.0
    %135 = vmatprep.subr.mxu0 0.0
    %136 = vmatpush2.msra.mxu0 0.0
    %137 = vmatprep.subr.mxu0 0.0
    %138 = vmatpush2.msra.mxu0 0.0
    %139 = vmatprep.subr.mxu0 0.0
    %140 = vmatpush2.msra.mxu0 0.0
    %141 = vmatprep.subr.mxu0 0.0
    %142 = vmatpush2.msra.mxu0 0.0
    %143 = vmatprep.subr.mxu0 0.0
    %144 = vmatpush2.msra.mxu0 0.0
    %145 = vmatprep.subr.mxu0 0.0
    %146 = vmatpush2.msra.mxu0 0.0
    %147 = vmatprep.subr.mxu0 0.0
    %148 = vmatpush2.msra.mxu0 0.0
    %149 = vmatprep.subr.mxu0 0.0
    %150 = vmatpush2.msra.mxu0 0.0
    %151 = vmatprep.subr.mxu0 0.0
    %152 = vmatpush2.msra.mxu0 0.0
    %153 = vmatprep.subr.mxu0 0.0
    %154 = vmatpush2.msra.mxu0 0.0
    %155 = vmatprep.subr.mxu0 0.0
    %156 = vmatpush2.msra.mxu0 0.0
    %157 = vmatprep.mubr.f32.mxu0 0.0
    %158 = vmatmul.mubr.f32.gmra.mxu0 %v75
    %v159 = vpop.f32.mrf.mxu0
    %v160 = vadd.f32 0.0, %v159
    %v161 = vpop.f32.mrf.mxu0
    %162 = vmatprep.mubr.f32.mxu0 0.0
    %163 = vmatmul.mubr.f32.gmra.mxu0 %v76
    %v164 = vpop.f32.mrf.mxu0
    %v165 = vadd.f32 0.0, %v164
    %v166 = vpop.f32.mrf.mxu0
    %167 = vdwg.mxu0
    %v168 = vld [vmem:[%s3] sm:$0xff]
    %v169 = vadd.f32 %v160, %v168
    %v170 = vadd.f32 %v165, %v168
    %v171 = vld [vmem:[%s4] sm:$0x1]
    %v172 = vld [vmem:[%s5] sm:$0x1]
    %vm173 = vcmask 261120
    %v174 = vsel %vm173, %v169, 0.0
    %175 = vadd.xlane.f32.xlu0 %v174
    %v176 = vpop.xlane.xlu0 %175
    %v177 = vsel %vm173, %v170, 0.0
    %178 = vadd.xlane.f32.xlu0 %v177
    %v179 = vpop.xlane.xlu0 %178
    %v180 = vrcp.pop 32.0
    %v181 = vmul.f32 %v176, %v180
    %v182 = vmul.f32 %v179, %v180
    %v183 = vsub.f32 %v169, %v181
    %v184 = vsub.f32 %v170, %v182
    %v185 = vmul.f32 %v183, %v183
    %v186 = vmul.f32 %v184, %v184
    %v187 = vsel %vm173, %v185, 0.0
    %188 = vadd.xlane.f32.xlu0 %v187
    %v189 = vpop.xlane.xlu0 %188
    %v190 = vsel %vm173, %v186, 0.0
    %191 = vadd.xlane.f32.xlu0 %v190
    %v192 = vpop.xlane.xlu0 %191
    %v193 = vmul.f32 %v189, %v180
    %v194 = vmul.f32 %v192, %v180
    %v195 = vadd.f32 %v193, 1e-12
    %v196 = vadd.f32 %v194, 1e-12
    %v197 = vrsqrt.pop %v195
    %v198 = vrsqrt.pop %v196
    %v199 = vmul.f32 %v183, %v197
    %v200 = vmul.f32 %v184, %v198
    %v202 = vlaneseq
    %v203 = vshrl.u32 %v202, 7
    %v204 = vsub.s32 0, %v203
    %v205 = vrot.slane %v171, %v204
    %v207 = vmul.f32 %v199, %v205
    %v208 = vmul.f32 %v200, %v205
    %v210 = vlaneseq
    %v211 = vshrl.u32 %v210, 7
    %v212 = vsub.s32 0, %v211
    %v213 = vrot.slane %v172, %v212
    %v215 = vadd.f32 %v207, %v213
    %v216 = vadd.f32 %v208, %v213
    %v217 = vld [vmem:[%s1] sm:$0x3]
    %v218 = vsub.f32 1.0, %v217
    %v219 = vmul.f32 %v218, -1e+30
    %v222 = vunpack.c.l.s4 1966171168
    %v223 = vunpack.c.0.s8 %v222
    %v224 = vlaneseq
    %v225 = vshrl.u32 %v224, 7
    %v226 = vsub.s32 %v223, %v225
    %v227 = vrot.slane %v219, %v226
    %v228 = vcombine.high %v227, %v227
    %v230 = vunpack.c.l.s4 1966171168
    %v231 = vunpack.c.0.s8 %v230
    %v232 = vlaneseq
    %v233 = vshrl.u32 %v232, 7
    %v234 = vsub.s32 %v231, %v233
    %v235 = vrot.slane %v227, %v234
    %v237 = vunpack.c.l.s4 1966171168
    %v238 = vunpack.c.0.s8 %v237
    %v239 = vlaneseq
    %v240 = vshrl.u32 %v239, 7
    %v241 = vsub.s32 %v238, %v240
    %v242 = vrot.slane %v228, %v241
    %v243 = vlaneseq
    %v244 = vshrl.u32 %v243, 7
    %v245 = vsub.s32 0, %v244
    %v246 = vrot.slane %v235, %v245
    %v247 = vlaneseq
    %v248 = vshrl.u32 %v247, 7
    %v249 = vsub.s32 0, %v248
    %v250 = vrot.slane %v242, %v249
    %v253 = vpack.c.bf16 %v216, %v215
    %v254 = vld [vmem:[%s6] sm:$0xf]
    %v255 = vld [vmem:[%s6 + $0x4] sm:$0xf]
    %v256 = vld [vmem:[%s6 + $0x8] sm:$0xf]
    %v257 = vld [vmem:[%s6 + $0xc] sm:$0xf]
    %v258 = vld [vmem:[%s7] sm:$0x1]
    %v260 = vlaneseq
    %v261 = vshrl.u32 %v260, 7
    %v262 = vsub.s32 0, %v261
    %v263 = vrot.slane %v258, %v262
    %v269 = vunpack.c.l.b16 %v254
    %v270 = vunpack.c.l.b16 %v255
    %v271 = vunpack.c.l.b16 %v256
    %v272 = vunpack.c.l.b16 %v257
    %v273 = vpack.c.b16 %v270, %v269
    %v274 = vpack.c.b16 %v272, %v271
    %v278 = vsel %vm173, %v253, 0
    %280 = vmatprep.subr.bf16.mxu0 0
    %281 = vmatpush1.bf16.msra.mxu0 0
    %282 = vmatprep.subr.bf16.mxu0 0
    %283 = vmatpush1.bf16.msra.mxu0 0
    %284 = vmatprep.subr.bf16.mxu0 0
    %285 = vmatpush1.bf16.msra.mxu0 0
    %286 = vmatprep.subr.bf16.mxu0 0
    %287 = vmatpush1.bf16.msra.mxu0 0
    %288 = vmatprep.subr.bf16.mxu0 0
    %289 = vmatpush1.bf16.msra.mxu0 0
    %290 = vmatprep.subr.bf16.mxu0 0
    %291 = vmatpush1.bf16.msra.mxu0 0
    %292 = vmatprep.subr.bf16.mxu0 0
    %293 = vmatpush1.bf16.msra.mxu0 %v274
    %294 = vmatprep.subr.bf16.mxu0 0
    %295 = vmatpush1.bf16.msra.mxu0 %v273
    %296 = vmatprep.subr.bf16.mxu0 0
    %297 = vmatpush2.bf16.msra.mxu0 0
    %298 = vmatprep.subr.bf16.mxu0 0
    %299 = vmatpush2.bf16.msra.mxu0 0
    %300 = vmatprep.subr.bf16.mxu0 0
    %301 = vmatpush2.bf16.msra.mxu0 0
    %302 = vmatprep.subr.bf16.mxu0 0
    %303 = vmatpush2.bf16.msra.mxu0 0
    %304 = vmatprep.subr.bf16.mxu0 0
    %305 = vmatpush2.bf16.msra.mxu0 0
    %306 = vmatprep.subr.bf16.mxu0 0
    %307 = vmatpush2.bf16.msra.mxu0 0
    %308 = vmatprep.subr.bf16.mxu0 0
    %309 = vmatpush2.bf16.msra.mxu0 0
    %310 = vmatprep.subr.bf16.mxu0 0
    %311 = vmatpush2.bf16.msra.mxu0 0
    %312 = vmatprep.mubr.bf16.mxu0 0
    %313 = vmatmul.mubr.bf16.gmra.mxu0 %v278
    %v314 = vpop.f32.mrf.mxu0
    %v315 = vadd.f32 %v263, %v314
    %v316 = vpop.f32.mrf.mxu0
    %v317 = vpop.f32.mrf.mxu0
    %v318 = vadd.f32 %v263, %v317
    %v319 = vpop.f32.mrf.mxu0
    %320 = vdwg.mxu0
    %323 = vrot.lane.b32.xlu0 %v315, 120
    %v324 = vpop.permute.xlu0 %323
    %325 = vrot.lane.b32.xlu0 %v318, 120
    %v326 = vpop.permute.xlu0 %325
    %329 = vrot.lane.b32.xlu0 %v315, 112
    %v330 = vpop.permute.xlu0 %329
    %331 = vrot.lane.b32.xlu0 %v318, 112
    %v332 = vpop.permute.xlu0 %331
    %335 = vrot.lane.b32.xlu0 %v315, 104
    %v336 = vpop.permute.xlu0 %335
    %337 = vrot.lane.b32.xlu0 %v318, 104
    %v338 = vpop.permute.xlu0 %337
    %v341 = vpack.c.bf16 %v315, %v315
    %v342 = vpack.c.bf16 %v318, %v318
    %v343 = vpack.c.bf16 %v324, %v324
    %v344 = vpack.c.bf16 %v326, %v326
    %v345 = vpack.c.bf16 %v330, %v330
    %v346 = vpack.c.bf16 %v332, %v332
    %v347 = vpack.c.bf16 %v336, %v336
    %v348 = vpack.c.bf16 %v338, %v338
    %350 = vrot.lane.b32.xlu0 %v341, 96
    %v351 = vpop.permute.xlu0 %350
    %vm352 = vcmask 64512
    %v354 = vsel %vm352, %v341, 0
    %v357 = vsel %vm352, %v351, 0
    %359 = vmatprep.subr.bf16.mxu0 0
    %360 = vmatpush1.bf16.xpose.msra.mxu0 0
    %361 = vmatprep.subr.bf16.mxu0 0
    %362 = vmatpush1.bf16.xpose.msra.mxu0 0
    %363 = vmatprep.subr.bf16.mxu0 0
    %364 = vmatpush1.bf16.xpose.msra.mxu0 0
    %365 = vmatprep.subr.bf16.mxu0 0
    %366 = vmatpush1.bf16.xpose.msra.mxu0 0
    %367 = vmatprep.subr.bf16.mxu0 0
    %368 = vmatpush1.bf16.xpose.msra.mxu0 0
    %369 = vmatprep.subr.bf16.mxu0 0
    %370 = vmatpush1.bf16.xpose.msra.mxu0 0
    %371 = vmatprep.subr.bf16.mxu0 0
    %372 = vmatpush1.bf16.xpose.msra.mxu0 0
    %373 = vmatprep.subr.bf16.mxu0 0
    %374 = vmatpush1.bf16.xpose.msra.mxu0 %v357
    %375 = vmatprep.subr.bf16.mxu0 0
    %376 = vmatpush2.bf16.xpose.msra.mxu0 0
    %377 = vmatprep.subr.bf16.mxu0 0
    %378 = vmatpush2.bf16.xpose.msra.mxu0 0
    %379 = vmatprep.subr.bf16.mxu0 0
    %380 = vmatpush2.bf16.xpose.msra.mxu0 0
    %381 = vmatprep.subr.bf16.mxu0 0
    %382 = vmatpush2.bf16.xpose.msra.mxu0 0
    %383 = vmatprep.subr.bf16.mxu0 0
    %384 = vmatpush2.bf16.xpose.msra.mxu0 0
    %385 = vmatprep.subr.bf16.mxu0 0
    %386 = vmatpush2.bf16.xpose.msra.mxu0 0
    %387 = vmatprep.subr.bf16.mxu0 0
    %388 = vmatpush2.bf16.xpose.msra.mxu0 0
    %389 = vmatprep.subr.bf16.mxu0 0
    %390 = vmatpush2.bf16.xpose.msra.mxu0 0
    %391 = vmatprep.mubr.bf16.mxu0 0
    %392 = vmatmul.mubr.bf16.gmra.mxu0 %v354
    %v393 = vpop.f32.mrf.mxu0
    %v394 = vadd.f32 %v246, %v393
    %v395 = vpop.f32.mrf.mxu0
    %v396 = vpop.f32.mrf.mxu0
    %v397 = vpop.f32.mrf.mxu0
    %398 = vdwg.mxu0
    %400 = vrot.lane.b32.xlu0 %v342, 96
    %v401 = vpop.permute.xlu0 %400
    %v403 = vsel %vm352, %v342, 0
    %v406 = vsel %vm352, %v401, 0
    %408 = vmatprep.subr.bf16.mxu0 0
    %409 = vmatpush1.bf16.xpose.msra.mxu0 0
    %410 = vmatprep.subr.bf16.mxu0 0
    %411 = vmatpush1.bf16.xpose.msra.mxu0 0
    %412 = vmatprep.subr.bf16.mxu0 0
    %413 = vmatpush1.bf16.xpose.msra.mxu0 0
    %414 = vmatprep.subr.bf16.mxu0 0
    %415 = vmatpush1.bf16.xpose.msra.mxu0 0
    %416 = vmatprep.subr.bf16.mxu0 0
    %417 = vmatpush1.bf16.xpose.msra.mxu0 0
    %418 = vmatprep.subr.bf16.mxu0 0
    %419 = vmatpush1.bf16.xpose.msra.mxu0 0
    %420 = vmatprep.subr.bf16.mxu0 0
    %421 = vmatpush1.bf16.xpose.msra.mxu0 0
    %422 = vmatprep.subr.bf16.mxu0 0
    %423 = vmatpush1.bf16.xpose.msra.mxu0 %v406
    %424 = vmatprep.subr.bf16.mxu0 0
    %425 = vmatpush2.bf16.xpose.msra.mxu0 0
    %426 = vmatprep.subr.bf16.mxu0 0
    %427 = vmatpush2.bf16.xpose.msra.mxu0 0
    %428 = vmatprep.subr.bf16.mxu0 0
    %429 = vmatpush2.bf16.xpose.msra.mxu0 0
    %430 = vmatprep.subr.bf16.mxu0 0
    %431 = vmatpush2.bf16.xpose.msra.mxu0 0
    %432 = vmatprep.subr.bf16.mxu0 0
    %433 = vmatpush2.bf16.xpose.msra.mxu0 0
    %434 = vmatprep.subr.bf16.mxu0 0
    %435 = vmatpush2.bf16.xpose.msra.mxu0 0
    %436 = vmatprep.subr.bf16.mxu0 0
    %437 = vmatpush2.bf16.xpose.msra.mxu0 0
    %438 = vmatprep.subr.bf16.mxu0 0
    %439 = vmatpush2.bf16.xpose.msra.mxu0 0
    %440 = vmatprep.mubr.bf16.mxu0 0
    %441 = vmatmul.mubr.bf16.gmra.mxu0 %v403
    %v442 = vpop.f32.mrf.mxu0
    %v443 = vadd.f32 %v250, %v442
    %v444 = vpop.f32.mrf.mxu0
    %v445 = vpop.f32.mrf.mxu0
    %v446 = vpop.f32.mrf.mxu0
    %447 = vdwg.mxu0
    %449 = vrot.lane.b32.xlu0 %v343, 96
    %v450 = vpop.permute.xlu0 %449
    %v452 = vsel %vm352, %v343, 0
    %v455 = vsel %vm352, %v450, 0
    %457 = vmatprep.subr.bf16.mxu0 0
    %458 = vmatpush1.bf16.xpose.msra.mxu0 0
    %459 = vmatprep.subr.bf16.mxu0 0
    %460 = vmatpush1.bf16.xpose.msra.mxu0 0
    %461 = vmatprep.subr.bf16.mxu0 0
    %462 = vmatpush1.bf16.xpose.msra.mxu0 0
    %463 = vmatprep.subr.bf16.mxu0 0
    %464 = vmatpush1.bf16.xpose.msra.mxu0 0
    %465 = vmatprep.subr.bf16.mxu0 0
    %466 = vmatpush1.bf16.xpose.msra.mxu0 0
    %467 = vmatprep.subr.bf16.mxu0 0
    %468 = vmatpush1.bf16.xpose.msra.mxu0 0
    %469 = vmatprep.subr.bf16.mxu0 0
    %470 = vmatpush1.bf16.xpose.msra.mxu0 0
    %471 = vmatprep.subr.bf16.mxu0 0
    %472 = vmatpush1.bf16.xpose.msra.mxu0 %v455
    %473 = vmatprep.subr.bf16.mxu0 0
    %474 = vmatpush2.bf16.xpose.msra.mxu0 0
    %475 = vmatprep.subr.bf16.mxu0 0
    %476 = vmatpush2.bf16.xpose.msra.mxu0 0
    %477 = vmatprep.subr.bf16.mxu0 0
    %478 = vmatpush2.bf16.xpose.msra.mxu0 0
    %479 = vmatprep.subr.bf16.mxu0 0
    %480 = vmatpush2.bf16.xpose.msra.mxu0 0
    %481 = vmatprep.subr.bf16.mxu0 0
    %482 = vmatpush2.bf16.xpose.msra.mxu0 0
    %483 = vmatprep.subr.bf16.mxu0 0
    %484 = vmatpush2.bf16.xpose.msra.mxu0 0
    %485 = vmatprep.subr.bf16.mxu0 0
    %486 = vmatpush2.bf16.xpose.msra.mxu0 0
    %487 = vmatprep.subr.bf16.mxu0 0
    %488 = vmatpush2.bf16.xpose.msra.mxu0 0
    %489 = vmatprep.mubr.bf16.mxu0 0
    %490 = vmatmul.mubr.bf16.gmra.mxu0 %v452
    %v491 = vpop.f32.mrf.mxu0
    %v492 = vadd.f32 %v246, %v491
    %v493 = vpop.f32.mrf.mxu0
    %v494 = vpop.f32.mrf.mxu0
    %v495 = vpop.f32.mrf.mxu0
    %496 = vdwg.mxu0
    %498 = vrot.lane.b32.xlu0 %v344, 96
    %v499 = vpop.permute.xlu0 %498
    %v501 = vsel %vm352, %v344, 0
    %v504 = vsel %vm352, %v499, 0
    %506 = vmatprep.subr.bf16.mxu0 0
    %507 = vmatpush1.bf16.xpose.msra.mxu0 0
    %508 = vmatprep.subr.bf16.mxu0 0
    %509 = vmatpush1.bf16.xpose.msra.mxu0 0
    %510 = vmatprep.subr.bf16.mxu0 0
    %511 = vmatpush1.bf16.xpose.msra.mxu0 0
    %512 = vmatprep.subr.bf16.mxu0 0
    %513 = vmatpush1.bf16.xpose.msra.mxu0 0
    %514 = vmatprep.subr.bf16.mxu0 0
    %515 = vmatpush1.bf16.xpose.msra.mxu0 0
    %516 = vmatprep.subr.bf16.mxu0 0
    %517 = vmatpush1.bf16.xpose.msra.mxu0 0
    %518 = vmatprep.subr.bf16.mxu0 0
    %519 = vmatpush1.bf16.xpose.msra.mxu0 0
    %520 = vmatprep.subr.bf16.mxu0 0
    %521 = vmatpush1.bf16.xpose.msra.mxu0 %v504
    %522 = vmatprep.subr.bf16.mxu0 0
    %523 = vmatpush2.bf16.xpose.msra.mxu0 0
    %524 = vmatprep.subr.bf16.mxu0 0
    %525 = vmatpush2.bf16.xpose.msra.mxu0 0
    %526 = vmatprep.subr.bf16.mxu0 0
    %527 = vmatpush2.bf16.xpose.msra.mxu0 0
    %528 = vmatprep.subr.bf16.mxu0 0
    %529 = vmatpush2.bf16.xpose.msra.mxu0 0
    %530 = vmatprep.subr.bf16.mxu0 0
    %531 = vmatpush2.bf16.xpose.msra.mxu0 0
    %532 = vmatprep.subr.bf16.mxu0 0
    %533 = vmatpush2.bf16.xpose.msra.mxu0 0
    %534 = vmatprep.subr.bf16.mxu0 0
    %535 = vmatpush2.bf16.xpose.msra.mxu0 0
    %536 = vmatprep.subr.bf16.mxu0 0
    %537 = vmatpush2.bf16.xpose.msra.mxu0 0
    %538 = vmatprep.mubr.bf16.mxu0 0
    %539 = vmatmul.mubr.bf16.gmra.mxu0 %v501
    %v540 = vpop.f32.mrf.mxu0
    %v541 = vadd.f32 %v250, %v540
    %v542 = vpop.f32.mrf.mxu0
    %v543 = vpop.f32.mrf.mxu0
    %v544 = vpop.f32.mrf.mxu0
    %545 = vdwg.mxu0
    %547 = vrot.lane.b32.xlu0 %v345, 96
    %v548 = vpop.permute.xlu0 %547
    %v550 = vsel %vm352, %v345, 0
    %v553 = vsel %vm352, %v548, 0
    %555 = vmatprep.subr.bf16.mxu0 0
    %556 = vmatpush1.bf16.xpose.msra.mxu0 0
    %557 = vmatprep.subr.bf16.mxu0 0
    %558 = vmatpush1.bf16.xpose.msra.mxu0 0
    %559 = vmatprep.subr.bf16.mxu0 0
    %560 = vmatpush1.bf16.xpose.msra.mxu0 0
    %561 = vmatprep.subr.bf16.mxu0 0
    %562 = vmatpush1.bf16.xpose.msra.mxu0 0
    %563 = vmatprep.subr.bf16.mxu0 0
    %564 = vmatpush1.bf16.xpose.msra.mxu0 0
    %565 = vmatprep.subr.bf16.mxu0 0
    %566 = vmatpush1.bf16.xpose.msra.mxu0 0
    %567 = vmatprep.subr.bf16.mxu0 0
    %568 = vmatpush1.bf16.xpose.msra.mxu0 0
    %569 = vmatprep.subr.bf16.mxu0 0
    %570 = vmatpush1.bf16.xpose.msra.mxu0 %v553
    %571 = vmatprep.subr.bf16.mxu0 0
    %572 = vmatpush2.bf16.xpose.msra.mxu0 0
    %573 = vmatprep.subr.bf16.mxu0 0
    %574 = vmatpush2.bf16.xpose.msra.mxu0 0
    %575 = vmatprep.subr.bf16.mxu0 0
    %576 = vmatpush2.bf16.xpose.msra.mxu0 0
    %577 = vmatprep.subr.bf16.mxu0 0
    %578 = vmatpush2.bf16.xpose.msra.mxu0 0
    %579 = vmatprep.subr.bf16.mxu0 0
    %580 = vmatpush2.bf16.xpose.msra.mxu0 0
    %581 = vmatprep.subr.bf16.mxu0 0
    %582 = vmatpush2.bf16.xpose.msra.mxu0 0
    %583 = vmatprep.subr.bf16.mxu0 0
    %584 = vmatpush2.bf16.xpose.msra.mxu0 0
    %585 = vmatprep.subr.bf16.mxu0 0
    %586 = vmatpush2.bf16.xpose.msra.mxu0 0
    %587 = vmatprep.mubr.bf16.mxu0 0
    %588 = vmatmul.mubr.bf16.gmra.mxu0 %v550
    %v589 = vpop.f32.mrf.mxu0
    %v590 = vadd.f32 %v246, %v589
    %v591 = vpop.f32.mrf.mxu0
    %v592 = vpop.f32.mrf.mxu0
    %v593 = vpop.f32.mrf.mxu0
    %594 = vdwg.mxu0
    %596 = vrot.lane.b32.xlu0 %v346, 96
    %v597 = vpop.permute.xlu0 %596
    %v599 = vsel %vm352, %v346, 0
    %v602 = vsel %vm352, %v597, 0
    %604 = vmatprep.subr.bf16.mxu0 0
    %605 = vmatpush1.bf16.xpose.msra.mxu0 0
    %606 = vmatprep.subr.bf16.mxu0 0
    %607 = vmatpush1.bf16.xpose.msra.mxu0 0
    %608 = vmatprep.subr.bf16.mxu0 0
    %609 = vmatpush1.bf16.xpose.msra.mxu0 0
    %610 = vmatprep.subr.bf16.mxu0 0
    %611 = vmatpush1.bf16.xpose.msra.mxu0 0
    %612 = vmatprep.subr.bf16.mxu0 0
    %613 = vmatpush1.bf16.xpose.msra.mxu0 0
    %614 = vmatprep.subr.bf16.mxu0 0
    %615 = vmatpush1.bf16.xpose.msra.mxu0 0
    %616 = vmatprep.subr.bf16.mxu0 0
    %617 = vmatpush1.bf16.xpose.msra.mxu0 0
    %618 = vmatprep.subr.bf16.mxu0 0
    %619 = vmatpush1.bf16.xpose.msra.mxu0 %v602
    %620 = vmatprep.subr.bf16.mxu0 0
    %621 = vmatpush2.bf16.xpose.msra.mxu0 0
    %622 = vmatprep.subr.bf16.mxu0 0
    %623 = vmatpush2.bf16.xpose.msra.mxu0 0
    %624 = vmatprep.subr.bf16.mxu0 0
    %625 = vmatpush2.bf16.xpose.msra.mxu0 0
    %626 = vmatprep.subr.bf16.mxu0 0
    %627 = vmatpush2.bf16.xpose.msra.mxu0 0
    %628 = vmatprep.subr.bf16.mxu0 0
    %629 = vmatpush2.bf16.xpose.msra.mxu0 0
    %630 = vmatprep.subr.bf16.mxu0 0
    %631 = vmatpush2.bf16.xpose.msra.mxu0 0
    %632 = vmatprep.subr.bf16.mxu0 0
    %633 = vmatpush2.bf16.xpose.msra.mxu0 0
    %634 = vmatprep.subr.bf16.mxu0 0
    %635 = vmatpush2.bf16.xpose.msra.mxu0 0
    %636 = vmatprep.mubr.bf16.mxu0 0
    %637 = vmatmul.mubr.bf16.gmra.mxu0 %v599
    %v638 = vpop.f32.mrf.mxu0
    %v639 = vadd.f32 %v250, %v638
    %v640 = vpop.f32.mrf.mxu0
    %v641 = vpop.f32.mrf.mxu0
    %v642 = vpop.f32.mrf.mxu0
    %643 = vdwg.mxu0
    %645 = vrot.lane.b32.xlu0 %v347, 96
    %v646 = vpop.permute.xlu0 %645
    %v648 = vsel %vm352, %v347, 0
    %v651 = vsel %vm352, %v646, 0
    %653 = vmatprep.subr.bf16.mxu0 0
    %654 = vmatpush1.bf16.xpose.msra.mxu0 0
    %655 = vmatprep.subr.bf16.mxu0 0
    %656 = vmatpush1.bf16.xpose.msra.mxu0 0
    %657 = vmatprep.subr.bf16.mxu0 0
    %658 = vmatpush1.bf16.xpose.msra.mxu0 0
    %659 = vmatprep.subr.bf16.mxu0 0
    %660 = vmatpush1.bf16.xpose.msra.mxu0 0
    %661 = vmatprep.subr.bf16.mxu0 0
    %662 = vmatpush1.bf16.xpose.msra.mxu0 0
    %663 = vmatprep.subr.bf16.mxu0 0
    %664 = vmatpush1.bf16.xpose.msra.mxu0 0
    %665 = vmatprep.subr.bf16.mxu0 0
    %666 = vmatpush1.bf16.xpose.msra.mxu0 0
    %667 = vmatprep.subr.bf16.mxu0 0
    %668 = vmatpush1.bf16.xpose.msra.mxu0 %v651
    %669 = vmatprep.subr.bf16.mxu0 0
    %670 = vmatpush2.bf16.xpose.msra.mxu0 0
    %671 = vmatprep.subr.bf16.mxu0 0
    %672 = vmatpush2.bf16.xpose.msra.mxu0 0
    %673 = vmatprep.subr.bf16.mxu0 0
    %674 = vmatpush2.bf16.xpose.msra.mxu0 0
    %675 = vmatprep.subr.bf16.mxu0 0
    %676 = vmatpush2.bf16.xpose.msra.mxu0 0
    %677 = vmatprep.subr.bf16.mxu0 0
    %678 = vmatpush2.bf16.xpose.msra.mxu0 0
    %679 = vmatprep.subr.bf16.mxu0 0
    %680 = vmatpush2.bf16.xpose.msra.mxu0 0
    %681 = vmatprep.subr.bf16.mxu0 0
    %682 = vmatpush2.bf16.xpose.msra.mxu0 0
    %683 = vmatprep.subr.bf16.mxu0 0
    %684 = vmatpush2.bf16.xpose.msra.mxu0 0
    %685 = vmatprep.mubr.bf16.mxu0 0
    %686 = vmatmul.mubr.bf16.gmra.mxu0 %v648
    %v687 = vpop.f32.mrf.mxu0
    %v688 = vadd.f32 %v246, %v687
    %v689 = vpop.f32.mrf.mxu0
    %v690 = vpop.f32.mrf.mxu0
    %v691 = vpop.f32.mrf.mxu0
    %692 = vdwg.mxu0
    %694 = vrot.lane.b32.xlu0 %v348, 96
    %v695 = vpop.permute.xlu0 %694
    %v697 = vsel %vm352, %v348, 0
    %v700 = vsel %vm352, %v695, 0
    %702 = vmatprep.subr.bf16.mxu0 0
    %703 = vmatpush1.bf16.xpose.msra.mxu0 0
    %704 = vmatprep.subr.bf16.mxu0 0
    %705 = vmatpush1.bf16.xpose.msra.mxu0 0
    %706 = vmatprep.subr.bf16.mxu0 0
    %707 = vmatpush1.bf16.xpose.msra.mxu0 0
    %708 = vmatprep.subr.bf16.mxu0 0
    %709 = vmatpush1.bf16.xpose.msra.mxu0 0
    %710 = vmatprep.subr.bf16.mxu0 0
    %711 = vmatpush1.bf16.xpose.msra.mxu0 0
    %712 = vmatprep.subr.bf16.mxu0 0
    %713 = vmatpush1.bf16.xpose.msra.mxu0 0
    %714 = vmatprep.subr.bf16.mxu0 0
    %715 = vmatpush1.bf16.xpose.msra.mxu0 0
    %716 = vmatprep.subr.bf16.mxu0 0
    %717 = vmatpush1.bf16.xpose.msra.mxu0 %v700
    %718 = vmatprep.subr.bf16.mxu0 0
    %719 = vmatpush2.bf16.xpose.msra.mxu0 0
    %720 = vmatprep.subr.bf16.mxu0 0
    %721 = vmatpush2.bf16.xpose.msra.mxu0 0
    %722 = vmatprep.subr.bf16.mxu0 0
    %723 = vmatpush2.bf16.xpose.msra.mxu0 0
    %724 = vmatprep.subr.bf16.mxu0 0
    %725 = vmatpush2.bf16.xpose.msra.mxu0 0
    %726 = vmatprep.subr.bf16.mxu0 0
    %727 = vmatpush2.bf16.xpose.msra.mxu0 0
    %728 = vmatprep.subr.bf16.mxu0 0
    %729 = vmatpush2.bf16.xpose.msra.mxu0 0
    %730 = vmatprep.subr.bf16.mxu0 0
    %731 = vmatpush2.bf16.xpose.msra.mxu0 0
    %732 = vmatprep.subr.bf16.mxu0 0
    %733 = vmatpush2.bf16.xpose.msra.mxu0 0
    %734 = vmatprep.mubr.bf16.mxu0 0
    %735 = vmatmul.mubr.bf16.gmra.mxu0 %v697
    %v736 = vpop.f32.mrf.mxu0
    %v737 = vadd.f32 %v250, %v736
    %v738 = vpop.f32.mrf.mxu0
    %v739 = vpop.f32.mrf.mxu0
    %v740 = vpop.f32.mrf.mxu0
    %741 = vdwg.mxu0
    %v742 = vsel %vm352, %v394, -inf
    %743 = vmax.xlane.f32.xlu0 %v742
    %v744 = vpop.xlane.xlu0 %743
    %v745 = vsel %vm352, %v443, -inf
    %746 = vmax.xlane.f32.xlu0 %v745
    %v747 = vpop.xlane.xlu0 %746
    %v748 = vsel %vm352, %v492, -inf
    %749 = vmax.xlane.f32.xlu0 %v748
    %v750 = vpop.xlane.xlu0 %749
    %v751 = vsel %vm352, %v541, -inf
    %752 = vmax.xlane.f32.xlu0 %v751
    %v753 = vpop.xlane.xlu0 %752
    %v754 = vsel %vm352, %v590, -inf
    %755 = vmax.xlane.f32.xlu0 %v754
    %v756 = vpop.xlane.xlu0 %755
    %v757 = vsel %vm352, %v639, -inf
    %758 = vmax.xlane.f32.xlu0 %v757
    %v759 = vpop.xlane.xlu0 %758
    %v760 = vsel %vm352, %v688, -inf
    %761 = vmax.xlane.f32.xlu0 %v760
    %v762 = vpop.xlane.xlu0 %761
    %v763 = vsel %vm352, %v737, -inf
    %764 = vmax.xlane.f32.xlu0 %v763
    %v765 = vpop.xlane.xlu0 %764
    %v766 = vsub.f32 %v394, %v744
    %v767 = vsub.f32 %v443, %v747
    %v768 = vsub.f32 %v492, %v750
    %v769 = vsub.f32 %v541, %v753
    %v770 = vsub.f32 %v590, %v756
    %v771 = vsub.f32 %v639, %v759
    %v772 = vsub.f32 %v688, %v762
    %v773 = vsub.f32 %v737, %v765
    %v774 = vmul.f32 %v766, 1.442695
    %v775 = vpow.pop %v774
    %v776 = vmul.f32 %v767, 1.442695
    %v777 = vpow.pop %v776
    %v778 = vmul.f32 %v768, 1.442695
    %v779 = vpow.pop %v778
    %v780 = vmul.f32 %v769, 1.442695
    %v781 = vpow.pop %v780
    %v782 = vmul.f32 %v770, 1.442695
    %v783 = vpow.pop %v782
    %v784 = vmul.f32 %v771, 1.442695
    %v785 = vpow.pop %v784
    %v786 = vmul.f32 %v772, 1.442695
    %v787 = vpow.pop %v786
    %v788 = vmul.f32 %v773, 1.442695
    %v789 = vpow.pop %v788
    %v790 = vsel %vm352, %v775, 0.0
    %791 = vadd.xlane.f32.xlu0 %v790
    %v792 = vpop.xlane.xlu0 %791
    %v793 = vsel %vm352, %v777, 0.0
    %794 = vadd.xlane.f32.xlu0 %v793
    %v795 = vpop.xlane.xlu0 %794
    %v796 = vsel %vm352, %v779, 0.0
    %797 = vadd.xlane.f32.xlu0 %v796
    %v798 = vpop.xlane.xlu0 %797
    %v799 = vsel %vm352, %v781, 0.0
    %800 = vadd.xlane.f32.xlu0 %v799
    %v801 = vpop.xlane.xlu0 %800
    %v802 = vsel %vm352, %v783, 0.0
    %803 = vadd.xlane.f32.xlu0 %v802
    %v804 = vpop.xlane.xlu0 %803
    %v805 = vsel %vm352, %v785, 0.0
    %806 = vadd.xlane.f32.xlu0 %v805
    %v807 = vpop.xlane.xlu0 %806
    %v808 = vsel %vm352, %v787, 0.0
    %809 = vadd.xlane.f32.xlu0 %v808
    %v810 = vpop.xlane.xlu0 %809
    %v811 = vsel %vm352, %v789, 0.0
    %812 = vadd.xlane.f32.xlu0 %v811
    %v813 = vpop.xlane.xlu0 %812
    %v814 = vrcp.pop %v792
    %v815 = vrcp.pop %v795
    %v816 = vrcp.pop %v798
    %v817 = vrcp.pop %v801
    %v818 = vrcp.pop %v804
    %v819 = vrcp.pop %v807
    %v820 = vrcp.pop %v810
    %v821 = vrcp.pop %v813
    %v822 = vmul.f32 %v775, %v814
    %v823 = vmul.f32 %v777, %v815
    %v824 = vmul.f32 %v779, %v816
    %v825 = vmul.f32 %v781, %v817
    %v826 = vmul.f32 %v783, %v818
    %v827 = vmul.f32 %v785, %v819
    %v828 = vmul.f32 %v787, %v820
    %v829 = vmul.f32 %v789, %v821
    %v830 = vpack.c.bf16 %v822, %v822
    %v831 = vpack.c.bf16 %v823, %v823
    %v832 = vpack.c.bf16 %v824, %v824
    %v833 = vpack.c.bf16 %v825, %v825
    %v834 = vpack.c.bf16 %v826, %v826
    %v835 = vpack.c.bf16 %v827, %v827
    %v836 = vpack.c.bf16 %v828, %v828
    %v837 = vpack.c.bf16 %v829, %v829
    %838 = vrot.lane.b32.xlu0 %v341, 64
    %v839 = vpop.permute.xlu0 %838
    %v841 = vsel %vm352, %v830, 0
    %vm843 = vcmask 1043456
    %v845 = vsel %vm843, %v839, 0
    %847 = vmatprep.subr.bf16.mxu0 0
    %848 = vmatpush1.bf16.msra.mxu0 0
    %849 = vmatprep.subr.bf16.mxu0 0
    %850 = vmatpush1.bf16.msra.mxu0 0
    %851 = vmatprep.subr.bf16.mxu0 0
    %852 = vmatpush1.bf16.msra.mxu0 0
    %853 = vmatprep.subr.bf16.mxu0 0
    %854 = vmatpush1.bf16.msra.mxu0 0
    %855 = vmatprep.subr.bf16.mxu0 0
    %856 = vmatpush1.bf16.msra.mxu0 0
    %857 = vmatprep.subr.bf16.mxu0 0
    %858 = vmatpush1.bf16.msra.mxu0 0
    %859 = vmatprep.subr.bf16.mxu0 0
    %860 = vmatpush1.bf16.msra.mxu0 0
    %861 = vmatprep.subr.bf16.mxu0 0
    %862 = vmatpush1.bf16.msra.mxu0 %v845
    %863 = vmatprep.subr.bf16.mxu0 0
    %864 = vmatpush2.bf16.msra.mxu0 0
    %865 = vmatprep.subr.bf16.mxu0 0
    %866 = vmatpush2.bf16.msra.mxu0 0
    %867 = vmatprep.subr.bf16.mxu0 0
    %868 = vmatpush2.bf16.msra.mxu0 0
    %869 = vmatprep.subr.bf16.mxu0 0
    %870 = vmatpush2.bf16.msra.mxu0 0
    %871 = vmatprep.subr.bf16.mxu0 0
    %872 = vmatpush2.bf16.msra.mxu0 0
    %873 = vmatprep.subr.bf16.mxu0 0
    %874 = vmatpush2.bf16.msra.mxu0 0
    %875 = vmatprep.subr.bf16.mxu0 0
    %876 = vmatpush2.bf16.msra.mxu0 0
    %877 = vmatprep.subr.bf16.mxu0 0
    %878 = vmatpush2.bf16.msra.mxu0 0
    %879 = vmatprep.mubr.bf16.mxu0 0
    %880 = vmatmul.mubr.bf16.gmra.mxu0 %v841
    %v881 = vpop.f32.mrf.mxu0
    %v882 = vadd.f32 0.0, %v881
    %v883 = vpop.f32.mrf.mxu0
    %v884 = vpop.f32.mrf.mxu0
    %v885 = vpop.f32.mrf.mxu0
    %886 = vdwg.mxu0
    %887 = vrot.lane.b32.xlu0 %v342, 64
    %v888 = vpop.permute.xlu0 %887
    %v890 = vsel %vm352, %v831, 0
    %v893 = vsel %vm843, %v888, 0
    %895 = vmatprep.subr.bf16.mxu0 0
    %896 = vmatpush1.bf16.msra.mxu0 0
    %897 = vmatprep.subr.bf16.mxu0 0
    %898 = vmatpush1.bf16.msra.mxu0 0
    %899 = vmatprep.subr.bf16.mxu0 0
    %900 = vmatpush1.bf16.msra.mxu0 0
    %901 = vmatprep.subr.bf16.mxu0 0
    %902 = vmatpush1.bf16.msra.mxu0 0
    %903 = vmatprep.subr.bf16.mxu0 0
    %904 = vmatpush1.bf16.msra.mxu0 0
    %905 = vmatprep.subr.bf16.mxu0 0
    %906 = vmatpush1.bf16.msra.mxu0 0
    %907 = vmatprep.subr.bf16.mxu0 0
    %908 = vmatpush1.bf16.msra.mxu0 0
    %909 = vmatprep.subr.bf16.mxu0 0
    %910 = vmatpush1.bf16.msra.mxu0 %v893
    %911 = vmatprep.subr.bf16.mxu0 0
    %912 = vmatpush2.bf16.msra.mxu0 0
    %913 = vmatprep.subr.bf16.mxu0 0
    %914 = vmatpush2.bf16.msra.mxu0 0
    %915 = vmatprep.subr.bf16.mxu0 0
    %916 = vmatpush2.bf16.msra.mxu0 0
    %917 = vmatprep.subr.bf16.mxu0 0
    %918 = vmatpush2.bf16.msra.mxu0 0
    %919 = vmatprep.subr.bf16.mxu0 0
    %920 = vmatpush2.bf16.msra.mxu0 0
    %921 = vmatprep.subr.bf16.mxu0 0
    %922 = vmatpush2.bf16.msra.mxu0 0
    %923 = vmatprep.subr.bf16.mxu0 0
    %924 = vmatpush2.bf16.msra.mxu0 0
    %925 = vmatprep.subr.bf16.mxu0 0
    %926 = vmatpush2.bf16.msra.mxu0 0
    %927 = vmatprep.mubr.bf16.mxu0 0
    %928 = vmatmul.mubr.bf16.gmra.mxu0 %v890
    %v929 = vpop.f32.mrf.mxu0
    %v930 = vadd.f32 0.0, %v929
    %v931 = vpop.f32.mrf.mxu0
    %v932 = vpop.f32.mrf.mxu0
    %v933 = vpop.f32.mrf.mxu0
    %934 = vdwg.mxu0
    %935 = vrot.lane.b32.xlu0 %v343, 64
    %v936 = vpop.permute.xlu0 %935
    %v938 = vsel %vm352, %v832, 0
    %v941 = vsel %vm843, %v936, 0
    %943 = vmatprep.subr.bf16.mxu0 0
    %944 = vmatpush1.bf16.msra.mxu0 0
    %945 = vmatprep.subr.bf16.mxu0 0
    %946 = vmatpush1.bf16.msra.mxu0 0
    %947 = vmatprep.subr.bf16.mxu0 0
    %948 = vmatpush1.bf16.msra.mxu0 0
    %949 = vmatprep.subr.bf16.mxu0 0
    %950 = vmatpush1.bf16.msra.mxu0 0
    %951 = vmatprep.subr.bf16.mxu0 0
    %952 = vmatpush1.bf16.msra.mxu0 0
    %953 = vmatprep.subr.bf16.mxu0 0
    %954 = vmatpush1.bf16.msra.mxu0 0
    %955 = vmatprep.subr.bf16.mxu0 0
    %956 = vmatpush1.bf16.msra.mxu0 0
    %957 = vmatprep.subr.bf16.mxu0 0
    %958 = vmatpush1.bf16.msra.mxu0 %v941
    %959 = vmatprep.subr.bf16.mxu0 0
    %960 = vmatpush2.bf16.msra.mxu0 0
    %961 = vmatprep.subr.bf16.mxu0 0
    %962 = vmatpush2.bf16.msra.mxu0 0
    %963 = vmatprep.subr.bf16.mxu0 0
    %964 = vmatpush2.bf16.msra.mxu0 0
    %965 = vmatprep.subr.bf16.mxu0 0
    %966 = vmatpush2.bf16.msra.mxu0 0
    %967 = vmatprep.subr.bf16.mxu0 0
    %968 = vmatpush2.bf16.msra.mxu0 0
    %969 = vmatprep.subr.bf16.mxu0 0
    %970 = vmatpush2.bf16.msra.mxu0 0
    %971 = vmatprep.subr.bf16.mxu0 0
    %972 = vmatpush2.bf16.msra.mxu0 0
    %973 = vmatprep.subr.bf16.mxu0 0
    %974 = vmatpush2.bf16.msra.mxu0 0
    %975 = vmatprep.mubr.bf16.mxu0 0
    %976 = vmatmul.mubr.bf16.gmra.mxu0 %v938
    %v977 = vpop.f32.mrf.mxu0
    %v978 = vadd.f32 0.0, %v977
    %v979 = vpop.f32.mrf.mxu0
    %v980 = vpop.f32.mrf.mxu0
    %v981 = vpop.f32.mrf.mxu0
    %982 = vdwg.mxu0
    %983 = vrot.lane.b32.xlu0 %v344, 64
    %v984 = vpop.permute.xlu0 %983
    %v986 = vsel %vm352, %v833, 0
    %v989 = vsel %vm843, %v984, 0
    %991 = vmatprep.subr.bf16.mxu0 0
    %992 = vmatpush1.bf16.msra.mxu0 0
    %993 = vmatprep.subr.bf16.mxu0 0
    %994 = vmatpush1.bf16.msra.mxu0 0
    %995 = vmatprep.subr.bf16.mxu0 0
    %996 = vmatpush1.bf16.msra.mxu0 0
    %997 = vmatprep.subr.bf16.mxu0 0
    %998 = vmatpush1.bf16.msra.mxu0 0
    %999 = vmatprep.subr.bf16.mxu0 0
    %1000 = vmatpush1.bf16.msra.mxu0 0
    %1001 = vmatprep.subr.bf16.mxu0 0
    %1002 = vmatpush1.bf16.msra.mxu0 0
    %1003 = vmatprep.subr.bf16.mxu0 0
    %1004 = vmatpush1.bf16.msra.mxu0 0
    %1005 = vmatprep.subr.bf16.mxu0 0
    %1006 = vmatpush1.bf16.msra.mxu0 %v989
    %1007 = vmatprep.subr.bf16.mxu0 0
    %1008 = vmatpush2.bf16.msra.mxu0 0
    %1009 = vmatprep.subr.bf16.mxu0 0
    %1010 = vmatpush2.bf16.msra.mxu0 0
    %1011 = vmatprep.subr.bf16.mxu0 0
    %1012 = vmatpush2.bf16.msra.mxu0 0
    %1013 = vmatprep.subr.bf16.mxu0 0
    %1014 = vmatpush2.bf16.msra.mxu0 0
    %1015 = vmatprep.subr.bf16.mxu0 0
    %1016 = vmatpush2.bf16.msra.mxu0 0
    %1017 = vmatprep.subr.bf16.mxu0 0
    %1018 = vmatpush2.bf16.msra.mxu0 0
    %1019 = vmatprep.subr.bf16.mxu0 0
    %1020 = vmatpush2.bf16.msra.mxu0 0
    %1021 = vmatprep.subr.bf16.mxu0 0
    %1022 = vmatpush2.bf16.msra.mxu0 0
    %1023 = vmatprep.mubr.bf16.mxu0 0
    %1024 = vmatmul.mubr.bf16.gmra.mxu0 %v986
    %v1025 = vpop.f32.mrf.mxu0
    %v1026 = vadd.f32 0.0, %v1025
    %v1027 = vpop.f32.mrf.mxu0
    %v1028 = vpop.f32.mrf.mxu0
    %v1029 = vpop.f32.mrf.mxu0
    %1030 = vdwg.mxu0
    %1031 = vrot.lane.b32.xlu0 %v345, 64
    %v1032 = vpop.permute.xlu0 %1031
    %v1034 = vsel %vm352, %v834, 0
    %v1037 = vsel %vm843, %v1032, 0
    %1039 = vmatprep.subr.bf16.mxu0 0
    %1040 = vmatpush1.bf16.msra.mxu0 0
    %1041 = vmatprep.subr.bf16.mxu0 0
    %1042 = vmatpush1.bf16.msra.mxu0 0
    %1043 = vmatprep.subr.bf16.mxu0 0
    %1044 = vmatpush1.bf16.msra.mxu0 0
    %1045 = vmatprep.subr.bf16.mxu0 0
    %1046 = vmatpush1.bf16.msra.mxu0 0
    %1047 = vmatprep.subr.bf16.mxu0 0
    %1048 = vmatpush1.bf16.msra.mxu0 0
    %1049 = vmatprep.subr.bf16.mxu0 0
    %1050 = vmatpush1.bf16.msra.mxu0 0
    %1051 = vmatprep.subr.bf16.mxu0 0
    %1052 = vmatpush1.bf16.msra.mxu0 0
    %1053 = vmatprep.subr.bf16.mxu0 0
    %1054 = vmatpush1.bf16.msra.mxu0 %v1037
    %1055 = vmatprep.subr.bf16.mxu0 0
    %1056 = vmatpush2.bf16.msra.mxu0 0
    %1057 = vmatprep.subr.bf16.mxu0 0
    %1058 = vmatpush2.bf16.msra.mxu0 0
    %1059 = vmatprep.subr.bf16.mxu0 0
    %1060 = vmatpush2.bf16.msra.mxu0 0
    %1061 = vmatprep.subr.bf16.mxu0 0
    %1062 = vmatpush2.bf16.msra.mxu0 0
    %1063 = vmatprep.subr.bf16.mxu0 0
    %1064 = vmatpush2.bf16.msra.mxu0 0
    %1065 = vmatprep.subr.bf16.mxu0 0
    %1066 = vmatpush2.bf16.msra.mxu0 0
    %1067 = vmatprep.subr.bf16.mxu0 0
    %1068 = vmatpush2.bf16.msra.mxu0 0
    %1069 = vmatprep.subr.bf16.mxu0 0
    %1070 = vmatpush2.bf16.msra.mxu0 0
    %1071 = vmatprep.mubr.bf16.mxu0 0
    %1072 = vmatmul.mubr.bf16.gmra.mxu0 %v1034
    %v1073 = vpop.f32.mrf.mxu0
    %v1074 = vadd.f32 0.0, %v1073
    %v1075 = vpop.f32.mrf.mxu0
    %v1076 = vpop.f32.mrf.mxu0
    %v1077 = vpop.f32.mrf.mxu0
    %1078 = vdwg.mxu0
    %1079 = vrot.lane.b32.xlu0 %v346, 64
    %v1080 = vpop.permute.xlu0 %1079
    %v1082 = vsel %vm352, %v835, 0
    %v1085 = vsel %vm843, %v1080, 0
    %1087 = vmatprep.subr.bf16.mxu0 0
    %1088 = vmatpush1.bf16.msra.mxu0 0
    %1089 = vmatprep.subr.bf16.mxu0 0
    %1090 = vmatpush1.bf16.msra.mxu0 0
    %1091 = vmatprep.subr.bf16.mxu0 0
    %1092 = vmatpush1.bf16.msra.mxu0 0
    %1093 = vmatprep.subr.bf16.mxu0 0
    %1094 = vmatpush1.bf16.msra.mxu0 0
    %1095 = vmatprep.subr.bf16.mxu0 0
    %1096 = vmatpush1.bf16.msra.mxu0 0
    %1097 = vmatprep.subr.bf16.mxu0 0
    %1098 = vmatpush1.bf16.msra.mxu0 0
    %1099 = vmatprep.subr.bf16.mxu0 0
    %1100 = vmatpush1.bf16.msra.mxu0 0
    %1101 = vmatprep.subr.bf16.mxu0 0
    %1102 = vmatpush1.bf16.msra.mxu0 %v1085
    %1103 = vmatprep.subr.bf16.mxu0 0
    %1104 = vmatpush2.bf16.msra.mxu0 0
    %1105 = vmatprep.subr.bf16.mxu0 0
    %1106 = vmatpush2.bf16.msra.mxu0 0
    %1107 = vmatprep.subr.bf16.mxu0 0
    %1108 = vmatpush2.bf16.msra.mxu0 0
    %1109 = vmatprep.subr.bf16.mxu0 0
    %1110 = vmatpush2.bf16.msra.mxu0 0
    %1111 = vmatprep.subr.bf16.mxu0 0
    %1112 = vmatpush2.bf16.msra.mxu0 0
    %1113 = vmatprep.subr.bf16.mxu0 0
    %1114 = vmatpush2.bf16.msra.mxu0 0
    %1115 = vmatprep.subr.bf16.mxu0 0
    %1116 = vmatpush2.bf16.msra.mxu0 0
    %1117 = vmatprep.subr.bf16.mxu0 0
    %1118 = vmatpush2.bf16.msra.mxu0 0
    %1119 = vmatprep.mubr.bf16.mxu0 0
    %1120 = vmatmul.mubr.bf16.gmra.mxu0 %v1082
    %v1121 = vpop.f32.mrf.mxu0
    %v1122 = vadd.f32 0.0, %v1121
    %v1123 = vpop.f32.mrf.mxu0
    %v1124 = vpop.f32.mrf.mxu0
    %v1125 = vpop.f32.mrf.mxu0
    %1126 = vdwg.mxu0
    %1127 = vrot.lane.b32.xlu0 %v347, 64
    %v1128 = vpop.permute.xlu0 %1127
    %v1130 = vsel %vm352, %v836, 0
    %v1133 = vsel %vm843, %v1128, 0
    %1135 = vmatprep.subr.bf16.mxu0 0
    %1136 = vmatpush1.bf16.msra.mxu0 0
    %1137 = vmatprep.subr.bf16.mxu0 0
    %1138 = vmatpush1.bf16.msra.mxu0 0
    %1139 = vmatprep.subr.bf16.mxu0 0
    %1140 = vmatpush1.bf16.msra.mxu0 0
    %1141 = vmatprep.subr.bf16.mxu0 0
    %1142 = vmatpush1.bf16.msra.mxu0 0
    %1143 = vmatprep.subr.bf16.mxu0 0
    %1144 = vmatpush1.bf16.msra.mxu0 0
    %1145 = vmatprep.subr.bf16.mxu0 0
    %1146 = vmatpush1.bf16.msra.mxu0 0
    %1147 = vmatprep.subr.bf16.mxu0 0
    %1148 = vmatpush1.bf16.msra.mxu0 0
    %1149 = vmatprep.subr.bf16.mxu0 0
    %1150 = vmatpush1.bf16.msra.mxu0 %v1133
    %1151 = vmatprep.subr.bf16.mxu0 0
    %1152 = vmatpush2.bf16.msra.mxu0 0
    %1153 = vmatprep.subr.bf16.mxu0 0
    %1154 = vmatpush2.bf16.msra.mxu0 0
    %1155 = vmatprep.subr.bf16.mxu0 0
    %1156 = vmatpush2.bf16.msra.mxu0 0
    %1157 = vmatprep.subr.bf16.mxu0 0
    %1158 = vmatpush2.bf16.msra.mxu0 0
    %1159 = vmatprep.subr.bf16.mxu0 0
    %1160 = vmatpush2.bf16.msra.mxu0 0
    %1161 = vmatprep.subr.bf16.mxu0 0
    %1162 = vmatpush2.bf16.msra.mxu0 0
    %1163 = vmatprep.subr.bf16.mxu0 0
    %1164 = vmatpush2.bf16.msra.mxu0 0
    %1165 = vmatprep.subr.bf16.mxu0 0
    %1166 = vmatpush2.bf16.msra.mxu0 0
    %1167 = vmatprep.mubr.bf16.mxu0 0
    %1168 = vmatmul.mubr.bf16.gmra.mxu0 %v1130
    %v1169 = vpop.f32.mrf.mxu0
    %v1170 = vadd.f32 0.0, %v1169
    %v1171 = vpop.f32.mrf.mxu0
    %v1172 = vpop.f32.mrf.mxu0
    %v1173 = vpop.f32.mrf.mxu0
    %1174 = vdwg.mxu0
    %1175 = vrot.lane.b32.xlu0 %v348, 64
    %v1176 = vpop.permute.xlu0 %1175
    %v1178 = vsel %vm352, %v837, 0
    %v1181 = vsel %vm843, %v1176, 0
    %1183 = vmatprep.subr.bf16.mxu0 0
    %1184 = vmatpush1.bf16.msra.mxu0 0
    %1185 = vmatprep.subr.bf16.mxu0 0
    %1186 = vmatpush1.bf16.msra.mxu0 0
    %1187 = vmatprep.subr.bf16.mxu0 0
    %1188 = vmatpush1.bf16.msra.mxu0 0
    %1189 = vmatprep.subr.bf16.mxu0 0
    %1190 = vmatpush1.bf16.msra.mxu0 0
    %1191 = vmatprep.subr.bf16.mxu0 0
    %1192 = vmatpush1.bf16.msra.mxu0 0
    %1193 = vmatprep.subr.bf16.mxu0 0
    %1194 = vmatpush1.bf16.msra.mxu0 0
    %1195 = vmatprep.subr.bf16.mxu0 0
    %1196 = vmatpush1.bf16.msra.mxu0 0
    %1197 = vmatprep.subr.bf16.mxu0 0
    %1198 = vmatpush1.bf16.msra.mxu0 %v1181
    %1199 = vmatprep.subr.bf16.mxu0 0
    %1200 = vmatpush2.bf16.msra.mxu0 0
    %1201 = vmatprep.subr.bf16.mxu0 0
    %1202 = vmatpush2.bf16.msra.mxu0 0
    %1203 = vmatprep.subr.bf16.mxu0 0
    %1204 = vmatpush2.bf16.msra.mxu0 0
    %1205 = vmatprep.subr.bf16.mxu0 0
    %1206 = vmatpush2.bf16.msra.mxu0 0
    %1207 = vmatprep.subr.bf16.mxu0 0
    %1208 = vmatpush2.bf16.msra.mxu0 0
    %1209 = vmatprep.subr.bf16.mxu0 0
    %1210 = vmatpush2.bf16.msra.mxu0 0
    %1211 = vmatprep.subr.bf16.mxu0 0
    %1212 = vmatpush2.bf16.msra.mxu0 0
    %1213 = vmatprep.subr.bf16.mxu0 0
    %1214 = vmatpush2.bf16.msra.mxu0 0
    %1215 = vmatprep.mubr.bf16.mxu0 0
    %1216 = vmatmul.mubr.bf16.gmra.mxu0 %v1178
    %v1217 = vpop.f32.mrf.mxu0
    %v1218 = vadd.f32 0.0, %v1217
    %v1219 = vpop.f32.mrf.mxu0
    %v1220 = vpop.f32.mrf.mxu0
    %v1221 = vpop.f32.mrf.mxu0
    %1222 = vdwg.mxu0
    %1225 = vrot.lane.b32.xlu0 %v978, 8
    %v1226 = vpop.permute.xlu0 %1225
    %1227 = vrot.lane.b32.xlu0 %v1026, 8
    %v1228 = vpop.permute.xlu0 %1227
    %1233 = vrot.lane.b32.xlu0 %v1074, 16
    %v1234 = vpop.permute.xlu0 %1233
    %1235 = vrot.lane.b32.xlu0 %v1122, 16
    %v1236 = vpop.permute.xlu0 %1235
    %1241 = vrot.lane.b32.xlu0 %v1170, 24
    %v1242 = vpop.permute.xlu0 %1241
    %1243 = vrot.lane.b32.xlu0 %v1218, 24
    %v1244 = vpop.permute.xlu0 %1243
    %v1247 = vsel %vm352, %v882, %v1226
    %v1248 = vsel %vm352, %v930, %v1228
    %vm1249 = vcmask 130048
    %v1250 = vsel %vm1249, %v1247, %v1234
    %v1251 = vsel %vm1249, %v1248, %v1236
    %vm1252 = vcmask 195584
    %v1253 = vsel %vm1252, %v1250, %v1242
    %v1254 = vsel %vm1252, %v1251, %v1244
    %v1255 = vpack.c.bf16 %v1254, %v1253
    %v1256 = vld [vmem:[%s8] sm:$0xf]
    %v1257 = vld [vmem:[%s8 + $0x4] sm:$0xf]
    %v1258 = vld [vmem:[%s8 + $0x8] sm:$0xf]
    %v1259 = vld [vmem:[%s8 + $0xc] sm:$0xf]
    %v1260 = vld [vmem:[%s9] sm:$0x1]
    %v1262 = vlaneseq
    %v1263 = vshrl.u32 %v1262, 7
    %v1264 = vsub.s32 0, %v1263
    %v1265 = vrot.slane %v1260, %v1264
    %v1271 = vunpack.c.l.b16 %v1256
    %v1272 = vunpack.c.l.b16 %v1257
    %v1273 = vunpack.c.l.b16 %v1258
    %v1274 = vunpack.c.l.b16 %v1259
    %v1275 = vpack.c.b16 %v1272, %v1271
    %v1276 = vpack.c.b16 %v1274, %v1273
    %v1280 = vsel %vm173, %v1255, 0
    %1282 = vmatprep.subr.bf16.mxu0 0
    %1283 = vmatpush1.bf16.msra.mxu0 0
    %1284 = vmatprep.subr.bf16.mxu0 0
    %1285 = vmatpush1.bf16.msra.mxu0 0
    %1286 = vmatprep.subr.bf16.mxu0 0
    %1287 = vmatpush1.bf16.msra.mxu0 0
    %1288 = vmatprep.subr.bf16.mxu0 0
    %1289 = vmatpush1.bf16.msra.mxu0 0
    %1290 = vmatprep.subr.bf16.mxu0 0
    %1291 = vmatpush1.bf16.msra.mxu0 0
    %1292 = vmatprep.subr.bf16.mxu0 0
    %1293 = vmatpush1.bf16.msra.mxu0 0
    %1294 = vmatprep.subr.bf16.mxu0 0
    %1295 = vmatpush1.bf16.msra.mxu0 %v1276
    %1296 = vmatprep.subr.bf16.mxu0 0
    %1297 = vmatpush1.bf16.msra.mxu0 %v1275
    %1298 = vmatprep.subr.bf16.mxu0 0
    %1299 = vmatpush2.bf16.msra.mxu0 0
    %1300 = vmatprep.subr.bf16.mxu0 0
    %1301 = vmatpush2.bf16.msra.mxu0 0
    %1302 = vmatprep.subr.bf16.mxu0 0
    %1303 = vmatpush2.bf16.msra.mxu0 0
    %1304 = vmatprep.subr.bf16.mxu0 0
    %1305 = vmatpush2.bf16.msra.mxu0 0
    %1306 = vmatprep.subr.bf16.mxu0 0
    %1307 = vmatpush2.bf16.msra.mxu0 0
    %1308 = vmatprep.subr.bf16.mxu0 0
    %1309 = vmatpush2.bf16.msra.mxu0 0
    %1310 = vmatprep.subr.bf16.mxu0 0
    %1311 = vmatpush2.bf16.msra.mxu0 0
    %1312 = vmatprep.subr.bf16.mxu0 0
    %1313 = vmatpush2.bf16.msra.mxu0 0
    %1314 = vmatprep.mubr.bf16.mxu0 0
    %1315 = vmatmul.mubr.bf16.gmra.mxu0 %v1280
    %v1316 = vpop.f32.mrf.mxu0
    %v1317 = vadd.f32 %v1265, %v1316
    %v1318 = vpop.f32.mrf.mxu0
    %v1319 = vpop.f32.mrf.mxu0
    %v1320 = vadd.f32 %v1265, %v1319
    %v1321 = vpop.f32.mrf.mxu0
    %1322 = vdwg.mxu0
    %v1323 = vadd.f32 %v1317, %v215
    %v1324 = vadd.f32 %v1320, %v216
    %v1325 = vld [vmem:[%s10] sm:$0x1]
    %v1326 = vld [vmem:[%s11] sm:$0x1]
    %v1327 = vsel %vm173, %v1323, 0.0
    %1328 = vadd.xlane.f32.xlu0 %v1327
    %v1329 = vpop.xlane.xlu0 %1328
    %v1330 = vsel %vm173, %v1324, 0.0
    %1331 = vadd.xlane.f32.xlu0 %v1330
    %v1332 = vpop.xlane.xlu0 %1331
    %v1333 = vmul.f32 %v1329, %v180
    %v1334 = vmul.f32 %v1332, %v180
    %v1335 = vsub.f32 %v1323, %v1333
    %v1336 = vsub.f32 %v1324, %v1334
    %v1337 = vmul.f32 %v1335, %v1335
    %v1338 = vmul.f32 %v1336, %v1336
    %v1339 = vsel %vm173, %v1337, 0.0
    %1340 = vadd.xlane.f32.xlu0 %v1339
    %v1341 = vpop.xlane.xlu0 %1340
    %v1342 = vsel %vm173, %v1338, 0.0
    %1343 = vadd.xlane.f32.xlu0 %v1342
    %v1344 = vpop.xlane.xlu0 %1343
    %v1345 = vmul.f32 %v1341, %v180
    %v1346 = vmul.f32 %v1344, %v180
    %v1347 = vadd.f32 %v1345, 1e-12
    %v1348 = vadd.f32 %v1346, 1e-12
    %v1349 = vrsqrt.pop %v1347
    %v1350 = vrsqrt.pop %v1348
    %v1351 = vmul.f32 %v1335, %v1349
    %v1352 = vmul.f32 %v1336, %v1350
    %v1354 = vlaneseq
    %v1355 = vshrl.u32 %v1354, 7
    %v1356 = vsub.s32 0, %v1355
    %v1357 = vrot.slane %v1325, %v1356
    %v1359 = vmul.f32 %v1351, %v1357
    %v1360 = vmul.f32 %v1352, %v1357
    %v1362 = vlaneseq
    %v1363 = vshrl.u32 %v1362, 7
    %v1364 = vsub.s32 0, %v1363
    %v1365 = vrot.slane %v1326, %v1364
    %v1367 = vadd.f32 %v1359, %v1365
    %v1368 = vadd.f32 %v1360, %v1365
    %v1369 = vpack.c.bf16 %v1368, %v1367
    %v1370 = vld [vmem:[%s12] sm:$0xf]
    %v1371 = vld [vmem:[%s12 + $0x4] sm:$0xf]
    %v1372 = vld [vmem:[%s12 + $0x8] sm:$0xf]
    %v1373 = vld [vmem:[%s12 + $0xc] sm:$0xf]
    %v1374 = vld [vmem:[%s13] sm:$0x1]
    %v1376 = vlaneseq
    %v1377 = vshrl.u32 %v1376, 7
    %v1378 = vsub.s32 0, %v1377
    %v1379 = vrot.slane %v1374, %v1378
    %v1385 = vunpack.c.l.b16 %v1370
    %v1386 = vunpack.c.l.b16 %v1371
    %v1387 = vunpack.c.l.b16 %v1372
    %v1388 = vunpack.c.l.b16 %v1373
    %v1389 = vpack.c.b16 %v1386, %v1385
    %v1390 = vpack.c.b16 %v1388, %v1387
    %v1394 = vsel %vm173, %v1369, 0
    %1396 = vmatprep.subr.bf16.mxu0 0
    %1397 = vmatpush1.bf16.msra.mxu0 0
    %1398 = vmatprep.subr.bf16.mxu0 0
    %1399 = vmatpush1.bf16.msra.mxu0 0
    %1400 = vmatprep.subr.bf16.mxu0 0
    %1401 = vmatpush1.bf16.msra.mxu0 0
    %1402 = vmatprep.subr.bf16.mxu0 0
    %1403 = vmatpush1.bf16.msra.mxu0 0
    %1404 = vmatprep.subr.bf16.mxu0 0
    %1405 = vmatpush1.bf16.msra.mxu0 0
    %1406 = vmatprep.subr.bf16.mxu0 0
    %1407 = vmatpush1.bf16.msra.mxu0 0
    %1408 = vmatprep.subr.bf16.mxu0 0
    %1409 = vmatpush1.bf16.msra.mxu0 %v1390
    %1410 = vmatprep.subr.bf16.mxu0 0
    %1411 = vmatpush1.bf16.msra.mxu0 %v1389
    %1412 = vmatprep.subr.bf16.mxu0 0
    %1413 = vmatpush2.bf16.msra.mxu0 0
    %1414 = vmatprep.subr.bf16.mxu0 0
    %1415 = vmatpush2.bf16.msra.mxu0 0
    %1416 = vmatprep.subr.bf16.mxu0 0
    %1417 = vmatpush2.bf16.msra.mxu0 0
    %1418 = vmatprep.subr.bf16.mxu0 0
    %1419 = vmatpush2.bf16.msra.mxu0 0
    %1420 = vmatprep.subr.bf16.mxu0 0
    %1421 = vmatpush2.bf16.msra.mxu0 0
    %1422 = vmatprep.subr.bf16.mxu0 0
    %1423 = vmatpush2.bf16.msra.mxu0 0
    %1424 = vmatprep.subr.bf16.mxu0 0
    %1425 = vmatpush2.bf16.msra.mxu0 0
    %1426 = vmatprep.subr.bf16.mxu0 0
    %1427 = vmatpush2.bf16.msra.mxu0 0
    %1428 = vmatprep.mubr.bf16.mxu0 0
    %1429 = vmatmul.mubr.bf16.gmra.mxu0 %v1394
    %v1430 = vpop.f32.mrf.mxu0
    %v1431 = vadd.f32 %v1379, %v1430
    %v1432 = vpop.f32.mrf.mxu0
    %v1433 = vpop.f32.mrf.mxu0
    %v1434 = vadd.f32 %v1379, %v1433
    %v1435 = vpop.f32.mrf.mxu0
    %1436 = vdwg.mxu0
    %v1437 = vmul.f32 %v1431, %v1431
    %v1438 = vmul.f32 %v1434, %v1434
    %v1439 = vmul.f32 %v1431, %v1437
    %v1440 = vmul.f32 %v1434, %v1438
    %v1441 = vmul.f32 %v1439, 0.044715
    %v1442 = vmul.f32 %v1440, 0.044715
    %v1443 = vadd.f32 %v1431, %v1441
    %v1444 = vadd.f32 %v1434, %v1442
    %v1445 = vmul.f32 %v1443, 0.7978846
    %v1446 = vmul.f32 %v1444, 0.7978846
    %v1447 = vtanh.pop %v1445
    %v1448 = vtanh.pop %v1446
    %v1449 = vadd.f32 %v1447, 1.0
    %v1450 = vadd.f32 %v1448, 1.0
    %v1451 = vmul.f32 %v1449, 0.5
    %v1452 = vmul.f32 %v1450, 0.5
    %v1453 = vmul.f32 %v1431, %v1451
    %v1454 = vmul.f32 %v1434, %v1452
    %v1455 = vpack.c.bf16 %v1454, %v1453
    %v1456 = vld [vmem:[%s14] sm:$0xf]
    %v1457 = vld [vmem:[%s14 + $0x4] sm:$0xf]
    %v1458 = vld [vmem:[%s14 + $0x8] sm:$0xf]
    %v1459 = vld [vmem:[%s14 + $0xc] sm:$0xf]
    %v1460 = vld [vmem:[%s14 + $0x10] sm:$0xf]
    %v1461 = vld [vmem:[%s14 + $0x14] sm:$0xf]
    %v1462 = vld [vmem:[%s14 + $0x18] sm:$0xf]
    %v1463 = vld [vmem:[%s14 + $0x1c] sm:$0xf]
    %v1464 = vld [vmem:[%s15] sm:$0x1]
    %v1466 = vlaneseq
    %v1467 = vshrl.u32 %v1466, 7
    %v1468 = vsub.s32 0, %v1467
    %v1469 = vrot.slane %v1464, %v1468
    %v1479 = vunpack.c.l.b16 %v1456
    %v1480 = vunpack.c.l.b16 %v1457
    %v1481 = vunpack.c.l.b16 %v1458
    %v1482 = vunpack.c.l.b16 %v1459
    %v1483 = vunpack.c.l.b16 %v1460
    %v1484 = vunpack.c.l.b16 %v1461
    %v1485 = vunpack.c.l.b16 %v1462
    %v1486 = vunpack.c.l.b16 %v1463
    %v1487 = vpack.c.b16 %v1480, %v1479
    %v1488 = vpack.c.b16 %v1482, %v1481
    %v1489 = vpack.c.b16 %v1484, %v1483
    %v1490 = vpack.c.b16 %v1486, %v1485
    %vm1495 = vcmask 523264
    %v1497 = vsel %vm1495, %v1455, 0
    %1499 = vmatprep.subr.bf16.mxu0 0
    %1500 = vmatpush1.bf16.msra.mxu0 0
    %1501 = vmatprep.subr.bf16.mxu0 0
    %1502 = vmatpush1.bf16.msra.mxu0 0
    %1503 = vmatprep.subr.bf16.mxu0 0
    %1504 = vmatpush1.bf16.msra.mxu0 0
    %1505 = vmatprep.subr.bf16.mxu0 0
    %1506 = vmatpush1.bf16.msra.mxu0 0
    %1507 = vmatprep.subr.bf16.mxu0 0
    %1508 = vmatpush1.bf16.msra.mxu0 %v1490
    %1509 = vmatprep.subr.bf16.mxu0 0
    %1510 = vmatpush1.bf16.msra.mxu0 %v1489
    %1511 = vmatprep.subr.bf16.mxu0 0
    %1512 = vmatpush1.bf16.msra.mxu0 %v1488
    %1513 = vmatprep.subr.bf16.mxu0 0
    %1514 = vmatpush1.bf16.msra.mxu0 %v1487
    %1515 = vmatprep.subr.bf16.mxu0 0
    %1516 = vmatpush2.bf16.msra.mxu0 0
    %1517 = vmatprep.subr.bf16.mxu0 0
    %1518 = vmatpush2.bf16.msra.mxu0 0
    %1519 = vmatprep.subr.bf16.mxu0 0
    %1520 = vmatpush2.bf16.msra.mxu0 0
    %1521 = vmatprep.subr.bf16.mxu0 0
    %1522 = vmatpush2.bf16.msra.mxu0 0
    %1523 = vmatprep.subr.bf16.mxu0 0
    %1524 = vmatpush2.bf16.msra.mxu0 0
    %1525 = vmatprep.subr.bf16.mxu0 0
    %1526 = vmatpush2.bf16.msra.mxu0 0
    %1527 = vmatprep.subr.bf16.mxu0 0
    %1528 = vmatpush2.bf16.msra.mxu0 0
    %1529 = vmatprep.subr.bf16.mxu0 0
    %1530 = vmatpush2.bf16.msra.mxu0 0
    %1531 = vmatprep.mubr.bf16.mxu0 0
    %1532 = vmatmul.mubr.bf16.gmra.mxu0 %v1497
    %v1533 = vpop.f32.mrf.mxu0
    %v1534 = vadd.f32 %v1469, %v1533
    %v1535 = vpop.f32.mrf.mxu0
    %v1536 = vpop.f32.mrf.mxu0
    %v1537 = vadd.f32 %v1469, %v1536
    %v1538 = vpop.f32.mrf.mxu0
    %1539 = vdwg.mxu0
    %v1540 = vadd.f32 %v1534, %v1367
    %v1541 = vadd.f32 %v1537, %v1368
    %v1542 = vld [vmem:[%s16] sm:$0x1]
    %v1543 = vld [vmem:[%s17] sm:$0x1]
    %v1544 = vsel %vm173, %v1540, 0.0
    %1545 = vadd.xlane.f32.xlu0 %v1544
    %v1546 = vpop.xlane.xlu0 %1545
    %v1547 = vsel %vm173, %v1541, 0.0
    %1548 = vadd.xlane.f32.xlu0 %v1547
    %v1549 = vpop.xlane.xlu0 %1548
    %v1550 = vmul.f32 %v1546, %v180
    %v1551 = vmul.f32 %v1549, %v180
    %v1552 = vsub.f32 %v1540, %v1550
    %v1553 = vsub.f32 %v1541, %v1551
    %v1554 = vmul.f32 %v1552, %v1552
    %v1555 = vmul.f32 %v1553, %v1553
    %v1556 = vsel %vm173, %v1554, 0.0
    %1557 = vadd.xlane.f32.xlu0 %v1556
    %v1558 = vpop.xlane.xlu0 %1557
    %v1559 = vsel %vm173, %v1555, 0.0
    %1560 = vadd.xlane.f32.xlu0 %v1559
    %v1561 = vpop.xlane.xlu0 %1560
    %v1562 = vmul.f32 %v1558, %v180
    %v1563 = vmul.f32 %v1561, %v180
    %v1564 = vadd.f32 %v1562, 1e-12
    %v1565 = vadd.f32 %v1563, 1e-12
    %v1566 = vrsqrt.pop %v1564
    %v1567 = vrsqrt.pop %v1565
    %v1568 = vmul.f32 %v1552, %v1566
    %v1569 = vmul.f32 %v1553, %v1567
    %v1571 = vlaneseq
    %v1572 = vshrl.u32 %v1571, 7
    %v1573 = vsub.s32 0, %v1572
    %v1574 = vrot.slane %v1542, %v1573
    %v1576 = vmul.f32 %v1568, %v1574
    %v1577 = vmul.f32 %v1569, %v1574
    %v1579 = vlaneseq
    %v1580 = vshrl.u32 %v1579, 7
    %v1581 = vsub.s32 0, %v1580
    %v1582 = vrot.slane %v1543, %v1581
    %v1584 = vadd.f32 %v1576, %v1582
    %v1585 = vadd.f32 %v1577, %v1582
    %v1586 = vpack.c.bf16 %v1585, %v1584
    %s1587 = scalar_lea.vmem %s6, 16
    %v1588 = vld [vmem:[%s1587] sm:$0xf]
    %v1589 = vld [vmem:[%s1587 + $0x4] sm:$0xf]
    %v1590 = vld [vmem:[%s1587 + $0x8] sm:$0xf]
    %v1591 = vld [vmem:[%s1587 + $0xc] sm:$0xf]
    %s1592 = scalar_lea.vmem %s7, 1
    %v1593 = vld [vmem:[%s1592] sm:$0x1]
    %v1595 = vlaneseq
    %v1596 = vshrl.u32 %v1595, 7
    %v1597 = vsub.s32 0, %v1596
    %v1598 = vrot.slane %v1593, %v1597
    %v1604 = vunpack.c.l.b16 %v1588
    %v1605 = vunpack.c.l.b16 %v1589
    %v1606 = vunpack.c.l.b16 %v1590
    %v1607 = vunpack.c.l.b16 %v1591
    %v1608 = vpack.c.b16 %v1605, %v1604
    %v1609 = vpack.c.b16 %v1607, %v1606
    %v1613 = vsel %vm173, %v1586, 0
    %1615 = vmatprep.subr.bf16.mxu0 0
    %1616 = vmatpush1.bf16.msra.mxu0 0
    %1617 = vmatprep.subr.bf16.mxu0 0
    %1618 = vmatpush1.bf16.msra.mxu0 0
    %1619 = vmatprep.subr.bf16.mxu0 0
    %1620 = vmatpush1.bf16.msra.mxu0 0
    %1621 = vmatprep.subr.bf16.mxu0 0
    %1622 = vmatpush1.bf16.msra.mxu0 0
    %1623 = vmatprep.subr.bf16.mxu0 0
    %1624 = vmatpush1.bf16.msra.mxu0 0
    %1625 = vmatprep.subr.bf16.mxu0 0
    %1626 = vmatpush1.bf16.msra.mxu0 0
    %1627 = vmatprep.subr.bf16.mxu0 0
    %1628 = vmatpush1.bf16.msra.mxu0 %v1609
    %1629 = vmatprep.subr.bf16.mxu0 0
    %1630 = vmatpush1.bf16.msra.mxu0 %v1608
    %1631 = vmatprep.subr.bf16.mxu0 0
    %1632 = vmatpush2.bf16.msra.mxu0 0
    %1633 = vmatprep.subr.bf16.mxu0 0
    %1634 = vmatpush2.bf16.msra.mxu0 0
    %1635 = vmatprep.subr.bf16.mxu0 0
    %1636 = vmatpush2.bf16.msra.mxu0 0
    %1637 = vmatprep.subr.bf16.mxu0 0
    %1638 = vmatpush2.bf16.msra.mxu0 0
    %1639 = vmatprep.subr.bf16.mxu0 0
    %1640 = vmatpush2.bf16.msra.mxu0 0
    %1641 = vmatprep.subr.bf16.mxu0 0
    %1642 = vmatpush2.bf16.msra.mxu0 0
    %1643 = vmatprep.subr.bf16.mxu0 0
    %1644 = vmatpush2.bf16.msra.mxu0 0
    %1645 = vmatprep.subr.bf16.mxu0 0
    %1646 = vmatpush2.bf16.msra.mxu0 0
    %1647 = vmatprep.mubr.bf16.mxu0 0
    %1648 = vmatmul.mubr.bf16.gmra.mxu0 %v1613
    %v1649 = vpop.f32.mrf.mxu0
    %v1650 = vadd.f32 %v1598, %v1649
    %v1651 = vpop.f32.mrf.mxu0
    %v1652 = vpop.f32.mrf.mxu0
    %v1653 = vadd.f32 %v1598, %v1652
    %v1654 = vpop.f32.mrf.mxu0
    %1655 = vdwg.mxu0
    %1658 = vrot.lane.b32.xlu0 %v1650, 120
    %v1659 = vpop.permute.xlu0 %1658
    %1660 = vrot.lane.b32.xlu0 %v1653, 120
    %v1661 = vpop.permute.xlu0 %1660
    %1664 = vrot.lane.b32.xlu0 %v1650, 112
    %v1665 = vpop.permute.xlu0 %1664
    %1666 = vrot.lane.b32.xlu0 %v1653, 112
    %v1667 = vpop.permute.xlu0 %1666
    %1670 = vrot.lane.b32.xlu0 %v1650, 104
    %v1671 = vpop.permute.xlu0 %1670
    %1672 = vrot.lane.b32.xlu0 %v1653, 104
    %v1673 = vpop.permute.xlu0 %1672
    %v1676 = vpack.c.bf16 %v1650, %v1650
    %v1677 = vpack.c.bf16 %v1653, %v1653
    %v1678 = vpack.c.bf16 %v1659, %v1659
    %v1679 = vpack.c.bf16 %v1661, %v1661
    %v1680 = vpack.c.bf16 %v1665, %v1665
    %v1681 = vpack.c.bf16 %v1667, %v1667
    %v1682 = vpack.c.bf16 %v1671, %v1671
    %v1683 = vpack.c.bf16 %v1673, %v1673
    %1685 = vrot.lane.b32.xlu0 %v1676, 96
    %v1686 = vpop.permute.xlu0 %1685
    %v1688 = vsel %vm352, %v1676, 0
    %v1691 = vsel %vm352, %v1686, 0
    %1693 = vmatprep.subr.bf16.mxu0 0
    %1694 = vmatpush1.bf16.xpose.msra.mxu0 0
    %1695 = vmatprep.subr.bf16.mxu0 0
    %1696 = vmatpush1.bf16.xpose.msra.mxu0 0
    %1697 = vmatprep.subr.bf16.mxu0 0
    %1698 = vmatpush1.bf16.xpose.msra.mxu0 0
    %1699 = vmatprep.subr.bf16.mxu0 0
    %1700 = vmatpush1.bf16.xpose.msra.mxu0 0
    %1701 = vmatprep.subr.bf16.mxu0 0
    %1702 = vmatpush1.bf16.xpose.msra.mxu0 0
    %1703 = vmatprep.subr.bf16.mxu0 0
    %1704 = vmatpush1.bf16.xpose.msra.mxu0 0
    %1705 = vmatprep.subr.bf16.mxu0 0
    %1706 = vmatpush1.bf16.xpose.msra.mxu0 0
    %1707 = vmatprep.subr.bf16.mxu0 0
    %1708 = vmatpush1.bf16.xpose.msra.mxu0 %v1691
    %1709 = vmatprep.subr.bf16.mxu0 0
    %1710 = vmatpush2.bf16.xpose.msra.mxu0 0
    %1711 = vmatprep.subr.bf16.mxu0 0
    %1712 = vmatpush2.bf16.xpose.msra.mxu0 0
    %1713 = vmatprep.subr.bf16.mxu0 0
    %1714 = vmatpush2.bf16.xpose.msra.mxu0 0
    %1715 = vmatprep.subr.bf16.mxu0 0
    %1716 = vmatpush2.bf16.xpose.msra.mxu0 0
    %1717 = vmatprep.subr.bf16.mxu0 0
    %1718 = vmatpush2.bf16.xpose.msra.mxu0 0
    %1719 = vmatprep.subr.bf16.mxu0 0
    %1720 = vmatpush2.bf16.xpose.msra.mxu0 0
    %1721 = vmatprep.subr.bf16.mxu0 0
    %1722 = vmatpush2.bf16.xpose.msra.mxu0 0
    %1723 = vmatprep.subr.bf16.mxu0 0
    %1724 = vmatpush2.bf16.xpose.msra.mxu0 0
    %1725 = vmatprep.mubr.bf16.mxu0 0
    %1726 = vmatmul.mubr.bf16.gmra.mxu0 %v1688
    %v1727 = vpop.f32.mrf.mxu0
    %v1728 = vadd.f32 %v246, %v1727
    %v1729 = vpop.f32.mrf.mxu0
    %v1730 = vpop.f32.mrf.mxu0
    %v1731 = vpop.f32.mrf.mxu0
    %1732 = vdwg.mxu0
    %1734 = vrot.lane.b32.xlu0 %v1677, 96
    %v1735 = vpop.permute.xlu0 %1734
    %v1737 = vsel %vm352, %v1677, 0
    %v1740 = vsel %vm352, %v1735, 0
    %1742 = vmatprep.subr.bf16.mxu0 0
    %1743 = vmatpush1.bf16.xpose.msra.mxu0 0
    %1744 = vmatprep.subr.bf16.mxu0 0
    %1745 = vmatpush1.bf16.xpose.msra.mxu0 0
    %1746 = vmatprep.subr.bf16.mxu0 0
    %1747 = vmatpush1.bf16.xpose.msra.mxu0 0
    %1748 = vmatprep.subr.bf16.mxu0 0
    %1749 = vmatpush1.bf16.xpose.msra.mxu0 0
    %1750 = vmatprep.subr.bf16.mxu0 0
    %1751 = vmatpush1.bf16.xpose.msra.mxu0 0
    %1752 = vmatprep.subr.bf16.mxu0 0
    %1753 = vmatpush1.bf16.xpose.msra.mxu0 0
    %1754 = vmatprep.subr.bf16.mxu0 0
    %1755 = vmatpush1.bf16.xpose.msra.mxu0 0
    %1756 = vmatprep.subr.bf16.mxu0 0
    %1757 = vmatpush1.bf16.xpose.msra.mxu0 %v1740
    %1758 = vmatprep.subr.bf16.mxu0 0
    %1759 = vmatpush2.bf16.xpose.msra.mxu0 0
    %1760 = vmatprep.subr.bf16.mxu0 0
    %1761 = vmatpush2.bf16.xpose.msra.mxu0 0
    %1762 = vmatprep.subr.bf16.mxu0 0
    %1763 = vmatpush2.bf16.xpose.msra.mxu0 0
    %1764 = vmatprep.subr.bf16.mxu0 0
    %1765 = vmatpush2.bf16.xpose.msra.mxu0 0
    %1766 = vmatprep.subr.bf16.mxu0 0
    %1767 = vmatpush2.bf16.xpose.msra.mxu0 0
    %1768 = vmatprep.subr.bf16.mxu0 0
    %1769 = vmatpush2.bf16.xpose.msra.mxu0 0
    %1770 = vmatprep.subr.bf16.mxu0 0
    %1771 = vmatpush2.bf16.xpose.msra.mxu0 0
    %1772 = vmatprep.subr.bf16.mxu0 0
    %1773 = vmatpush2.bf16.xpose.msra.mxu0 0
    %1774 = vmatprep.mubr.bf16.mxu0 0
    %1775 = vmatmul.mubr.bf16.gmra.mxu0 %v1737
    %v1776 = vpop.f32.mrf.mxu0
    %v1777 = vadd.f32 %v250, %v1776
    %v1778 = vpop.f32.mrf.mxu0
    %v1779 = vpop.f32.mrf.mxu0
    %v1780 = vpop.f32.mrf.mxu0
    %1781 = vdwg.mxu0
    %1783 = vrot.lane.b32.xlu0 %v1678, 96
    %v1784 = vpop.permute.xlu0 %1783
    %v1786 = vsel %vm352, %v1678, 0
    %v1789 = vsel %vm352, %v1784, 0
    %1791 = vmatprep.subr.bf16.mxu0 0
    %1792 = vmatpush1.bf16.xpose.msra.mxu0 0
    %1793 = vmatprep.subr.bf16.mxu0 0
    %1794 = vmatpush1.bf16.xpose.msra.mxu0 0
    %1795 = vmatprep.subr.bf16.mxu0 0
    %1796 = vmatpush1.bf16.xpose.msra.mxu0 0
    %1797 = vmatprep.subr.bf16.mxu0 0
    %1798 = vmatpush1.bf16.xpose.msra.mxu0 0
    %1799 = vmatprep.subr.bf16.mxu0 0
    %1800 = vmatpush1.bf16.xpose.msra.mxu0 0
    %1801 = vmatprep.subr.bf16.mxu0 0
    %1802 = vmatpush1.bf16.xpose.msra.mxu0 0
    %1803 = vmatprep.subr.bf16.mxu0 0
    %1804 = vmatpush1.bf16.xpose.msra.mxu0 0
    %1805 = vmatprep.subr.bf16.mxu0 0
    %1806 = vmatpush1.bf16.xpose.msra.mxu0 %v1789
    %1807 = vmatprep.subr.bf16.mxu0 0
    %1808 = vmatpush2.bf16.xpose.msra.mxu0 0
    %1809 = vmatprep.subr.bf16.mxu0 0
    %1810 = vmatpush2.bf16.xpose.msra.mxu0 0
    %1811 = vmatprep.subr.bf16.mxu0 0
    %1812 = vmatpush2.bf16.xpose.msra.mxu0 0
    %1813 = vmatprep.subr.bf16.mxu0 0
    %1814 = vmatpush2.bf16.xpose.msra.mxu0 0
    %1815 = vmatprep.subr.bf16.mxu0 0
    %1816 = vmatpush2.bf16.xpose.msra.mxu0 0
    %1817 = vmatprep.subr.bf16.mxu0 0
    %1818 = vmatpush2.bf16.xpose.msra.mxu0 0
    %1819 = vmatprep.subr.bf16.mxu0 0
    %1820 = vmatpush2.bf16.xpose.msra.mxu0 0
    %1821 = vmatprep.subr.bf16.mxu0 0
    %1822 = vmatpush2.bf16.xpose.msra.mxu0 0
    %1823 = vmatprep.mubr.bf16.mxu0 0
    %1824 = vmatmul.mubr.bf16.gmra.mxu0 %v1786
    %v1825 = vpop.f32.mrf.mxu0
    %v1826 = vadd.f32 %v246, %v1825
    %v1827 = vpop.f32.mrf.mxu0
    %v1828 = vpop.f32.mrf.mxu0
    %v1829 = vpop.f32.mrf.mxu0
    %1830 = vdwg.mxu0
    %1832 = vrot.lane.b32.xlu0 %v1679, 96
    %v1833 = vpop.permute.xlu0 %1832
    %v1835 = vsel %vm352, %v1679, 0
    %v1838 = vsel %vm352, %v1833, 0
    %1840 = vmatprep.subr.bf16.mxu0 0
    %1841 = vmatpush1.bf16.xpose.msra.mxu0 0
    %1842 = vmatprep.subr.bf16.mxu0 0
    %1843 = vmatpush1.bf16.xpose.msra.mxu0 0
    %1844 = vmatprep.subr.bf16.mxu0 0
    %1845 = vmatpush1.bf16.xpose.msra.mxu0 0
    %1846 = vmatprep.subr.bf16.mxu0 0
    %1847 = vmatpush1.bf16.xpose.msra.mxu0 0
    %1848 = vmatprep.subr.bf16.mxu0 0
    %1849 = vmatpush1.bf16.xpose.msra.mxu0 0
    %1850 = vmatprep.subr.bf16.mxu0 0
    %1851 = vmatpush1.bf16.xpose.msra.mxu0 0
    %1852 = vmatprep.subr.bf16.mxu0 0
    %1853 = vmatpush1.bf16.xpose.msra.mxu0 0
    %1854 = vmatprep.subr.bf16.mxu0 0
    %1855 = vmatpush1.bf16.xpose.msra.mxu0 %v1838
    %1856 = vmatprep.subr.bf16.mxu0 0
    %1857 = vmatpush2.bf16.xpose.msra.mxu0 0
    %1858 = vmatprep.subr.bf16.mxu0 0
    %1859 = vmatpush2.bf16.xpose.msra.mxu0 0
    %1860 = vmatprep.subr.bf16.mxu0 0
    %1861 = vmatpush2.bf16.xpose.msra.mxu0 0
    %1862 = vmatprep.subr.bf16.mxu0 0
    %1863 = vmatpush2.bf16.xpose.msra.mxu0 0
    %1864 = vmatprep.subr.bf16.mxu0 0
    %1865 = vmatpush2.bf16.xpose.msra.mxu0 0
    %1866 = vmatprep.subr.bf16.mxu0 0
    %1867 = vmatpush2.bf16.xpose.msra.mxu0 0
    %1868 = vmatprep.subr.bf16.mxu0 0
    %1869 = vmatpush2.bf16.xpose.msra.mxu0 0
    %1870 = vmatprep.subr.bf16.mxu0 0
    %1871 = vmatpush2.bf16.xpose.msra.mxu0 0
    %1872 = vmatprep.mubr.bf16.mxu0 0
    %1873 = vmatmul.mubr.bf16.gmra.mxu0 %v1835
    %v1874 = vpop.f32.mrf.mxu0
    %v1875 = vadd.f32 %v250, %v1874
    %v1876 = vpop.f32.mrf.mxu0
    %v1877 = vpop.f32.mrf.mxu0
    %v1878 = vpop.f32.mrf.mxu0
    %1879 = vdwg.mxu0
    %1881 = vrot.lane.b32.xlu0 %v1680, 96
    %v1882 = vpop.permute.xlu0 %1881
    %v1884 = vsel %vm352, %v1680, 0
    %v1887 = vsel %vm352, %v1882, 0
    %1889 = vmatprep.subr.bf16.mxu0 0
    %1890 = vmatpush1.bf16.xpose.msra.mxu0 0
    %1891 = vmatprep.subr.bf16.mxu0 0
    %1892 = vmatpush1.bf16.xpose.msra.mxu0 0
    %1893 = vmatprep.subr.bf16.mxu0 0
    %1894 = vmatpush1.bf16.xpose.msra.mxu0 0
    %1895 = vmatprep.subr.bf16.mxu0 0
    %1896 = vmatpush1.bf16.xpose.msra.mxu0 0
    %1897 = vmatprep.subr.bf16.mxu0 0
    %1898 = vmatpush1.bf16.xpose.msra.mxu0 0
    %1899 = vmatprep.subr.bf16.mxu0 0
    %1900 = vmatpush1.bf16.xpose.msra.mxu0 0
    %1901 = vmatprep.subr.bf16.mxu0 0
    %1902 = vmatpush1.bf16.xpose.msra.mxu0 0
    %1903 = vmatprep.subr.bf16.mxu0 0
    %1904 = vmatpush1.bf16.xpose.msra.mxu0 %v1887
    %1905 = vmatprep.subr.bf16.mxu0 0
    %1906 = vmatpush2.bf16.xpose.msra.mxu0 0
    %1907 = vmatprep.subr.bf16.mxu0 0
    %1908 = vmatpush2.bf16.xpose.msra.mxu0 0
    %1909 = vmatprep.subr.bf16.mxu0 0
    %1910 = vmatpush2.bf16.xpose.msra.mxu0 0
    %1911 = vmatprep.subr.bf16.mxu0 0
    %1912 = vmatpush2.bf16.xpose.msra.mxu0 0
    %1913 = vmatprep.subr.bf16.mxu0 0
    %1914 = vmatpush2.bf16.xpose.msra.mxu0 0
    %1915 = vmatprep.subr.bf16.mxu0 0
    %1916 = vmatpush2.bf16.xpose.msra.mxu0 0
    %1917 = vmatprep.subr.bf16.mxu0 0
    %1918 = vmatpush2.bf16.xpose.msra.mxu0 0
    %1919 = vmatprep.subr.bf16.mxu0 0
    %1920 = vmatpush2.bf16.xpose.msra.mxu0 0
    %1921 = vmatprep.mubr.bf16.mxu0 0
    %1922 = vmatmul.mubr.bf16.gmra.mxu0 %v1884
    %v1923 = vpop.f32.mrf.mxu0
    %v1924 = vadd.f32 %v246, %v1923
    %v1925 = vpop.f32.mrf.mxu0
    %v1926 = vpop.f32.mrf.mxu0
    %v1927 = vpop.f32.mrf.mxu0
    %1928 = vdwg.mxu0
    %1930 = vrot.lane.b32.xlu0 %v1681, 96
    %v1931 = vpop.permute.xlu0 %1930
    %v1933 = vsel %vm352, %v1681, 0
    %v1936 = vsel %vm352, %v1931, 0
    %1938 = vmatprep.subr.bf16.mxu0 0
    %1939 = vmatpush1.bf16.xpose.msra.mxu0 0
    %1940 = vmatprep.subr.bf16.mxu0 0
    %1941 = vmatpush1.bf16.xpose.msra.mxu0 0
    %1942 = vmatprep.subr.bf16.mxu0 0
    %1943 = vmatpush1.bf16.xpose.msra.mxu0 0
    %1944 = vmatprep.subr.bf16.mxu0 0
    %1945 = vmatpush1.bf16.xpose.msra.mxu0 0
    %1946 = vmatprep.subr.bf16.mxu0 0
    %1947 = vmatpush1.bf16.xpose.msra.mxu0 0
    %1948 = vmatprep.subr.bf16.mxu0 0
    %1949 = vmatpush1.bf16.xpose.msra.mxu0 0
    %1950 = vmatprep.subr.bf16.mxu0 0
    %1951 = vmatpush1.bf16.xpose.msra.mxu0 0
    %1952 = vmatprep.subr.bf16.mxu0 0
    %1953 = vmatpush1.bf16.xpose.msra.mxu0 %v1936
    %1954 = vmatprep.subr.bf16.mxu0 0
    %1955 = vmatpush2.bf16.xpose.msra.mxu0 0
    %1956 = vmatprep.subr.bf16.mxu0 0
    %1957 = vmatpush2.bf16.xpose.msra.mxu0 0
    %1958 = vmatprep.subr.bf16.mxu0 0
    %1959 = vmatpush2.bf16.xpose.msra.mxu0 0
    %1960 = vmatprep.subr.bf16.mxu0 0
    %1961 = vmatpush2.bf16.xpose.msra.mxu0 0
    %1962 = vmatprep.subr.bf16.mxu0 0
    %1963 = vmatpush2.bf16.xpose.msra.mxu0 0
    %1964 = vmatprep.subr.bf16.mxu0 0
    %1965 = vmatpush2.bf16.xpose.msra.mxu0 0
    %1966 = vmatprep.subr.bf16.mxu0 0
    %1967 = vmatpush2.bf16.xpose.msra.mxu0 0
    %1968 = vmatprep.subr.bf16.mxu0 0
    %1969 = vmatpush2.bf16.xpose.msra.mxu0 0
    %1970 = vmatprep.mubr.bf16.mxu0 0
    %1971 = vmatmul.mubr.bf16.gmra.mxu0 %v1933
    %v1972 = vpop.f32.mrf.mxu0
    %v1973 = vadd.f32 %v250, %v1972
    %v1974 = vpop.f32.mrf.mxu0
    %v1975 = vpop.f32.mrf.mxu0
    %v1976 = vpop.f32.mrf.mxu0
    %1977 = vdwg.mxu0
    %1979 = vrot.lane.b32.xlu0 %v1682, 96
    %v1980 = vpop.permute.xlu0 %1979
    %v1982 = vsel %vm352, %v1682, 0
    %v1985 = vsel %vm352, %v1980, 0
    %1987 = vmatprep.subr.bf16.mxu0 0
    %1988 = vmatpush1.bf16.xpose.msra.mxu0 0
    %1989 = vmatprep.subr.bf16.mxu0 0
    %1990 = vmatpush1.bf16.xpose.msra.mxu0 0
    %1991 = vmatprep.subr.bf16.mxu0 0
    %1992 = vmatpush1.bf16.xpose.msra.mxu0 0
    %1993 = vmatprep.subr.bf16.mxu0 0
    %1994 = vmatpush1.bf16.xpose.msra.mxu0 0
    %1995 = vmatprep.subr.bf16.mxu0 0
    %1996 = vmatpush1.bf16.xpose.msra.mxu0 0
    %1997 = vmatprep.subr.bf16.mxu0 0
    %1998 = vmatpush1.bf16.xpose.msra.mxu0 0
    %1999 = vmatprep.subr.bf16.mxu0 0
    %2000 = vmatpush1.bf16.xpose.msra.mxu0 0
    %2001 = vmatprep.subr.bf16.mxu0 0
    %2002 = vmatpush1.bf16.xpose.msra.mxu0 %v1985
    %2003 = vmatprep.subr.bf16.mxu0 0
    %2004 = vmatpush2.bf16.xpose.msra.mxu0 0
    %2005 = vmatprep.subr.bf16.mxu0 0
    %2006 = vmatpush2.bf16.xpose.msra.mxu0 0
    %2007 = vmatprep.subr.bf16.mxu0 0
    %2008 = vmatpush2.bf16.xpose.msra.mxu0 0
    %2009 = vmatprep.subr.bf16.mxu0 0
    %2010 = vmatpush2.bf16.xpose.msra.mxu0 0
    %2011 = vmatprep.subr.bf16.mxu0 0
    %2012 = vmatpush2.bf16.xpose.msra.mxu0 0
    %2013 = vmatprep.subr.bf16.mxu0 0
    %2014 = vmatpush2.bf16.xpose.msra.mxu0 0
    %2015 = vmatprep.subr.bf16.mxu0 0
    %2016 = vmatpush2.bf16.xpose.msra.mxu0 0
    %2017 = vmatprep.subr.bf16.mxu0 0
    %2018 = vmatpush2.bf16.xpose.msra.mxu0 0
    %2019 = vmatprep.mubr.bf16.mxu0 0
    %2020 = vmatmul.mubr.bf16.gmra.mxu0 %v1982
    %v2021 = vpop.f32.mrf.mxu0
    %v2022 = vadd.f32 %v246, %v2021
    %v2023 = vpop.f32.mrf.mxu0
    %v2024 = vpop.f32.mrf.mxu0
    %v2025 = vpop.f32.mrf.mxu0
    %2026 = vdwg.mxu0
    %2028 = vrot.lane.b32.xlu0 %v1683, 96
    %v2029 = vpop.permute.xlu0 %2028
    %v2031 = vsel %vm352, %v1683, 0
    %v2034 = vsel %vm352, %v2029, 0
    %2036 = vmatprep.subr.bf16.mxu0 0
    %2037 = vmatpush1.bf16.xpose.msra.mxu0 0
    %2038 = vmatprep.subr.bf16.mxu0 0
    %2039 = vmatpush1.bf16.xpose.msra.mxu0 0
    %2040 = vmatprep.subr.bf16.mxu0 0
    %2041 = vmatpush1.bf16.xpose.msra.mxu0 0
    %2042 = vmatprep.subr.bf16.mxu0 0
    %2043 = vmatpush1.bf16.xpose.msra.mxu0 0
    %2044 = vmatprep.subr.bf16.mxu0 0
    %2045 = vmatpush1.bf16.xpose.msra.mxu0 0
    %2046 = vmatprep.subr.bf16.mxu0 0
    %2047 = vmatpush1.bf16.xpose.msra.mxu0 0
    %2048 = vmatprep.subr.bf16.mxu0 0
    %2049 = vmatpush1.bf16.xpose.msra.mxu0 0
    %2050 = vmatprep.subr.bf16.mxu0 0
    %2051 = vmatpush1.bf16.xpose.msra.mxu0 %v2034
    %2052 = vmatprep.subr.bf16.mxu0 0
    %2053 = vmatpush2.bf16.xpose.msra.mxu0 0
    %2054 = vmatprep.subr.bf16.mxu0 0
    %2055 = vmatpush2.bf16.xpose.msra.mxu0 0
    %2056 = vmatprep.subr.bf16.mxu0 0
    %2057 = vmatpush2.bf16.xpose.msra.mxu0 0
    %2058 = vmatprep.subr.bf16.mxu0 0
    %2059 = vmatpush2.bf16.xpose.msra.mxu0 0
    %2060 = vmatprep.subr.bf16.mxu0 0
    %2061 = vmatpush2.bf16.xpose.msra.mxu0 0
    %2062 = vmatprep.subr.bf16.mxu0 0
    %2063 = vmatpush2.bf16.xpose.msra.mxu0 0
    %2064 = vmatprep.subr.bf16.mxu0 0
    %2065 = vmatpush2.bf16.xpose.msra.mxu0 0
    %2066 = vmatprep.subr.bf16.mxu0 0
    %2067 = vmatpush2.bf16.xpose.msra.mxu0 0
    %2068 = vmatprep.mubr.bf16.mxu0 0
    %2069 = vmatmul.mubr.bf16.gmra.mxu0 %v2031
    %v2070 = vpop.f32.mrf.mxu0
    %v2071 = vadd.f32 %v250, %v2070
    %v2072 = vpop.f32.mrf.mxu0
    %v2073 = vpop.f32.mrf.mxu0
    %v2074 = vpop.f32.mrf.mxu0
    %2075 = vdwg.mxu0
    %v2076 = vsel %vm352, %v1728, -inf
    %2077 = vmax.xlane.f32.xlu0 %v2076
    %v2078 = vpop.xlane.xlu0 %2077
    %v2079 = vsel %vm352, %v1777, -inf
    %2080 = vmax.xlane.f32.xlu0 %v2079
    %v2081 = vpop.xlane.xlu0 %2080
    %v2082 = vsel %vm352, %v1826, -inf
    %2083 = vmax.xlane.f32.xlu0 %v2082
    %v2084 = vpop.xlane.xlu0 %2083
    %v2085 = vsel %vm352, %v1875, -inf
    %2086 = vmax.xlane.f32.xlu0 %v2085
    %v2087 = vpop.xlane.xlu0 %2086
    %v2088 = vsel %vm352, %v1924, -inf
    %2089 = vmax.xlane.f32.xlu0 %v2088
    %v2090 = vpop.xlane.xlu0 %2089
    %v2091 = vsel %vm352, %v1973, -inf
    %2092 = vmax.xlane.f32.xlu0 %v2091
    %v2093 = vpop.xlane.xlu0 %2092
    %v2094 = vsel %vm352, %v2022, -inf
    %2095 = vmax.xlane.f32.xlu0 %v2094
    %v2096 = vpop.xlane.xlu0 %2095
    %v2097 = vsel %vm352, %v2071, -inf
    %2098 = vmax.xlane.f32.xlu0 %v2097
    %v2099 = vpop.xlane.xlu0 %2098
    %v2100 = vsub.f32 %v1728, %v2078
    %v2101 = vsub.f32 %v1777, %v2081
    %v2102 = vsub.f32 %v1826, %v2084
    %v2103 = vsub.f32 %v1875, %v2087
    %v2104 = vsub.f32 %v1924, %v2090
    %v2105 = vsub.f32 %v1973, %v2093
    %v2106 = vsub.f32 %v2022, %v2096
    %v2107 = vsub.f32 %v2071, %v2099
    %v2108 = vmul.f32 %v2100, 1.442695
    %v2109 = vpow.pop %v2108
    %v2110 = vmul.f32 %v2101, 1.442695
    %v2111 = vpow.pop %v2110
    %v2112 = vmul.f32 %v2102, 1.442695
    %v2113 = vpow.pop %v2112
    %v2114 = vmul.f32 %v2103, 1.442695
    %v2115 = vpow.pop %v2114
    %v2116 = vmul.f32 %v2104, 1.442695
    %v2117 = vpow.pop %v2116
    %v2118 = vmul.f32 %v2105, 1.442695
    %v2119 = vpow.pop %v2118
    %v2120 = vmul.f32 %v2106, 1.442695
    %v2121 = vpow.pop %v2120
    %v2122 = vmul.f32 %v2107, 1.442695
    %v2123 = vpow.pop %v2122
    %v2124 = vsel %vm352, %v2109, 0.0
    %2125 = vadd.xlane.f32.xlu0 %v2124
    %v2126 = vpop.xlane.xlu0 %2125
    %v2127 = vsel %vm352, %v2111, 0.0
    %2128 = vadd.xlane.f32.xlu0 %v2127
    %v2129 = vpop.xlane.xlu0 %2128
    %v2130 = vsel %vm352, %v2113, 0.0
    %2131 = vadd.xlane.f32.xlu0 %v2130
    %v2132 = vpop.xlane.xlu0 %2131
    %v2133 = vsel %vm352, %v2115, 0.0
    %2134 = vadd.xlane.f32.xlu0 %v2133
    %v2135 = vpop.xlane.xlu0 %2134
    %v2136 = vsel %vm352, %v2117, 0.0
    %2137 = vadd.xlane.f32.xlu0 %v2136
    %v2138 = vpop.xlane.xlu0 %2137
    %v2139 = vsel %vm352, %v2119, 0.0
    %2140 = vadd.xlane.f32.xlu0 %v2139
    %v2141 = vpop.xlane.xlu0 %2140
    %v2142 = vsel %vm352, %v2121, 0.0
    %2143 = vadd.xlane.f32.xlu0 %v2142
    %v2144 = vpop.xlane.xlu0 %2143
    %v2145 = vsel %vm352, %v2123, 0.0
    %2146 = vadd.xlane.f32.xlu0 %v2145
    %v2147 = vpop.xlane.xlu0 %2146
    %v2148 = vrcp.pop %v2126
    %v2149 = vrcp.pop %v2129
    %v2150 = vrcp.pop %v2132
    %v2151 = vrcp.pop %v2135
    %v2152 = vrcp.pop %v2138
    %v2153 = vrcp.pop %v2141
    %v2154 = vrcp.pop %v2144
    %v2155 = vrcp.pop %v2147
    %v2156 = vmul.f32 %v2109, %v2148
    %v2157 = vmul.f32 %v2111, %v2149
    %v2158 = vmul.f32 %v2113, %v2150
    %v2159 = vmul.f32 %v2115, %v2151
    %v2160 = vmul.f32 %v2117, %v2152
    %v2161 = vmul.f32 %v2119, %v2153
    %v2162 = vmul.f32 %v2121, %v2154
    %v2163 = vmul.f32 %v2123, %v2155
    %v2164 = vpack.c.bf16 %v2156, %v2156
    %v2165 = vpack.c.bf16 %v2157, %v2157
    %v2166 = vpack.c.bf16 %v2158, %v2158
    %v2167 = vpack.c.bf16 %v2159, %v2159
    %v2168 = vpack.c.bf16 %v2160, %v2160
    %v2169 = vpack.c.bf16 %v2161, %v2161
    %v2170 = vpack.c.bf16 %v2162, %v2162
    %v2171 = vpack.c.bf16 %v2163, %v2163
    %2172 = vrot.lane.b32.xlu0 %v1676, 64
    %v2173 = vpop.permute.xlu0 %2172
    %v2175 = vsel %vm352, %v2164, 0
    %v2178 = vsel %vm843, %v2173, 0
    %2180 = vmatprep.subr.bf16.mxu0 0
    %2181 = vmatpush1.bf16.msra.mxu0 0
    %2182 = vmatprep.subr.bf16.mxu0 0
    %2183 = vmatpush1.bf16.msra.mxu0 0
    %2184 = vmatprep.subr.bf16.mxu0 0
    %2185 = vmatpush1.bf16.msra.mxu0 0
    %2186 = vmatprep.subr.bf16.mxu0 0
    %2187 = vmatpush1.bf16.msra.mxu0 0
    %2188 = vmatprep.subr.bf16.mxu0 0
    %2189 = vmatpush1.bf16.msra.mxu0 0
    %2190 = vmatprep.subr.bf16.mxu0 0
    %2191 = vmatpush1.bf16.msra.mxu0 0
    %2192 = vmatprep.subr.bf16.mxu0 0
    %2193 = vmatpush1.bf16.msra.mxu0 0
    %2194 = vmatprep.subr.bf16.mxu0 0
    %2195 = vmatpush1.bf16.msra.mxu0 %v2178
    %2196 = vmatprep.subr.bf16.mxu0 0
    %2197 = vmatpush2.bf16.msra.mxu0 0
    %2198 = vmatprep.subr.bf16.mxu0 0
    %2199 = vmatpush2.bf16.msra.mxu0 0
    %2200 = vmatprep.subr.bf16.mxu0 0
    %2201 = vmatpush2.bf16.msra.mxu0 0
    %2202 = vmatprep.subr.bf16.mxu0 0
    %2203 = vmatpush2.bf16.msra.mxu0 0
    %2204 = vmatprep.subr.bf16.mxu0 0
    %2205 = vmatpush2.bf16.msra.mxu0 0
    %2206 = vmatprep.subr.bf16.mxu0 0
    %2207 = vmatpush2.bf16.msra.mxu0 0
    %2208 = vmatprep.subr.bf16.mxu0 0
    %2209 = vmatpush2.bf16.msra.mxu0 0
    %2210 = vmatprep.subr.bf16.mxu0 0
    %2211 = vmatpush2.bf16.msra.mxu0 0
    %2212 = vmatprep.mubr.bf16.mxu0 0
    %2213 = vmatmul.mubr.bf16.gmra.mxu0 %v2175
    %v2214 = vpop.f32.mrf.mxu0
    %v2215 = vadd.f32 0.0, %v2214
    %v2216 = vpop.f32.mrf.mxu0
    %v2217 = vpop.f32.mrf.mxu0
    %v2218 = vpop.f32.mrf.mxu0
    %2219 = vdwg.mxu0
    %2220 = vrot.lane.b32.xlu0 %v1677, 64
    %v2221 = vpop.permute.xlu0 %2220
    %v2223 = vsel %vm352, %v2165, 0
    %v2226 = vsel %vm843, %v2221, 0
    %2228 = vmatprep.subr.bf16.mxu0 0
    %2229 = vmatpush1.bf16.msra.mxu0 0
    %2230 = vmatprep.subr.bf16.mxu0 0
    %2231 = vmatpush1.bf16.msra.mxu0 0
    %2232 = vmatprep.subr.bf16.mxu0 0
    %2233 = vmatpush1.bf16.msra.mxu0 0
    %2234 = vmatprep.subr.bf16.mxu0 0
    %2235 = vmatpush1.bf16.msra.mxu0 0
    %2236 = vmatprep.subr.bf16.mxu0 0
    %2237 = vmatpush1.bf16.msra.mxu0 0
    %2238 = vmatprep.subr.bf16.mxu0 0
    %2239 = vmatpush1.bf16.msra.mxu0 0
    %2240 = vmatprep.subr.bf16.mxu0 0
    %2241 = vmatpush1.bf16.msra.mxu0 0
    %2242 = vmatprep.subr.bf16.mxu0 0
    %2243 = vmatpush1.bf16.msra.mxu0 %v2226
    %2244 = vmatprep.subr.bf16.mxu0 0
    %2245 = vmatpush2.bf16.msra.mxu0 0
    %2246 = vmatprep.subr.bf16.mxu0 0
    %2247 = vmatpush2.bf16.msra.mxu0 0
    %2248 = vmatprep.subr.bf16.mxu0 0
    %2249 = vmatpush2.bf16.msra.mxu0 0
    %2250 = vmatprep.subr.bf16.mxu0 0
    %2251 = vmatpush2.bf16.msra.mxu0 0
    %2252 = vmatprep.subr.bf16.mxu0 0
    %2253 = vmatpush2.bf16.msra.mxu0 0
    %2254 = vmatprep.subr.bf16.mxu0 0
    %2255 = vmatpush2.bf16.msra.mxu0 0
    %2256 = vmatprep.subr.bf16.mxu0 0
    %2257 = vmatpush2.bf16.msra.mxu0 0
    %2258 = vmatprep.subr.bf16.mxu0 0
    %2259 = vmatpush2.bf16.msra.mxu0 0
    %2260 = vmatprep.mubr.bf16.mxu0 0
    %2261 = vmatmul.mubr.bf16.gmra.mxu0 %v2223
    %v2262 = vpop.f32.mrf.mxu0
    %v2263 = vadd.f32 0.0, %v2262
    %v2264 = vpop.f32.mrf.mxu0
    %v2265 = vpop.f32.mrf.mxu0
    %v2266 = vpop.f32.mrf.mxu0
    %2267 = vdwg.mxu0
    %2268 = vrot.lane.b32.xlu0 %v1678, 64
    %v2269 = vpop.permute.xlu0 %2268
    %v2271 = vsel %vm352, %v2166, 0
    %v2274 = vsel %vm843, %v2269, 0
    %2276 = vmatprep.subr.bf16.mxu0 0
    %2277 = vmatpush1.bf16.msra.mxu0 0
    %2278 = vmatprep.subr.bf16.mxu0 0
    %2279 = vmatpush1.bf16.msra.mxu0 0
    %2280 = vmatprep.subr.bf16.mxu0 0
    %2281 = vmatpush1.bf16.msra.mxu0 0
    %2282 = vmatprep.subr.bf16.mxu0 0
    %2283 = vmatpush1.bf16.msra.mxu0 0
    %2284 = vmatprep.subr.bf16.mxu0 0
    %2285 = vmatpush1.bf16.msra.mxu0 0
    %2286 = vmatprep.subr.bf16.mxu0 0
    %2287 = vmatpush1.bf16.msra.mxu0 0
    %2288 = vmatprep.subr.bf16.mxu0 0
    %2289 = vmatpush1.bf16.msra.mxu0 0
    %2290 = vmatprep.subr.bf16.mxu0 0
    %2291 = vmatpush1.bf16.msra.mxu0 %v2274
    %2292 = vmatprep.subr.bf16.mxu0 0
    %2293 = vmatpush2.bf16.msra.mxu0 0
    %2294 = vmatprep.subr.bf16.mxu0 0
    %2295 = vmatpush2.bf16.msra.mxu0 0
    %2296 = vmatprep.subr.bf16.mxu0 0
    %2297 = vmatpush2.bf16.msra.mxu0 0
    %2298 = vmatprep.subr.bf16.mxu0 0
    %2299 = vmatpush2.bf16.msra.mxu0 0
    %2300 = vmatprep.subr.bf16.mxu0 0
    %2301 = vmatpush2.bf16.msra.mxu0 0
    %2302 = vmatprep.subr.bf16.mxu0 0
    %2303 = vmatpush2.bf16.msra.mxu0 0
    %2304 = vmatprep.subr.bf16.mxu0 0
    %2305 = vmatpush2.bf16.msra.mxu0 0
    %2306 = vmatprep.subr.bf16.mxu0 0
    %2307 = vmatpush2.bf16.msra.mxu0 0
    %2308 = vmatprep.mubr.bf16.mxu0 0
    %2309 = vmatmul.mubr.bf16.gmra.mxu0 %v2271
    %v2310 = vpop.f32.mrf.mxu0
    %v2311 = vadd.f32 0.0, %v2310
    %v2312 = vpop.f32.mrf.mxu0
    %v2313 = vpop.f32.mrf.mxu0
    %v2314 = vpop.f32.mrf.mxu0
    %2315 = vdwg.mxu0
    %2316 = vrot.lane.b32.xlu0 %v1679, 64
    %v2317 = vpop.permute.xlu0 %2316
    %v2319 = vsel %vm352, %v2167, 0
    %v2322 = vsel %vm843, %v2317, 0
    %2324 = vmatprep.subr.bf16.mxu0 0
    %2325 = vmatpush1.bf16.msra.mxu0 0
    %2326 = vmatprep.subr.bf16.mxu0 0
    %2327 = vmatpush1.bf16.msra.mxu0 0
    %2328 = vmatprep.subr.bf16.mxu0 0
    %2329 = vmatpush1.bf16.msra.mxu0 0
    %2330 = vmatprep.subr.bf16.mxu0 0
    %2331 = vmatpush1.bf16.msra.mxu0 0
    %2332 = vmatprep.subr.bf16.mxu0 0
    %2333 = vmatpush1.bf16.msra.mxu0 0
    %2334 = vmatprep.subr.bf16.mxu0 0
    %2335 = vmatpush1.bf16.msra.mxu0 0
    %2336 = vmatprep.subr.bf16.mxu0 0
    %2337 = vmatpush1.bf16.msra.mxu0 0
    %2338 = vmatprep.subr.bf16.mxu0 0
    %2339 = vmatpush1.bf16.msra.mxu0 %v2322
    %2340 = vmatprep.subr.bf16.mxu0 0
    %2341 = vmatpush2.bf16.msra.mxu0 0
    %2342 = vmatprep.subr.bf16.mxu0 0
    %2343 = vmatpush2.bf16.msra.mxu0 0
    %2344 = vmatprep.subr.bf16.mxu0 0
    %2345 = vmatpush2.bf16.msra.mxu0 0
    %2346 = vmatprep.subr.bf16.mxu0 0
    %2347 = vmatpush2.bf16.msra.mxu0 0
    %2348 = vmatprep.subr.bf16.mxu0 0
    %2349 = vmatpush2.bf16.msra.mxu0 0
    %2350 = vmatprep.subr.bf16.mxu0 0
    %2351 = vmatpush2.bf16.msra.mxu0 0
    %2352 = vmatprep.subr.bf16.mxu0 0
    %2353 = vmatpush2.bf16.msra.mxu0 0
    %2354 = vmatprep.subr.bf16.mxu0 0
    %2355 = vmatpush2.bf16.msra.mxu0 0
    %2356 = vmatprep.mubr.bf16.mxu0 0
    %2357 = vmatmul.mubr.bf16.gmra.mxu0 %v2319
    %v2358 = vpop.f32.mrf.mxu0
    %v2359 = vadd.f32 0.0, %v2358
    %v2360 = vpop.f32.mrf.mxu0
    %v2361 = vpop.f32.mrf.mxu0
    %v2362 = vpop.f32.mrf.mxu0
    %2363 = vdwg.mxu0
    %2364 = vrot.lane.b32.xlu0 %v1680, 64
    %v2365 = vpop.permute.xlu0 %2364
    %v2367 = vsel %vm352, %v2168, 0
    %v2370 = vsel %vm843, %v2365, 0
    %2372 = vmatprep.subr.bf16.mxu0 0
    %2373 = vmatpush1.bf16.msra.mxu0 0
    %2374 = vmatprep.subr.bf16.mxu0 0
    %2375 = vmatpush1.bf16.msra.mxu0 0
    %2376 = vmatprep.subr.bf16.mxu0 0
    %2377 = vmatpush1.bf16.msra.mxu0 0
    %2378 = vmatprep.subr.bf16.mxu0 0
    %2379 = vmatpush1.bf16.msra.mxu0 0
    %2380 = vmatprep.subr.bf16.mxu0 0
    %2381 = vmatpush1.bf16.msra.mxu0 0
    %2382 = vmatprep.subr.bf16.mxu0 0
    %2383 = vmatpush1.bf16.msra.mxu0 0
    %2384 = vmatprep.subr.bf16.mxu0 0
    %2385 = vmatpush1.bf16.msra.mxu0 0
    %2386 = vmatprep.subr.bf16.mxu0 0
    %2387 = vmatpush1.bf16.msra.mxu0 %v2370
    %2388 = vmatprep.subr.bf16.mxu0 0
    %2389 = vmatpush2.bf16.msra.mxu0 0
    %2390 = vmatprep.subr.bf16.mxu0 0
    %2391 = vmatpush2.bf16.msra.mxu0 0
    %2392 = vmatprep.subr.bf16.mxu0 0
    %2393 = vmatpush2.bf16.msra.mxu0 0
    %2394 = vmatprep.subr.bf16.mxu0 0
    %2395 = vmatpush2.bf16.msra.mxu0 0
    %2396 = vmatprep.subr.bf16.mxu0 0
    %2397 = vmatpush2.bf16.msra.mxu0 0
    %2398 = vmatprep.subr.bf16.mxu0 0
    %2399 = vmatpush2.bf16.msra.mxu0 0
    %2400 = vmatprep.subr.bf16.mxu0 0
    %2401 = vmatpush2.bf16.msra.mxu0 0
    %2402 = vmatprep.subr.bf16.mxu0 0
    %2403 = vmatpush2.bf16.msra.mxu0 0
    %2404 = vmatprep.mubr.bf16.mxu0 0
    %2405 = vmatmul.mubr.bf16.gmra.mxu0 %v2367
    %v2406 = vpop.f32.mrf.mxu0
    %v2407 = vadd.f32 0.0, %v2406
    %v2408 = vpop.f32.mrf.mxu0
    %v2409 = vpop.f32.mrf.mxu0
    %v2410 = vpop.f32.mrf.mxu0
    %2411 = vdwg.mxu0
    %2412 = vrot.lane.b32.xlu0 %v1681, 64
    %v2413 = vpop.permute.xlu0 %2412
    %v2415 = vsel %vm352, %v2169, 0
    %v2418 = vsel %vm843, %v2413, 0
    %2420 = vmatprep.subr.bf16.mxu0 0
    %2421 = vmatpush1.bf16.msra.mxu0 0
    %2422 = vmatprep.subr.bf16.mxu0 0
    %2423 = vmatpush1.bf16.msra.mxu0 0
    %2424 = vmatprep.subr.bf16.mxu0 0
    %2425 = vmatpush1.bf16.msra.mxu0 0
    %2426 = vmatprep.subr.bf16.mxu0 0
    %2427 = vmatpush1.bf16.msra.mxu0 0
    %2428 = vmatprep.subr.bf16.mxu0 0
    %2429 = vmatpush1.bf16.msra.mxu0 0
    %2430 = vmatprep.subr.bf16.mxu0 0
    %2431 = vmatpush1.bf16.msra.mxu0 0
    %2432 = vmatprep.subr.bf16.mxu0 0
    %2433 = vmatpush1.bf16.msra.mxu0 0
    %2434 = vmatprep.subr.bf16.mxu0 0
    %2435 = vmatpush1.bf16.msra.mxu0 %v2418
    %2436 = vmatprep.subr.bf16.mxu0 0
    %2437 = vmatpush2.bf16.msra.mxu0 0
    %2438 = vmatprep.subr.bf16.mxu0 0
    %2439 = vmatpush2.bf16.msra.mxu0 0
    %2440 = vmatprep.subr.bf16.mxu0 0
    %2441 = vmatpush2.bf16.msra.mxu0 0
    %2442 = vmatprep.subr.bf16.mxu0 0
    %2443 = vmatpush2.bf16.msra.mxu0 0
    %2444 = vmatprep.subr.bf16.mxu0 0
    %2445 = vmatpush2.bf16.msra.mxu0 0
    %2446 = vmatprep.subr.bf16.mxu0 0
    %2447 = vmatpush2.bf16.msra.mxu0 0
    %2448 = vmatprep.subr.bf16.mxu0 0
    %2449 = vmatpush2.bf16.msra.mxu0 0
    %2450 = vmatprep.subr.bf16.mxu0 0
    %2451 = vmatpush2.bf16.msra.mxu0 0
    %2452 = vmatprep.mubr.bf16.mxu0 0
    %2453 = vmatmul.mubr.bf16.gmra.mxu0 %v2415
    %v2454 = vpop.f32.mrf.mxu0
    %v2455 = vadd.f32 0.0, %v2454
    %v2456 = vpop.f32.mrf.mxu0
    %v2457 = vpop.f32.mrf.mxu0
    %v2458 = vpop.f32.mrf.mxu0
    %2459 = vdwg.mxu0
    %2460 = vrot.lane.b32.xlu0 %v1682, 64
    %v2461 = vpop.permute.xlu0 %2460
    %v2463 = vsel %vm352, %v2170, 0
    %v2466 = vsel %vm843, %v2461, 0
    %2468 = vmatprep.subr.bf16.mxu0 0
    %2469 = vmatpush1.bf16.msra.mxu0 0
    %2470 = vmatprep.subr.bf16.mxu0 0
    %2471 = vmatpush1.bf16.msra.mxu0 0
    %2472 = vmatprep.subr.bf16.mxu0 0
    %2473 = vmatpush1.bf16.msra.mxu0 0
    %2474 = vmatprep.subr.bf16.mxu0 0
    %2475 = vmatpush1.bf16.msra.mxu0 0
    %2476 = vmatprep.subr.bf16.mxu0 0
    %2477 = vmatpush1.bf16.msra.mxu0 0
    %2478 = vmatprep.subr.bf16.mxu0 0
    %2479 = vmatpush1.bf16.msra.mxu0 0
    %2480 = vmatprep.subr.bf16.mxu0 0
    %2481 = vmatpush1.bf16.msra.mxu0 0
    %2482 = vmatprep.subr.bf16.mxu0 0
    %2483 = vmatpush1.bf16.msra.mxu0 %v2466
    %2484 = vmatprep.subr.bf16.mxu0 0
    %2485 = vmatpush2.bf16.msra.mxu0 0
    %2486 = vmatprep.subr.bf16.mxu0 0
    %2487 = vmatpush2.bf16.msra.mxu0 0
    %2488 = vmatprep.subr.bf16.mxu0 0
    %2489 = vmatpush2.bf16.msra.mxu0 0
    %2490 = vmatprep.subr.bf16.mxu0 0
    %2491 = vmatpush2.bf16.msra.mxu0 0
    %2492 = vmatprep.subr.bf16.mxu0 0
    %2493 = vmatpush2.bf16.msra.mxu0 0
    %2494 = vmatprep.subr.bf16.mxu0 0
    %2495 = vmatpush2.bf16.msra.mxu0 0
    %2496 = vmatprep.subr.bf16.mxu0 0
    %2497 = vmatpush2.bf16.msra.mxu0 0
    %2498 = vmatprep.subr.bf16.mxu0 0
    %2499 = vmatpush2.bf16.msra.mxu0 0
    %2500 = vmatprep.mubr.bf16.mxu0 0
    %2501 = vmatmul.mubr.bf16.gmra.mxu0 %v2463
    %v2502 = vpop.f32.mrf.mxu0
    %v2503 = vadd.f32 0.0, %v2502
    %v2504 = vpop.f32.mrf.mxu0
    %v2505 = vpop.f32.mrf.mxu0
    %v2506 = vpop.f32.mrf.mxu0
    %2507 = vdwg.mxu0
    %2508 = vrot.lane.b32.xlu0 %v1683, 64
    %v2509 = vpop.permute.xlu0 %2508
    %v2511 = vsel %vm352, %v2171, 0
    %v2514 = vsel %vm843, %v2509, 0
    %2516 = vmatprep.subr.bf16.mxu0 0
    %2517 = vmatpush1.bf16.msra.mxu0 0
    %2518 = vmatprep.subr.bf16.mxu0 0
    %2519 = vmatpush1.bf16.msra.mxu0 0
    %2520 = vmatprep.subr.bf16.mxu0 0
    %2521 = vmatpush1.bf16.msra.mxu0 0
    %2522 = vmatprep.subr.bf16.mxu0 0
    %2523 = vmatpush1.bf16.msra.mxu0 0
    %2524 = vmatprep.subr.bf16.mxu0 0
    %2525 = vmatpush1.bf16.msra.mxu0 0
    %2526 = vmatprep.subr.bf16.mxu0 0
    %2527 = vmatpush1.bf16.msra.mxu0 0
    %2528 = vmatprep.subr.bf16.mxu0 0
    %2529 = vmatpush1.bf16.msra.mxu0 0
    %2530 = vmatprep.subr.bf16.mxu0 0
    %2531 = vmatpush1.bf16.msra.mxu0 %v2514
    %2532 = vmatprep.subr.bf16.mxu0 0
    %2533 = vmatpush2.bf16.msra.mxu0 0
    %2534 = vmatprep.subr.bf16.mxu0 0
    %2535 = vmatpush2.bf16.msra.mxu0 0
    %2536 = vmatprep.subr.bf16.mxu0 0
    %2537 = vmatpush2.bf16.msra.mxu0 0
    %2538 = vmatprep.subr.bf16.mxu0 0
    %2539 = vmatpush2.bf16.msra.mxu0 0
    %2540 = vmatprep.subr.bf16.mxu0 0
    %2541 = vmatpush2.bf16.msra.mxu0 0
    %2542 = vmatprep.subr.bf16.mxu0 0
    %2543 = vmatpush2.bf16.msra.mxu0 0
    %2544 = vmatprep.subr.bf16.mxu0 0
    %2545 = vmatpush2.bf16.msra.mxu0 0
    %2546 = vmatprep.subr.bf16.mxu0 0
    %2547 = vmatpush2.bf16.msra.mxu0 0
    %2548 = vmatprep.mubr.bf16.mxu0 0
    %2549 = vmatmul.mubr.bf16.gmra.mxu0 %v2511
    %v2550 = vpop.f32.mrf.mxu0
    %v2551 = vadd.f32 0.0, %v2550
    %v2552 = vpop.f32.mrf.mxu0
    %v2553 = vpop.f32.mrf.mxu0
    %v2554 = vpop.f32.mrf.mxu0
    %2555 = vdwg.mxu0
    %2558 = vrot.lane.b32.xlu0 %v2311, 8
    %v2559 = vpop.permute.xlu0 %2558
    %2560 = vrot.lane.b32.xlu0 %v2359, 8
    %v2561 = vpop.permute.xlu0 %2560
    %2566 = vrot.lane.b32.xlu0 %v2407, 16
    %v2567 = vpop.permute.xlu0 %2566
    %2568 = vrot.lane.b32.xlu0 %v2455, 16
    %v2569 = vpop.permute.xlu0 %2568
    %2574 = vrot.lane.b32.xlu0 %v2503, 24
    %v2575 = vpop.permute.xlu0 %2574
    %2576 = vrot.lane.b32.xlu0 %v2551, 24
    %v2577 = vpop.permute.xlu0 %2576
    %v2580 = vsel %vm352, %v2215, %v2559
    %v2581 = vsel %vm352, %v2263, %v2561
    %v2582 = vsel %vm1249, %v2580, %v2567
    %v2583 = vsel %vm1249, %v2581, %v2569
    %v2584 = vsel %vm1252, %v2582, %v2575
    %v2585 = vsel %vm1252, %v2583, %v2577
    %v2586 = vpack.c.bf16 %v2585, %v2584
    %s2587 = scalar_lea.vmem %s8, 16
    %v2588 = vld [vmem:[%s2587] sm:$0xf]
    %v2589 = vld [vmem:[%s2587 + $0x4] sm:$0xf]
    %v2590 = vld [vmem:[%s2587 + $0x8] sm:$0xf]
    %v2591 = vld [vmem:[%s2587 + $0xc] sm:$0xf]
    %s2592 = scalar_lea.vmem %s9, 1
    %v2593 = vld [vmem:[%s2592] sm:$0x1]
    %v2595 = vlaneseq
    %v2596 = vshrl.u32 %v2595, 7
    %v2597 = vsub.s32 0, %v2596
    %v2598 = vrot.slane %v2593, %v2597
    %v2604 = vunpack.c.l.b16 %v2588
    %v2605 = vunpack.c.l.b16 %v2589
    %v2606 = vunpack.c.l.b16 %v2590
    %v2607 = vunpack.c.l.b16 %v2591
    %v2608 = vpack.c.b16 %v2605, %v2604
    %v2609 = vpack.c.b16 %v2607, %v2606
    %v2613 = vsel %vm173, %v2586, 0
    %2615 = vmatprep.subr.bf16.mxu0 0
    %2616 = vmatpush1.bf16.msra.mxu0 0
    %2617 = vmatprep.subr.bf16.mxu0 0
    %2618 = vmatpush1.bf16.msra.mxu0 0
    %2619 = vmatprep.subr.bf16.mxu0 0
    %2620 = vmatpush1.bf16.msra.mxu0 0
    %2621 = vmatprep.subr.bf16.mxu0 0
    %2622 = vmatpush1.bf16.msra.mxu0 0
    %2623 = vmatprep.subr.bf16.mxu0 0
    %2624 = vmatpush1.bf16.msra.mxu0 0
    %2625 = vmatprep.subr.bf16.mxu0 0
    %2626 = vmatpush1.bf16.msra.mxu0 0
    %2627 = vmatprep.subr.bf16.mxu0 0
    %2628 = vmatpush1.bf16.msra.mxu0 %v2609
    %2629 = vmatprep.subr.bf16.mxu0 0
    %2630 = vmatpush1.bf16.msra.mxu0 %v2608
    %2631 = vmatprep.subr.bf16.mxu0 0
    %2632 = vmatpush2.bf16.msra.mxu0 0
    %2633 = vmatprep.subr.bf16.mxu0 0
    %2634 = vmatpush2.bf16.msra.mxu0 0
    %2635 = vmatprep.subr.bf16.mxu0 0
    %2636 = vmatpush2.bf16.msra.mxu0 0
    %2637 = vmatprep.subr.bf16.mxu0 0
    %2638 = vmatpush2.bf16.msra.mxu0 0
    %2639 = vmatprep.subr.bf16.mxu0 0
    %2640 = vmatpush2.bf16.msra.mxu0 0
    %2641 = vmatprep.subr.bf16.mxu0 0
    %2642 = vmatpush2.bf16.msra.mxu0 0
    %2643 = vmatprep.subr.bf16.mxu0 0
    %2644 = vmatpush2.bf16.msra.mxu0 0
    %2645 = vmatprep.subr.bf16.mxu0 0
    %2646 = vmatpush2.bf16.msra.mxu0 0
    %2647 = vmatprep.mubr.bf16.mxu0 0
    %2648 = vmatmul.mubr.bf16.gmra.mxu0 %v2613
    %v2649 = vpop.f32.mrf.mxu0
    %v2650 = vadd.f32 %v2598, %v2649
    %v2651 = vpop.f32.mrf.mxu0
    %v2652 = vpop.f32.mrf.mxu0
    %v2653 = vadd.f32 %v2598, %v2652
    %v2654 = vpop.f32.mrf.mxu0
    %2655 = vdwg.mxu0
    %v2656 = vadd.f32 %v2650, %v1584
    %v2657 = vadd.f32 %v2653, %v1585
    %s2658 = scalar_lea.vmem %s10, 1
    %v2659 = vld [vmem:[%s2658] sm:$0x1]
    %s2660 = scalar_lea.vmem %s11, 1
    %v2661 = vld [vmem:[%s2660] sm:$0x1]
    %v2662 = vsel %vm173, %v2656, 0.0
    %2663 = vadd.xlane.f32.xlu0 %v2662
    %v2664 = vpop.xlane.xlu0 %2663
    %v2665 = vsel %vm173, %v2657, 0.0
    %2666 = vadd.xlane.f32.xlu0 %v2665
    %v2667 = vpop.xlane.xlu0 %2666
    %v2668 = vmul.f32 %v2664, %v180
    %v2669 = vmul.f32 %v2667, %v180
    %v2670 = vsub.f32 %v2656, %v2668
    %v2671 = vsub.f32 %v2657, %v2669
    %v2672 = vmul.f32 %v2670, %v2670
    %v2673 = vmul.f32 %v2671, %v2671
    %v2674 = vsel %vm173, %v2672, 0.0
    %2675 = vadd.xlane.f32.xlu0 %v2674
    %v2676 = vpop.xlane.xlu0 %2675
    %v2677 = vsel %vm173, %v2673, 0.0
    %2678 = vadd.xlane.f32.xlu0 %v2677
    %v2679 = vpop.xlane.xlu0 %2678
    %v2680 = vmul.f32 %v2676, %v180
    %v2681 = vmul.f32 %v2679, %v180
    %v2682 = vadd.f32 %v2680, 1e-12
    %v2683 = vadd.f32 %v2681, 1e-12
    %v2684 = vrsqrt.pop %v2682
    %v2685 = vrsqrt.pop %v2683
    %v2686 = vmul.f32 %v2670, %v2684
    %v2687 = vmul.f32 %v2671, %v2685
    %v2689 = vlaneseq
    %v2690 = vshrl.u32 %v2689, 7
    %v2691 = vsub.s32 0, %v2690
    %v2692 = vrot.slane %v2659, %v2691
    %v2694 = vmul.f32 %v2686, %v2692
    %v2695 = vmul.f32 %v2687, %v2692
    %v2697 = vlaneseq
    %v2698 = vshrl.u32 %v2697, 7
    %v2699 = vsub.s32 0, %v2698
    %v2700 = vrot.slane %v2661, %v2699
    %v2702 = vadd.f32 %v2694, %v2700
    %v2703 = vadd.f32 %v2695, %v2700
    %v2704 = vpack.c.bf16 %v2703, %v2702
    %s2705 = scalar_lea.vmem %s12, 16
    %v2706 = vld [vmem:[%s2705] sm:$0xf]
    %v2707 = vld [vmem:[%s2705 + $0x4] sm:$0xf]
    %v2708 = vld [vmem:[%s2705 + $0x8] sm:$0xf]
    %v2709 = vld [vmem:[%s2705 + $0xc] sm:$0xf]
    %s2710 = scalar_lea.vmem %s13, 1
    %v2711 = vld [vmem:[%s2710] sm:$0x1]
    %v2713 = vlaneseq
    %v2714 = vshrl.u32 %v2713, 7
    %v2715 = vsub.s32 0, %v2714
    %v2716 = vrot.slane %v2711, %v2715
    %v2722 = vunpack.c.l.b16 %v2706
    %v2723 = vunpack.c.l.b16 %v2707
    %v2724 = vunpack.c.l.b16 %v2708
    %v2725 = vunpack.c.l.b16 %v2709
    %v2726 = vpack.c.b16 %v2723, %v2722
    %v2727 = vpack.c.b16 %v2725, %v2724
    %v2731 = vsel %vm173, %v2704, 0
    %2733 = vmatprep.subr.bf16.mxu0 0
    %2734 = vmatpush1.bf16.msra.mxu0 0
    %2735 = vmatprep.subr.bf16.mxu0 0
    %2736 = vmatpush1.bf16.msra.mxu0 0
    %2737 = vmatprep.subr.bf16.mxu0 0
    %2738 = vmatpush1.bf16.msra.mxu0 0
    %2739 = vmatprep.subr.bf16.mxu0 0
    %2740 = vmatpush1.bf16.msra.mxu0 0
    %2741 = vmatprep.subr.bf16.mxu0 0
    %2742 = vmatpush1.bf16.msra.mxu0 0
    %2743 = vmatprep.subr.bf16.mxu0 0
    %2744 = vmatpush1.bf16.msra.mxu0 0
    %2745 = vmatprep.subr.bf16.mxu0 0
    %2746 = vmatpush1.bf16.msra.mxu0 %v2727
    %2747 = vmatprep.subr.bf16.mxu0 0
    %2748 = vmatpush1.bf16.msra.mxu0 %v2726
    %2749 = vmatprep.subr.bf16.mxu0 0
    %2750 = vmatpush2.bf16.msra.mxu0 0
    %2751 = vmatprep.subr.bf16.mxu0 0
    %2752 = vmatpush2.bf16.msra.mxu0 0
    %2753 = vmatprep.subr.bf16.mxu0 0
    %2754 = vmatpush2.bf16.msra.mxu0 0
    %2755 = vmatprep.subr.bf16.mxu0 0
    %2756 = vmatpush2.bf16.msra.mxu0 0
    %2757 = vmatprep.subr.bf16.mxu0 0
    %2758 = vmatpush2.bf16.msra.mxu0 0
    %2759 = vmatprep.subr.bf16.mxu0 0
    %2760 = vmatpush2.bf16.msra.mxu0 0
    %2761 = vmatprep.subr.bf16.mxu0 0
    %2762 = vmatpush2.bf16.msra.mxu0 0
    %2763 = vmatprep.subr.bf16.mxu0 0
    %2764 = vmatpush2.bf16.msra.mxu0 0
    %2765 = vmatprep.mubr.bf16.mxu0 0
    %2766 = vmatmul.mubr.bf16.gmra.mxu0 %v2731
    %v2767 = vpop.f32.mrf.mxu0
    %v2768 = vadd.f32 %v2716, %v2767
    %v2769 = vpop.f32.mrf.mxu0
    %v2770 = vpop.f32.mrf.mxu0
    %v2771 = vadd.f32 %v2716, %v2770
    %v2772 = vpop.f32.mrf.mxu0
    %2773 = vdwg.mxu0
    %v2774 = vmul.f32 %v2768, %v2768
    %v2775 = vmul.f32 %v2771, %v2771
    %v2776 = vmul.f32 %v2768, %v2774
    %v2777 = vmul.f32 %v2771, %v2775
    %v2778 = vmul.f32 %v2776, 0.044715
    %v2779 = vmul.f32 %v2777, 0.044715
    %v2780 = vadd.f32 %v2768, %v2778
    %v2781 = vadd.f32 %v2771, %v2779
    %v2782 = vmul.f32 %v2780, 0.7978846
    %v2783 = vmul.f32 %v2781, 0.7978846
    %v2784 = vtanh.pop %v2782
    %v2785 = vtanh.pop %v2783
    %v2786 = vadd.f32 %v2784, 1.0
    %v2787 = vadd.f32 %v2785, 1.0
    %v2788 = vmul.f32 %v2786, 0.5
    %v2789 = vmul.f32 %v2787, 0.5
    %v2790 = vmul.f32 %v2768, %v2788
    %v2791 = vmul.f32 %v2771, %v2789
    %v2792 = vpack.c.bf16 %v2791, %v2790
    %s2793 = scalar_lea.vmem %s14, 32
    %v2794 = vld [vmem:[%s2793] sm:$0xf]
    %v2795 = vld [vmem:[%s2793 + $0x4] sm:$0xf]
    %v2796 = vld [vmem:[%s2793 + $0x8] sm:$0xf]
    %v2797 = vld [vmem:[%s2793 + $0xc] sm:$0xf]
    %v2798 = vld [vmem:[%s2793 + $0x10] sm:$0xf]
    %v2799 = vld [vmem:[%s2793 + $0x14] sm:$0xf]
    %v2800 = vld [vmem:[%s2793 + $0x18] sm:$0xf]
    %v2801 = vld [vmem:[%s2793 + $0x1c] sm:$0xf]
    %s2802 = scalar_lea.vmem %s15, 1
    %v2803 = vld [vmem:[%s2802] sm:$0x1]
    %v2805 = vlaneseq
    %v2806 = vshrl.u32 %v2805, 7
    %v2807 = vsub.s32 0, %v2806
    %v2808 = vrot.slane %v2803, %v2807
    %v2818 = vunpack.c.l.b16 %v2794
    %v2819 = vunpack.c.l.b16 %v2795
    %v2820 = vunpack.c.l.b16 %v2796
    %v2821 = vunpack.c.l.b16 %v2797
    %v2822 = vunpack.c.l.b16 %v2798
    %v2823 = vunpack.c.l.b16 %v2799
    %v2824 = vunpack.c.l.b16 %v2800
    %v2825 = vunpack.c.l.b16 %v2801
    %v2826 = vpack.c.b16 %v2819, %v2818
    %v2827 = vpack.c.b16 %v2821, %v2820
    %v2828 = vpack.c.b16 %v2823, %v2822
    %v2829 = vpack.c.b16 %v2825, %v2824
    %v2835 = vsel %vm1495, %v2792, 0
    %2837 = vmatprep.subr.bf16.mxu0 0
    %2838 = vmatpush1.bf16.msra.mxu0 0
    %2839 = vmatprep.subr.bf16.mxu0 0
    %2840 = vmatpush1.bf16.msra.mxu0 0
    %2841 = vmatprep.subr.bf16.mxu0 0
    %2842 = vmatpush1.bf16.msra.mxu0 0
    %2843 = vmatprep.subr.bf16.mxu0 0
    %2844 = vmatpush1.bf16.msra.mxu0 0
    %2845 = vmatprep.subr.bf16.mxu0 0
    %2846 = vmatpush1.bf16.msra.mxu0 %v2829
    %2847 = vmatprep.subr.bf16.mxu0 0
    %2848 = vmatpush1.bf16.msra.mxu0 %v2828
    %2849 = vmatprep.subr.bf16.mxu0 0
    %2850 = vmatpush1.bf16.msra.mxu0 %v2827
    %2851 = vmatprep.subr.bf16.mxu0 0
    %2852 = vmatpush1.bf16.msra.mxu0 %v2826
    %2853 = vmatprep.subr.bf16.mxu0 0
    %2854 = vmatpush2.bf16.msra.mxu0 0
    %2855 = vmatprep.subr.bf16.mxu0 0
    %2856 = vmatpush2.bf16.msra.mxu0 0
    %2857 = vmatprep.subr.bf16.mxu0 0
    %2858 = vmatpush2.bf16.msra.mxu0 0
    %2859 = vmatprep.subr.bf16.mxu0 0
    %2860 = vmatpush2.bf16.msra.mxu0 0
    %2861 = vmatprep.subr.bf16.mxu0 0
    %2862 = vmatpush2.bf16.msra.mxu0 0
    %2863 = vmatprep.subr.bf16.mxu0 0
    %2864 = vmatpush2.bf16.msra.mxu0 0
    %2865 = vmatprep.subr.bf16.mxu0 0
    %2866 = vmatpush2.bf16.msra.mxu0 0
    %2867 = vmatprep.subr.bf16.mxu0 0
    %2868 = vmatpush2.bf16.msra.mxu0 0
    %2869 = vmatprep.mubr.bf16.mxu0 0
    %2870 = vmatmul.mubr.bf16.gmra.mxu0 %v2835
    %v2871 = vpop.f32.mrf.mxu0
    %v2872 = vadd.f32 %v2808, %v2871
    %v2873 = vpop.f32.mrf.mxu0
    %v2874 = vpop.f32.mrf.mxu0
    %v2875 = vadd.f32 %v2808, %v2874
    %v2876 = vpop.f32.mrf.mxu0
    %2877 = vdwg.mxu0
    %v2878 = vadd.f32 %v2872, %v2702
    %v2879 = vadd.f32 %v2875, %v2703
    %s2880 = scalar_lea.vmem %s16, 1
    %v2881 = vld [vmem:[%s2880] sm:$0x1]
    %s2882 = scalar_lea.vmem %s17, 1
    %v2883 = vld [vmem:[%s2882] sm:$0x1]
    %v2884 = vsel %vm173, %v2878, 0.0
    %2885 = vadd.xlane.f32.xlu0 %v2884
    %v2886 = vpop.xlane.xlu0 %2885
    %v2887 = vsel %vm173, %v2879, 0.0
    %2888 = vadd.xlane.f32.xlu0 %v2887
    %v2889 = vpop.xlane.xlu0 %2888
    %v2890 = vmul.f32 %v2886, %v180
    %v2891 = vmul.f32 %v2889, %v180
    %v2892 = vsub.f32 %v2878, %v2890
    %v2893 = vsub.f32 %v2879, %v2891
    %v2894 = vmul.f32 %v2892, %v2892
    %v2895 = vmul.f32 %v2893, %v2893
    %v2896 = vsel %vm173, %v2894, 0.0
    %2897 = vadd.xlane.f32.xlu0 %v2896
    %v2898 = vpop.xlane.xlu0 %2897
    %v2899 = vsel %vm173, %v2895, 0.0
    %2900 = vadd.xlane.f32.xlu0 %v2899
    %v2901 = vpop.xlane.xlu0 %2900
    %v2902 = vmul.f32 %v2898, %v180
    %v2903 = vmul.f32 %v2901, %v180
    %v2904 = vadd.f32 %v2902, 1e-12
    %v2905 = vadd.f32 %v2903, 1e-12
    %v2906 = vrsqrt.pop %v2904
    %v2907 = vrsqrt.pop %v2905
    %v2908 = vmul.f32 %v2892, %v2906
    %v2909 = vmul.f32 %v2893, %v2907
    %v2911 = vlaneseq
    %v2912 = vshrl.u32 %v2911, 7
    %v2913 = vsub.s32 0, %v2912
    %v2914 = vrot.slane %v2881, %v2913
    %v2916 = vmul.f32 %v2908, %v2914
    %v2917 = vmul.f32 %v2909, %v2914
    %v2919 = vlaneseq
    %v2920 = vshrl.u32 %v2919, 7
    %v2921 = vsub.s32 0, %v2920
    %v2922 = vrot.slane %v2883, %v2921
    %v2924 = vadd.f32 %v2916, %v2922
    %v2925 = vadd.f32 %v2917, %v2922
    %v2928 = vrot.slane %v2925, 7
    %vm2929 = vcmask 1041409
    %v2930 = vsel %vm2929, %v2928, %v2924
    %vm2932 = vcmask 254976
    %2933 = vst.msk [vmem:[#allocation2] sm:$0x3] %vm2932, %v2930
    // Predicated region
    $region74: #{tpu_custom_call.1} parent=1 // pred_check
      _
    $region75: #{tpu_custom_call.1} parent=1 // pred_check_branch
      %2935 = sbr.rel (0) target = $region77
    $region76: #{tpu_custom_call.1} parent=1 // pred_region
      %s2937 = ssub.s32 32, 32
      %2938 = vsyncadd [#allocation3], %s2937
      %s2940 = sshll.u32 [#allocation2], 4
      %s2941 = int_to_ptr.vmem [resolvable:$true] %s2940
      %2943 = dma.vmem_to_hbm [thread:$0]  %s2941, 32, %s18, [#allocation3]
    $region77: #{tpu_custom_call.1} parent=1 // pred_fallthru
      _
    // Predicated region
    $region78: #{tpu_custom_call.1} parent=1 // pred_check
      _
    $region79: #{tpu_custom_call.1} parent=1 // pred_check_branch
      %2945 = sbr.rel (0) target = $region81
    $region80: #{tpu_custom_call.1} parent=1 // pred_region
      %2946 = dma.done [#allocation3], 32
    $region81: #{tpu_custom_call.1} parent=1 // pred_fallthru
      _
    %2947 = vsyncpa [#allocation3], 1

</llo_original>
